<compile_context>
chip_gen: v6e
topology: v6e:2x2x1
jax: 0.10.0
libtpu: 0.0.40
codegen_flags: <defaults>
</compile_context>

<pallas_src>
import math

import jax
import jax.numpy as jnp
from jax.experimental import pallas as pl

# ---- model hyper-parameters (small, consistent with the module) ----
BATCH = 2
SEQ = 8
INPUT_DIM = 32          # config.input_dim  (attention hidden size)
HIDDEN_DIM = 16         # config.hidden_size (MLP hidden size)
NUM_LAYERS = 3          # config.num_hidden_layers
NUM_HEADS = 4           # config.num_attention_heads
HEAD_DIM = INPUT_DIM // NUM_HEADS
OUT_LANES = 128         # lane-dense padded output width (>= HIDDEN_DIM)


def dkt_ttt_kernel(xg_ref,
                   wq_ref, bq_ref, wk_ref, bk_ref, wv_ref, bv_ref,
                   w0_ref, b0_ref, w1_ref, b1_ref, w2_ref, b2_ref,
                   o_ref):
    """Single invocation; leading axis g = head * B + batch batches heads."""
    xg = xg_ref[...]                                            # (G, S, D)

    def qkv(w_ref, b_ref):
        # per-(head,batch) projection onto that head's output columns
        return jnp.einsum("gsd,gdk->gsk", xg, w_ref[...],
                          preferred_element_type=jnp.float32) + b_ref[...]

    q = qkv(wq_ref, bq_ref)                                     # (G, S, HD)
    k = qkv(wk_ref, bk_ref)
    v = qkv(wv_ref, bv_ref)

    # --- scaled dot-product attention, batched over (head, batch) groups ---
    scale = 1.0 / math.sqrt(HEAD_DIM)
    s = jnp.einsum("gqd,gkd->gqk", q, k,
                   preferred_element_type=jnp.float32) * scale  # (G, S, S)
    s = s - jnp.max(s, axis=-1, keepdims=True)
    e = jnp.exp(s)
    probs = e * pl.reciprocal(jnp.sum(e, axis=-1, keepdims=True), approx=True)
    # dropout(p=0.1) is identity in eval mode
    ctx = jnp.einsum("gqk,gkd->gqd", probs, v,
                     preferred_element_type=jnp.float32)        # (G, S, HD)

    # --- layer 0: concat_heads(ctx) @ W0 == sum over heads of ctx_h @ W0_h ---
    part = jnp.einsum("gsd,gdk->gsk", ctx, w0_ref[...],
                      preferred_element_type=jnp.float32)       # (G, S, H)
    g_total = part.shape[0]
    b_total = g_total // NUM_HEADS
    h0 = part[0:b_total]
    for h in range(1, NUM_HEADS):       # full-tile major-axis slices (free)
        h0 = h0 + part[h * b_total:(h + 1) * b_total]
    h0 = jnp.maximum(h0 + b0_ref[...], 0.0)                     # (B, S, H)

    # --- layers 1 and 2: Linear -> ReLU, batched over B ---
    h1 = jnp.maximum(
        jnp.einsum("bsh,bhk->bsk", h0, w1_ref[...],
                   preferred_element_type=jnp.float32) + b1_ref[...], 0.0)
    h2 = jnp.maximum(
        jnp.einsum("bsh,bhk->bsk", h1, w2_ref[...],
                   preferred_element_type=jnp.float32) + b2_ref[...], 0.0)

    # --- lane-dense store: pad H -> 128 lanes so writes are unmasked vst ---
    pad = jnp.zeros(h2.shape[:-1] + (o_ref.shape[-1] - h2.shape[-1],),
                    jnp.float32)
    o_ref[...] = jnp.concatenate([h2, pad], axis=-1)


@jax.jit
def dkt_forward(x, params):
    B, S, D = x.shape
    NH, HD, H = NUM_HEADS, HEAD_DIM, HIDDEN_DIM

    # ---- wrapper-side (XLA) operand layout: group index g = h * B + b ----
    xg = jnp.tile(x, (NH, 1, 1))                                # (G, S, D)

    def head_w(w):   # (D, NH*HD) -> (G, D, HD): per-head output-column block
        wh = w.reshape(D, NH, HD).transpose(1, 0, 2)            # (NH, D, HD)
        return jnp.repeat(wh, B, axis=0)                        # (G, D, HD)

    def head_b(b):   # (1, NH*HD) -> (G, 1, HD)
        return jnp.repeat(b.reshape(NH, 1, HD), B, axis=0)

    wq_g, wk_g, wv_g = head_w(params["wq"]), head_w(params["wk"]), head_w(params["wv"])
    bq_g, bk_g, bv_g = head_b(params["bq"]), head_b(params["bk"]), head_b(params["bv"])

    # layer-0 weight split per head (rows h*HD:(h+1)*HD), repeated per batch
    w0_g = jnp.repeat(params["w0"].reshape(NH, HD, H), B, axis=0)   # (G, HD, H)
    w1_b = jnp.tile(params["w1"][None], (B, 1, 1))                  # (B, H, H)
    w2_b = jnp.tile(params["w2"][None], (B, 1, 1))                  # (B, H, H)
    b0 = params["b0"].reshape(1, 1, H)
    b1 = params["b1"].reshape(1, 1, H)
    b2 = params["b2"].reshape(1, 1, H)

    out_pad = pl.pallas_call(
        dkt_ttt_kernel,
        out_shape=jax.ShapeDtypeStruct((B, S, OUT_LANES), jnp.float32),
    )(xg, wq_g, bq_g, wk_g, bk_g, wv_g, bv_g, w0_g, b0, w1_b, b1, w2_b, b2)

    return out_pad[..., :H]                                     # (B, S, H)


def init_params(key):
    """Deterministic synthetic parameters (shapes from the module __init__)."""
    ks = jax.random.split(key, 12)
    D, H = INPUT_DIM, HIDDEN_DIM

    def lin(kw, kb, fan_in, fan_out):
        # stored already transposed: (in, out), so math is x @ W + b
        w = jax.random.normal(kw, (fan_in, fan_out), jnp.float32) * 0.05
        b = jax.random.normal(kb, (1, fan_out), jnp.float32) * 0.05
        return w, b

    wq, bq = lin(ks[0], ks[1], D, D)
    wk, bk = lin(ks[2], ks[3], D, D)
    wv, bv = lin(ks[4], ks[5], D, D)
    w0, b0 = lin(ks[6], ks[7], D, H)      # layer 0: input_dim -> hidden
    w1, b1 = lin(ks[8], ks[9], H, H)      # layer 1: hidden -> hidden
    w2, b2 = lin(ks[10], ks[11], H, H)    # layer 2: hidden -> hidden
    return dict(wq=wq, bq=bq, wk=wk, bk=bk, wv=wv, bv=bv,
                w0=w0, b0=b0, w1=w1, b1=b1, w2=w2, b2=b2)


def dkt_reference(x, p):
    """Pure-JAX reference mirroring the PyTorch forward (eval mode)."""
    B, S, D = x.shape
    q = x @ p["wq"] + p["bq"]
    k = x @ p["wk"] + p["bk"]
    v = x @ p["wv"] + p["bv"]

    def split_heads(t):
        return t.reshape(B, S, NUM_HEADS, HEAD_DIM).transpose(0, 2, 1, 3)

    qh, kh, vh = split_heads(q), split_heads(k), split_heads(v)
    scores = jnp.einsum("bhqd,bhkd->bhqk", qh, kh) / math.sqrt(HEAD_DIM)
    probs = jax.nn.softmax(scores, axis=-1)
    ctx = jnp.einsum("bhqk,bhkd->bhqd", probs, vh)
    ctx = ctx.transpose(0, 2, 1, 3).reshape(B, S, D)

    h = jax.nn.relu(ctx @ p["w0"] + p["b0"])
    h = jax.nn.relu(h @ p["w1"] + p["b1"])
    h = jax.nn.relu(h @ p["w2"] + p["b2"])
    return h


if __name__ == "__main__":
    key = jax.random.PRNGKey(0)
    k_x, k_p = jax.random.split(key)

    x = jax.random.normal(k_x, (BATCH, SEQ, INPUT_DIM), jnp.float32)
    params = init_params(k_p)

    out = jax.block_until_ready(dkt_forward(x, params))
    ref = dkt_reference(x, params)

    assert out.shape == (BATCH, SEQ, HIDDEN_DIM)
    # tolerance loosened slightly because the softmax uses the EUP approximate
    # reciprocal (pl.reciprocal(approx=True)); observed error is far below this
    max_diff = jnp.max(jnp.abs(out - ref))
    assert jnp.allclose(out, ref, atol=2e-3, rtol=2e-3), (
        f"max abs diff = {max_diff}")

    print("KERNEL_OK")
</pallas_src>

<mosaic_0001>
module attributes {stable_mosaic.version = 11 : i64} {
  func.func @dkt_ttt_kernel(%arg0: memref<8x8x32xf32, #tpu.memory_space<vmem>>, %arg1: memref<8x32x8xf32, #tpu.memory_space<vmem>>, %arg2: memref<8x1x8xf32, #tpu.memory_space<vmem>>, %arg3: memref<8x32x8xf32, #tpu.memory_space<vmem>>, %arg4: memref<8x1x8xf32, #tpu.memory_space<vmem>>, %arg5: memref<8x32x8xf32, #tpu.memory_space<vmem>>, %arg6: memref<8x1x8xf32, #tpu.memory_space<vmem>>, %arg7: memref<8x8x16xf32, #tpu.memory_space<vmem>>, %arg8: memref<1x1x16xf32, #tpu.memory_space<vmem>>, %arg9: memref<2x16x16xf32, #tpu.memory_space<vmem>>, %arg10: memref<1x1x16xf32, #tpu.memory_space<vmem>>, %arg11: memref<2x16x16xf32, #tpu.memory_space<vmem>>, %arg12: memref<1x1x16xf32, #tpu.memory_space<vmem>>, %arg13: memref<2x8x128xf32, #tpu.memory_space<vmem>>) attributes {dimension_semantics = [], scalar_prefetch = 0 : i64, scratch_operands = 0 : i64, tpu.core_type = #tpu.core_type<tc>} {
    %c0 = arith.constant 0 : index
    %c0_0 = arith.constant 0 : index
    %c0_1 = arith.constant 0 : index
    %0 = vector.load %arg0[%c0, %c0_0, %c0_1] : memref<8x8x32xf32, #tpu.memory_space<vmem>>, vector<8x8x32xf32>
    %c0_2 = arith.constant 0 : index
    %c0_3 = arith.constant 0 : index
    %c0_4 = arith.constant 0 : index
    %1 = vector.load %arg1[%c0_2, %c0_3, %c0_4] : memref<8x32x8xf32, #tpu.memory_space<vmem>>, vector<8x32x8xf32>
    "tpu.trace_start"() <{level = 10 : i32, message = "gsd,gdk->gsk"}> : () -> ()
    %cst = arith.constant dense<0.000000e+00> : vector<8x8x8xf32>
    %2 = tpu.matmul %0, %1, %cst {dimension_numbers = #tpu.dot_dimension_numbers<[2], [1], [1], [2], [0, 0, 0, 1, 1, 2], [0], [0]>} : vector<8x8x32xf32>, vector<8x32x8xf32>, vector<8x8x8xf32> -> vector<8x8x8xf32>
    "tpu.trace_stop"() : () -> ()
    %c0_5 = arith.constant 0 : index
    %c0_6 = arith.constant 0 : index
    %c0_7 = arith.constant 0 : index
    %3 = vector.load %arg2[%c0_5, %c0_6, %c0_7] : memref<8x1x8xf32, #tpu.memory_space<vmem>>, vector<8x1x8xf32>
    %4 = vector.broadcast %3 : vector<8x1x8xf32> to vector<8x8x8xf32>
    %5 = arith.addf %2, %4 : vector<8x8x8xf32>
    %c0_8 = arith.constant 0 : index
    %c0_9 = arith.constant 0 : index
    %c0_10 = arith.constant 0 : index
    %6 = vector.load %arg3[%c0_8, %c0_9, %c0_10] : memref<8x32x8xf32, #tpu.memory_space<vmem>>, vector<8x32x8xf32>
    "tpu.trace_start"() <{level = 10 : i32, message = "gsd,gdk->gsk"}> : () -> ()
    %cst_11 = arith.constant dense<0.000000e+00> : vector<8x8x8xf32>
    %7 = tpu.matmul %0, %6, %cst_11 {dimension_numbers = #tpu.dot_dimension_numbers<[2], [1], [1], [2], [0, 0, 0, 1, 1, 2], [0], [0]>} : vector<8x8x32xf32>, vector<8x32x8xf32>, vector<8x8x8xf32> -> vector<8x8x8xf32>
    "tpu.trace_stop"() : () -> ()
    %c0_12 = arith.constant 0 : index
    %c0_13 = arith.constant 0 : index
    %c0_14 = arith.constant 0 : index
    %8 = vector.load %arg4[%c0_12, %c0_13, %c0_14] : memref<8x1x8xf32, #tpu.memory_space<vmem>>, vector<8x1x8xf32>
    %9 = vector.broadcast %8 : vector<8x1x8xf32> to vector<8x8x8xf32>
    %10 = arith.addf %7, %9 : vector<8x8x8xf32>
    %c0_15 = arith.constant 0 : index
    %c0_16 = arith.constant 0 : index
    %c0_17 = arith.constant 0 : index
    %11 = vector.load %arg5[%c0_15, %c0_16, %c0_17] : memref<8x32x8xf32, #tpu.memory_space<vmem>>, vector<8x32x8xf32>
    "tpu.trace_start"() <{level = 10 : i32, message = "gsd,gdk->gsk"}> : () -> ()
    %cst_18 = arith.constant dense<0.000000e+00> : vector<8x8x8xf32>
    %12 = tpu.matmul %0, %11, %cst_18 {dimension_numbers = #tpu.dot_dimension_numbers<[2], [1], [1], [2], [0, 0, 0, 1, 1, 2], [0], [0]>} : vector<8x8x32xf32>, vector<8x32x8xf32>, vector<8x8x8xf32> -> vector<8x8x8xf32>
    "tpu.trace_stop"() : () -> ()
    %c0_19 = arith.constant 0 : index
    %c0_20 = arith.constant 0 : index
    %c0_21 = arith.constant 0 : index
    %13 = vector.load %arg6[%c0_19, %c0_20, %c0_21] : memref<8x1x8xf32, #tpu.memory_space<vmem>>, vector<8x1x8xf32>
    %14 = vector.broadcast %13 : vector<8x1x8xf32> to vector<8x8x8xf32>
    %15 = arith.addf %12, %14 : vector<8x8x8xf32>
    "tpu.trace_start"() <{level = 10 : i32, message = "gqd,gkd->gqk"}> : () -> ()
    %cst_22 = arith.constant dense<0.000000e+00> : vector<8x8x8xf32>
    %16 = tpu.matmul %5, %10, %cst_22 {dimension_numbers = #tpu.dot_dimension_numbers<[2], [2], [1], [1], [0, 0, 0, 1, 1, 1], [0], [0]>} : vector<8x8x8xf32>, vector<8x8x8xf32>, vector<8x8x8xf32> -> vector<8x8x8xf32>
    "tpu.trace_stop"() : () -> ()
    %cst_23 = arith.constant 0.353553385 : f32
    %17 = vector.broadcast %cst_23 : f32 to vector<8x8x8xf32>
    %18 = arith.mulf %16, %17 : vector<8x8x8xf32>
    %cst_24 = arith.constant dense<0xFF800000> : vector<8x8xf32>
    %19 = vector.multi_reduction <maximumf>, %18, %cst_24 [2] : vector<8x8x8xf32> to vector<8x8xf32>
    %20 = vector.shape_cast %19 : vector<8x8xf32> to vector<8x8x1xf32>
    %21 = vector.broadcast %20 : vector<8x8x1xf32> to vector<8x8x8xf32>
    %22 = arith.subf %18, %21 : vector<8x8x8xf32>
    %23 = math.exp %22 : vector<8x8x8xf32>
    %cst_25 = arith.constant dense<0.000000e+00> : vector<8x8xf32>
    %24 = vector.multi_reduction <add>, %23, %cst_25 [2] : vector<8x8x8xf32> to vector<8x8xf32>
    %25 = vector.shape_cast %24 : vector<8x8xf32> to vector<8x8x1xf32>
    %26 = tpu.reciprocal %25 {approx = true} : vector<8x8x1xf32> -> vector<8x8x1xf32>
    %27 = vector.broadcast %26 : vector<8x8x1xf32> to vector<8x8x8xf32>
    %28 = arith.mulf %23, %27 : vector<8x8x8xf32>
    "tpu.trace_start"() <{level = 10 : i32, message = "gqk,gkd->gqd"}> : () -> ()
    %cst_26 = arith.constant dense<0.000000e+00> : vector<8x8x8xf32>
    %29 = tpu.matmul %28, %15, %cst_26 {dimension_numbers = #tpu.dot_dimension_numbers<[2], [1], [1], [2], [0, 0, 0, 1, 1, 2], [0], [0]>} : vector<8x8x8xf32>, vector<8x8x8xf32>, vector<8x8x8xf32> -> vector<8x8x8xf32>
    "tpu.trace_stop"() : () -> ()
    %c0_27 = arith.constant 0 : index
    %c0_28 = arith.constant 0 : index
    %c0_29 = arith.constant 0 : index
    %30 = vector.load %arg7[%c0_27, %c0_28, %c0_29] : memref<8x8x16xf32, #tpu.memory_space<vmem>>, vector<8x8x16xf32>
    "tpu.trace_start"() <{level = 10 : i32, message = "gsd,gdk->gsk"}> : () -> ()
    %cst_30 = arith.constant dense<0.000000e+00> : vector<8x8x16xf32>
    %31 = tpu.matmul %29, %30, %cst_30 {dimension_numbers = #tpu.dot_dimension_numbers<[2], [1], [1], [2], [0, 0, 0, 1, 1, 2], [0], [0]>} : vector<8x8x8xf32>, vector<8x8x16xf32>, vector<8x8x16xf32> -> vector<8x8x16xf32>
    "tpu.trace_stop"() : () -> ()
    %32 = vector.extract_strided_slice %31 {offsets = [0, 0, 0], sizes = [2, 8, 16], strides = [1, 1, 1]} : vector<8x8x16xf32> to vector<2x8x16xf32>
    %33 = vector.extract_strided_slice %31 {offsets = [2, 0, 0], sizes = [2, 8, 16], strides = [1, 1, 1]} : vector<8x8x16xf32> to vector<2x8x16xf32>
    %34 = arith.addf %32, %33 : vector<2x8x16xf32>
    %35 = vector.extract_strided_slice %31 {offsets = [4, 0, 0], sizes = [2, 8, 16], strides = [1, 1, 1]} : vector<8x8x16xf32> to vector<2x8x16xf32>
    %36 = arith.addf %34, %35 : vector<2x8x16xf32>
    %37 = vector.extract_strided_slice %31 {offsets = [6, 0, 0], sizes = [2, 8, 16], strides = [1, 1, 1]} : vector<8x8x16xf32> to vector<2x8x16xf32>
    %38 = arith.addf %36, %37 : vector<2x8x16xf32>
    %c0_31 = arith.constant 0 : index
    %c0_32 = arith.constant 0 : index
    %c0_33 = arith.constant 0 : index
    %39 = vector.load %arg8[%c0_31, %c0_32, %c0_33] : memref<1x1x16xf32, #tpu.memory_space<vmem>>, vector<1x1x16xf32>
    %40 = vector.broadcast %39 : vector<1x1x16xf32> to vector<2x8x16xf32>
    %41 = arith.addf %38, %40 : vector<2x8x16xf32>
    %cst_34 = arith.constant 0.000000e+00 : f32
    %42 = vector.broadcast %cst_34 : f32 to vector<2x8x16xf32>
    %43 = arith.maximumf %41, %42 : vector<2x8x16xf32>
    %c0_35 = arith.constant 0 : index
    %c0_36 = arith.constant 0 : index
    %c0_37 = arith.constant 0 : index
    %44 = vector.load %arg9[%c0_35, %c0_36, %c0_37] : memref<2x16x16xf32, #tpu.memory_space<vmem>>, vector<2x16x16xf32>
    "tpu.trace_start"() <{level = 10 : i32, message = "bsh,bhk->bsk"}> : () -> ()
    %cst_38 = arith.constant dense<0.000000e+00> : vector<2x8x16xf32>
    %45 = tpu.matmul %43, %44, %cst_38 {dimension_numbers = #tpu.dot_dimension_numbers<[2], [1], [1], [2], [0, 0, 0, 1, 1, 2], [0], [0]>} : vector<2x8x16xf32>, vector<2x16x16xf32>, vector<2x8x16xf32> -> vector<2x8x16xf32>
    "tpu.trace_stop"() : () -> ()
    %c0_39 = arith.constant 0 : index
    %c0_40 = arith.constant 0 : index
    %c0_41 = arith.constant 0 : index
    %46 = vector.load %arg10[%c0_39, %c0_40, %c0_41] : memref<1x1x16xf32, #tpu.memory_space<vmem>>, vector<1x1x16xf32>
    %47 = vector.broadcast %46 : vector<1x1x16xf32> to vector<2x8x16xf32>
    %48 = arith.addf %45, %47 : vector<2x8x16xf32>
    %cst_42 = arith.constant 0.000000e+00 : f32
    %49 = vector.broadcast %cst_42 : f32 to vector<2x8x16xf32>
    %50 = arith.maximumf %48, %49 : vector<2x8x16xf32>
    %c0_43 = arith.constant 0 : index
    %c0_44 = arith.constant 0 : index
    %c0_45 = arith.constant 0 : index
    %51 = vector.load %arg11[%c0_43, %c0_44, %c0_45] : memref<2x16x16xf32, #tpu.memory_space<vmem>>, vector<2x16x16xf32>
    "tpu.trace_start"() <{level = 10 : i32, message = "bsh,bhk->bsk"}> : () -> ()
    %cst_46 = arith.constant dense<0.000000e+00> : vector<2x8x16xf32>
    %52 = tpu.matmul %50, %51, %cst_46 {dimension_numbers = #tpu.dot_dimension_numbers<[2], [1], [1], [2], [0, 0, 0, 1, 1, 2], [0], [0]>} : vector<2x8x16xf32>, vector<2x16x16xf32>, vector<2x8x16xf32> -> vector<2x8x16xf32>
    "tpu.trace_stop"() : () -> ()
    %c0_47 = arith.constant 0 : index
    %c0_48 = arith.constant 0 : index
    %c0_49 = arith.constant 0 : index
    %53 = vector.load %arg12[%c0_47, %c0_48, %c0_49] : memref<1x1x16xf32, #tpu.memory_space<vmem>>, vector<1x1x16xf32>
    %54 = vector.broadcast %53 : vector<1x1x16xf32> to vector<2x8x16xf32>
    %55 = arith.addf %52, %54 : vector<2x8x16xf32>
    %cst_50 = arith.constant 0.000000e+00 : f32
    %56 = vector.broadcast %cst_50 : f32 to vector<2x8x16xf32>
    %57 = arith.maximumf %55, %56 : vector<2x8x16xf32>
    %cst_51 = arith.constant 0.000000e+00 : f32
    %58 = vector.broadcast %cst_51 : f32 to vector<2x8x112xf32>
    %59 = tpu.concatenate %57, %58 in 2 : vector<2x8x16xf32>, vector<2x8x112xf32> -> vector<2x8x128xf32>
    %c0_52 = arith.constant 0 : index
    %c0_53 = arith.constant 0 : index
    %c0_54 = arith.constant 0 : index
    %60 = vector.load %arg13[%c0_52, %c0_53, %c0_54] : memref<2x8x128xf32, #tpu.memory_space<vmem>>, vector<2x8x128xf32>
    tpu.vector_store %arg13[%c0_52, %c0_53, %c0_54], %59 {strides = array<i32>} : memref<2x8x128xf32, #tpu.memory_space<vmem>>, vector<2x8x128xf32>,
    return
  }
}

</mosaic_0001>

<llo_original>
// kernel: dkt_forward.1
$region0: #{dkt_forward.1}
  #allocation0 [shape = 'u32[]', space=smem, size = 0x4, offset = 0x4, fixed_abs, tag = 'smem constant byte address 0x4 - core index']
  #allocation1 [shape = 'u32[144,128]{1,0:T(1,128)}', space=vmem, size = 0x12000, scoped, tag = 'internal scratch']
  %s0 = inlined_call_operand.vmem [shape: f32[8,8,32], index: 0, kind: input, shape index: {}]
  %s1 = inlined_call_operand.vmem [shape: f32[8,32,8], index: 1, kind: input, shape index: {}]
  %s2 = inlined_call_operand.vmem [shape: f32[8,1,8], index: 2, kind: input, shape index: {}]
  %s3 = inlined_call_operand.vmem [shape: f32[8,32,8], index: 3, kind: input, shape index: {}]
  %s4 = inlined_call_operand.vmem [shape: f32[8,1,8], index: 4, kind: input, shape index: {}]
  %s5 = inlined_call_operand.vmem [shape: f32[8,32,8], index: 5, kind: input, shape index: {}]
  %s6 = inlined_call_operand.vmem [shape: f32[8,1,8], index: 6, kind: input, shape index: {}]
  %s7 = inlined_call_operand.vmem [shape: f32[8,8,16], index: 7, kind: input, shape index: {}]
  %s8 = inlined_call_operand.vmem [shape: f32[1,1,16], index: 8, kind: input, shape index: {}]
  %s9 = inlined_call_operand.vmem [shape: f32[2,16,16], index: 9, kind: input, shape index: {}]
  %s10 = inlined_call_operand.vmem [shape: f32[1,1,16], index: 10, kind: input, shape index: {}]
  %s11 = inlined_call_operand.vmem [shape: f32[2,16,16], index: 11, kind: input, shape index: {}]
  %s12 = inlined_call_operand.vmem [shape: f32[1,1,16], index: 12, kind: input, shape index: {}]
  %s13 = inlined_call_operand.hbm [shape: f32[2,8,128], index: 13, kind: output, shape index: {}]
  %s14 = sld [smem:[#allocation0]]
  $region62: #{dkt_forward.1} parent=0
    _
  %s16 = ssub.s32 1, %s14
  %s17 = scalar_select 0, %s16, %s14
  $region1: #{dkt_forward.1} parent=0
    #allocation2 [shape = 'u8[8192]{0}', space=vmem, size = 0x2000, scoped, tag = 'output window, operand 0, single buffered']
    #allocation3 [shape = 's32[1]{0}', space=sflag, size = 0x4, scoped, tag = 'scoped memory for dkt_forward.1']
    %18 = vsyncpa [#allocation3], 0
    // Predicated region
    $region2: #{dkt_forward.1} parent=1 // pred_check
      _
    $region3: #{dkt_forward.1} parent=1 // pred_check_branch
      %20 = sbr.rel (0) target = $region5
    $region4: #{dkt_forward.1} parent=1 // pred_region
      _
    $region5: #{dkt_forward.1} parent=1 // pred_fallthru
      _
    // Predicated region
    $region6: #{dkt_forward.1} parent=1 // pred_check
      _
    $region7: #{dkt_forward.1} parent=1 // pred_check_branch
      %22 = sbr.rel (0) target = $region9
    $region8: #{dkt_forward.1} parent=1 // pred_region
      _
    $region9: #{dkt_forward.1} parent=1 // pred_fallthru
      _
    // Predicated region
    $region10: #{dkt_forward.1} parent=1 // pred_check
      _
    $region11: #{dkt_forward.1} parent=1 // pred_check_branch
      %24 = sbr.rel (0) target = $region13
    $region12: #{dkt_forward.1} parent=1 // pred_region
      _
    $region13: #{dkt_forward.1} parent=1 // pred_fallthru
      _
    // Predicated region
    $region14: #{dkt_forward.1} parent=1 // pred_check
      _
    $region15: #{dkt_forward.1} parent=1 // pred_check_branch
      %26 = sbr.rel (0) target = $region17
    $region16: #{dkt_forward.1} parent=1 // pred_region
      _
    $region17: #{dkt_forward.1} parent=1 // pred_fallthru
      _
    // Predicated region
    $region18: #{dkt_forward.1} parent=1 // pred_check
      _
    $region19: #{dkt_forward.1} parent=1 // pred_check_branch
      %28 = sbr.rel (0) target = $region21
    $region20: #{dkt_forward.1} parent=1 // pred_region
      _
    $region21: #{dkt_forward.1} parent=1 // pred_fallthru
      _
    // Predicated region
    $region22: #{dkt_forward.1} parent=1 // pred_check
      _
    $region23: #{dkt_forward.1} parent=1 // pred_check_branch
      %30 = sbr.rel (0) target = $region25
    $region24: #{dkt_forward.1} parent=1 // pred_region
      _
    $region25: #{dkt_forward.1} parent=1 // pred_fallthru
      _
    // Predicated region
    $region26: #{dkt_forward.1} parent=1 // pred_check
      _
    $region27: #{dkt_forward.1} parent=1 // pred_check_branch
      %32 = sbr.rel (0) target = $region29
    $region28: #{dkt_forward.1} parent=1 // pred_region
      _
    $region29: #{dkt_forward.1} parent=1 // pred_fallthru
      _
    // Predicated region
    $region30: #{dkt_forward.1} parent=1 // pred_check
      _
    $region31: #{dkt_forward.1} parent=1 // pred_check_branch
      %34 = sbr.rel (0) target = $region33
    $region32: #{dkt_forward.1} parent=1 // pred_region
      _
    $region33: #{dkt_forward.1} parent=1 // pred_fallthru
      _
    // Predicated region
    $region34: #{dkt_forward.1} parent=1 // pred_check
      _
    $region35: #{dkt_forward.1} parent=1 // pred_check_branch
      %36 = sbr.rel (0) target = $region37
    $region36: #{dkt_forward.1} parent=1 // pred_region
      _
    $region37: #{dkt_forward.1} parent=1 // pred_fallthru
      _
    // Predicated region
    $region38: #{dkt_forward.1} parent=1 // pred_check
      _
    $region39: #{dkt_forward.1} parent=1 // pred_check_branch
      %38 = sbr.rel (0) target = $region41
    $region40: #{dkt_forward.1} parent=1 // pred_region
      _
    $region41: #{dkt_forward.1} parent=1 // pred_fallthru
      _
    // Predicated region
    $region42: #{dkt_forward.1} parent=1 // pred_check
      _
    $region43: #{dkt_forward.1} parent=1 // pred_check_branch
      %40 = sbr.rel (0) target = $region45
    $region44: #{dkt_forward.1} parent=1 // pred_region
      _
    $region45: #{dkt_forward.1} parent=1 // pred_fallthru
      _
    // Predicated region
    $region46: #{dkt_forward.1} parent=1 // pred_check
      _
    $region47: #{dkt_forward.1} parent=1 // pred_check_branch
      %42 = sbr.rel (0) target = $region49
    $region48: #{dkt_forward.1} parent=1 // pred_region
      _
    $region49: #{dkt_forward.1} parent=1 // pred_fallthru
      _
    // Predicated region
    $region50: #{dkt_forward.1} parent=1 // pred_check
      _
    $region51: #{dkt_forward.1} parent=1 // pred_check_branch
      %44 = sbr.rel (0) target = $region53
    $region52: #{dkt_forward.1} parent=1 // pred_region
      _
    $region53: #{dkt_forward.1} parent=1 // pred_fallthru
      _
    %v45 = vld [vmem:[%s0] sm:$0xff]
    %v46 = vld [vmem:[%s0 + $0x8] sm:$0xff]
    %v47 = vld [vmem:[%s0 + $0x10] sm:$0xff]
    %v48 = vld [vmem:[%s0 + $0x18] sm:$0xff]
    %v49 = vld [vmem:[%s0 + $0x20] sm:$0xff]
    %v50 = vld [vmem:[%s0 + $0x28] sm:$0xff]
    %v51 = vld [vmem:[%s0 + $0x30] sm:$0xff]
    %v52 = vld [vmem:[%s0 + $0x38] sm:$0xff]
    %v53 = vld [vmem:[%s1] sm:$0xff]
    %v54 = vld [vmem:[%s1 + $0x8] sm:$0xff]
    %v55 = vld [vmem:[%s1 + $0x10] sm:$0xff]
    %v56 = vld [vmem:[%s1 + $0x18] sm:$0xff]
    %v57 = vld [vmem:[%s1 + $0x20] sm:$0xff]
    %v58 = vld [vmem:[%s1 + $0x28] sm:$0xff]
    %v59 = vld [vmem:[%s1 + $0x30] sm:$0xff]
    %v60 = vld [vmem:[%s1 + $0x38] sm:$0xff]
    %v61 = vld [vmem:[%s1 + $0x40] sm:$0xff]
    %v62 = vld [vmem:[%s1 + $0x48] sm:$0xff]
    %v63 = vld [vmem:[%s1 + $0x50] sm:$0xff]
    %v64 = vld [vmem:[%s1 + $0x58] sm:$0xff]
    %v65 = vld [vmem:[%s1 + $0x60] sm:$0xff]
    %v66 = vld [vmem:[%s1 + $0x68] sm:$0xff]
    %v67 = vld [vmem:[%s1 + $0x70] sm:$0xff]
    %v68 = vld [vmem:[%s1 + $0x78] sm:$0xff]
    %v69 = vld [vmem:[%s1 + $0x80] sm:$0xff]
    %v70 = vld [vmem:[%s1 + $0x88] sm:$0xff]
    %v71 = vld [vmem:[%s1 + $0x90] sm:$0xff]
    %v72 = vld [vmem:[%s1 + $0x98] sm:$0xff]
    %v73 = vld [vmem:[%s1 + $0xa0] sm:$0xff]
    %v74 = vld [vmem:[%s1 + $0xa8] sm:$0xff]
    %v75 = vld [vmem:[%s1 + $0xb0] sm:$0xff]
    %v76 = vld [vmem:[%s1 + $0xb8] sm:$0xff]
    %v77 = vld [vmem:[%s1 + $0xc0] sm:$0xff]
    %v78 = vld [vmem:[%s1 + $0xc8] sm:$0xff]
    %v79 = vld [vmem:[%s1 + $0xd0] sm:$0xff]
    %v80 = vld [vmem:[%s1 + $0xd8] sm:$0xff]
    %v81 = vld [vmem:[%s1 + $0xe0] sm:$0xff]
    %v82 = vld [vmem:[%s1 + $0xe8] sm:$0xff]
    %v83 = vld [vmem:[%s1 + $0xf0] sm:$0xff]
    %v84 = vld [vmem:[%s1 + $0xf8] sm:$0xff]
    %v85 = vld [vmem:[%s2] sm:$0x1]
    %v86 = vld [vmem:[%s2 + $0x1] sm:$0x1]
    %v87 = vld [vmem:[%s2 + $0x2] sm:$0x1]
    %v88 = vld [vmem:[%s2 + $0x3] sm:$0x1]
    %v89 = vld [vmem:[%s2 + $0x4] sm:$0x1]
    %v90 = vld [vmem:[%s2 + $0x5] sm:$0x1]
    %v91 = vld [vmem:[%s2 + $0x6] sm:$0x1]
    %v92 = vld [vmem:[%s2 + $0x7] sm:$0x1]
    %v101 = vlaneseq
    %v102 = vshrl.u32 %v101, 7
    %v103 = vsub.s32 0, %v102
    %v104 = vrot.slane %v85, %v103
    %v105 = vlaneseq
    %v106 = vshrl.u32 %v105, 7
    %v107 = vsub.s32 0, %v106
    %v108 = vrot.slane %v86, %v107
    %v109 = vlaneseq
    %v110 = vshrl.u32 %v109, 7
    %v111 = vsub.s32 0, %v110
    %v112 = vrot.slane %v87, %v111
    %v113 = vlaneseq
    %v114 = vshrl.u32 %v113, 7
    %v115 = vsub.s32 0, %v114
    %v116 = vrot.slane %v88, %v115
    %v117 = vlaneseq
    %v118 = vshrl.u32 %v117, 7
    %v119 = vsub.s32 0, %v118
    %v120 = vrot.slane %v89, %v119
    %v121 = vlaneseq
    %v122 = vshrl.u32 %v121, 7
    %v123 = vsub.s32 0, %v122
    %v124 = vrot.slane %v90, %v123
    %v125 = vlaneseq
    %v126 = vshrl.u32 %v125, 7
    %v127 = vsub.s32 0, %v126
    %v128 = vrot.slane %v91, %v127
    %v129 = vlaneseq
    %v130 = vshrl.u32 %v129, 7
    %v131 = vsub.s32 0, %v130
    %v132 = vrot.slane %v92, %v131
    %vm141 = vcmask 261120
    %v143 = vsel %vm141, %v45, 0
    %145 = vmatprep.subr.mxu0 0.0
    %146 = vmatpush1.msra.mxu0 0.0
    %147 = vmatprep.subr.mxu0 0.0
    %148 = vmatpush1.msra.mxu0 0.0
    %149 = vmatprep.subr.mxu0 0.0
    %150 = vmatpush1.msra.mxu0 0.0
    %151 = vmatprep.subr.mxu0 0.0
    %152 = vmatpush1.msra.mxu0 0.0
    %153 = vmatprep.subr.mxu0 0.0
    %154 = vmatpush1.msra.mxu0 0.0
    %155 = vmatprep.subr.mxu0 0.0
    %156 = vmatpush1.msra.mxu0 0.0
    %157 = vmatprep.subr.mxu0 0.0
    %158 = vmatpush1.msra.mxu0 0.0
    %159 = vmatprep.subr.mxu0 0.0
    %160 = vmatpush1.msra.mxu0 0.0
    %161 = vmatprep.subr.mxu0 0.0
    %162 = vmatpush1.msra.mxu0 0.0
    %163 = vmatprep.subr.mxu0 0.0
    %164 = vmatpush1.msra.mxu0 0.0
    %165 = vmatprep.subr.mxu0 0.0
    %166 = vmatpush1.msra.mxu0 0.0
    %167 = vmatprep.subr.mxu0 0.0
    %168 = vmatpush1.msra.mxu0 0.0
    %169 = vmatprep.subr.mxu0 0.0
    %170 = vmatpush1.msra.mxu0 %v56
    %171 = vmatprep.subr.mxu0 0.0
    %172 = vmatpush1.msra.mxu0 %v55
    %173 = vmatprep.subr.mxu0 0.0
    %174 = vmatpush1.msra.mxu0 %v54
    %175 = vmatprep.subr.mxu0 0.0
    %176 = vmatpush1.msra.mxu0 %v53
    %177 = vmatprep.subr.mxu0 0.0
    %178 = vmatpush2.msra.mxu0 0.0
    %179 = vmatprep.subr.mxu0 0.0
    %180 = vmatpush2.msra.mxu0 0.0
    %181 = vmatprep.subr.mxu0 0.0
    %182 = vmatpush2.msra.mxu0 0.0
    %183 = vmatprep.subr.mxu0 0.0
    %184 = vmatpush2.msra.mxu0 0.0
    %185 = vmatprep.subr.mxu0 0.0
    %186 = vmatpush2.msra.mxu0 0.0
    %187 = vmatprep.subr.mxu0 0.0
    %188 = vmatpush2.msra.mxu0 0.0
    %189 = vmatprep.subr.mxu0 0.0
    %190 = vmatpush2.msra.mxu0 0.0
    %191 = vmatprep.subr.mxu0 0.0
    %192 = vmatpush2.msra.mxu0 0.0
    %193 = vmatprep.subr.mxu0 0.0
    %194 = vmatpush2.msra.mxu0 0.0
    %195 = vmatprep.subr.mxu0 0.0
    %196 = vmatpush2.msra.mxu0 0.0
    %197 = vmatprep.subr.mxu0 0.0
    %198 = vmatpush2.msra.mxu0 0.0
    %199 = vmatprep.subr.mxu0 0.0
    %200 = vmatpush2.msra.mxu0 0.0
    %201 = vmatprep.subr.mxu0 0.0
    %202 = vmatpush2.msra.mxu0 0.0
    %203 = vmatprep.subr.mxu0 0.0
    %204 = vmatpush2.msra.mxu0 0.0
    %205 = vmatprep.subr.mxu0 0.0
    %206 = vmatpush2.msra.mxu0 0.0
    %207 = vmatprep.subr.mxu0 0.0
    %208 = vmatpush2.msra.mxu0 0.0
    %209 = vmatprep.mubr.f32.mxu0 0.0
    %210 = vmatmul.mubr.f32.gmra.mxu0 %v143
    %v211 = vpop.f32.mrf.mxu0
    %v212 = vadd.f32 %v104, %v211
    %v213 = vpop.f32.mrf.mxu0
    %214 = vdwg.mxu0
    %v216 = vsel %vm141, %v46, 0
    %218 = vmatprep.subr.mxu0 0.0
    %219 = vmatpush1.msra.mxu0 0.0
    %220 = vmatprep.subr.mxu0 0.0
    %221 = vmatpush1.msra.mxu0 0.0
    %222 = vmatprep.subr.mxu0 0.0
    %223 = vmatpush1.msra.mxu0 0.0
    %224 = vmatprep.subr.mxu0 0.0
    %225 = vmatpush1.msra.mxu0 0.0
    %226 = vmatprep.subr.mxu0 0.0
    %227 = vmatpush1.msra.mxu0 0.0
    %228 = vmatprep.subr.mxu0 0.0
    %229 = vmatpush1.msra.mxu0 0.0
    %230 = vmatprep.subr.mxu0 0.0
    %231 = vmatpush1.msra.mxu0 0.0
    %232 = vmatprep.subr.mxu0 0.0
    %233 = vmatpush1.msra.mxu0 0.0
    %234 = vmatprep.subr.mxu0 0.0
    %235 = vmatpush1.msra.mxu0 0.0
    %236 = vmatprep.subr.mxu0 0.0
    %237 = vmatpush1.msra.mxu0 0.0
    %238 = vmatprep.subr.mxu0 0.0
    %239 = vmatpush1.msra.mxu0 0.0
    %240 = vmatprep.subr.mxu0 0.0
    %241 = vmatpush1.msra.mxu0 0.0
    %242 = vmatprep.subr.mxu0 0.0
    %243 = vmatpush1.msra.mxu0 %v60
    %244 = vmatprep.subr.mxu0 0.0
    %245 = vmatpush1.msra.mxu0 %v59
    %246 = vmatprep.subr.mxu0 0.0
    %247 = vmatpush1.msra.mxu0 %v58
    %248 = vmatprep.subr.mxu0 0.0
    %249 = vmatpush1.msra.mxu0 %v57
    %250 = vmatprep.subr.mxu0 0.0
    %251 = vmatpush2.msra.mxu0 0.0
    %252 = vmatprep.subr.mxu0 0.0
    %253 = vmatpush2.msra.mxu0 0.0
    %254 = vmatprep.subr.mxu0 0.0
    %255 = vmatpush2.msra.mxu0 0.0
    %256 = vmatprep.subr.mxu0 0.0
    %257 = vmatpush2.msra.mxu0 0.0
    %258 = vmatprep.subr.mxu0 0.0
    %259 = vmatpush2.msra.mxu0 0.0
    %260 = vmatprep.subr.mxu0 0.0
    %261 = vmatpush2.msra.mxu0 0.0
    %262 = vmatprep.subr.mxu0 0.0
    %263 = vmatpush2.msra.mxu0 0.0
    %264 = vmatprep.subr.mxu0 0.0
    %265 = vmatpush2.msra.mxu0 0.0
    %266 = vmatprep.subr.mxu0 0.0
    %267 = vmatpush2.msra.mxu0 0.0
    %268 = vmatprep.subr.mxu0 0.0
    %269 = vmatpush2.msra.mxu0 0.0
    %270 = vmatprep.subr.mxu0 0.0
    %271 = vmatpush2.msra.mxu0 0.0
    %272 = vmatprep.subr.mxu0 0.0
    %273 = vmatpush2.msra.mxu0 0.0
    %274 = vmatprep.subr.mxu0 0.0
    %275 = vmatpush2.msra.mxu0 0.0
    %276 = vmatprep.subr.mxu0 0.0
    %277 = vmatpush2.msra.mxu0 0.0
    %278 = vmatprep.subr.mxu0 0.0
    %279 = vmatpush2.msra.mxu0 0.0
    %280 = vmatprep.subr.mxu0 0.0
    %281 = vmatpush2.msra.mxu0 0.0
    %282 = vmatprep.mubr.f32.mxu0 0.0
    %283 = vmatmul.mubr.f32.gmra.mxu0 %v216
    %v284 = vpop.f32.mrf.mxu0
    %v285 = vadd.f32 %v108, %v284
    %v286 = vpop.f32.mrf.mxu0
    %287 = vdwg.mxu0
    %v289 = vsel %vm141, %v47, 0
    %291 = vmatprep.subr.mxu0 0.0
    %292 = vmatpush1.msra.mxu0 0.0
    %293 = vmatprep.subr.mxu0 0.0
    %294 = vmatpush1.msra.mxu0 0.0
    %295 = vmatprep.subr.mxu0 0.0
    %296 = vmatpush1.msra.mxu0 0.0
    %297 = vmatprep.subr.mxu0 0.0
    %298 = vmatpush1.msra.mxu0 0.0
    %299 = vmatprep.subr.mxu0 0.0
    %300 = vmatpush1.msra.mxu0 0.0
    %301 = vmatprep.subr.mxu0 0.0
    %302 = vmatpush1.msra.mxu0 0.0
    %303 = vmatprep.subr.mxu0 0.0
    %304 = vmatpush1.msra.mxu0 0.0
    %305 = vmatprep.subr.mxu0 0.0
    %306 = vmatpush1.msra.mxu0 0.0
    %307 = vmatprep.subr.mxu0 0.0
    %308 = vmatpush1.msra.mxu0 0.0
    %309 = vmatprep.subr.mxu0 0.0
    %310 = vmatpush1.msra.mxu0 0.0
    %311 = vmatprep.subr.mxu0 0.0
    %312 = vmatpush1.msra.mxu0 0.0
    %313 = vmatprep.subr.mxu0 0.0
    %314 = vmatpush1.msra.mxu0 0.0
    %315 = vmatprep.subr.mxu0 0.0
    %316 = vmatpush1.msra.mxu0 %v64
    %317 = vmatprep.subr.mxu0 0.0
    %318 = vmatpush1.msra.mxu0 %v63
    %319 = vmatprep.subr.mxu0 0.0
    %320 = vmatpush1.msra.mxu0 %v62
    %321 = vmatprep.subr.mxu0 0.0
    %322 = vmatpush1.msra.mxu0 %v61
    %323 = vmatprep.subr.mxu0 0.0
    %324 = vmatpush2.msra.mxu0 0.0
    %325 = vmatprep.subr.mxu0 0.0
    %326 = vmatpush2.msra.mxu0 0.0
    %327 = vmatprep.subr.mxu0 0.0
    %328 = vmatpush2.msra.mxu0 0.0
    %329 = vmatprep.subr.mxu0 0.0
    %330 = vmatpush2.msra.mxu0 0.0
    %331 = vmatprep.subr.mxu0 0.0
    %332 = vmatpush2.msra.mxu0 0.0
    %333 = vmatprep.subr.mxu0 0.0
    %334 = vmatpush2.msra.mxu0 0.0
    %335 = vmatprep.subr.mxu0 0.0
    %336 = vmatpush2.msra.mxu0 0.0
    %337 = vmatprep.subr.mxu0 0.0
    %338 = vmatpush2.msra.mxu0 0.0
    %339 = vmatprep.subr.mxu0 0.0
    %340 = vmatpush2.msra.mxu0 0.0
    %341 = vmatprep.subr.mxu0 0.0
    %342 = vmatpush2.msra.mxu0 0.0
    %343 = vmatprep.subr.mxu0 0.0
    %344 = vmatpush2.msra.mxu0 0.0
    %345 = vmatprep.subr.mxu0 0.0
    %346 = vmatpush2.msra.mxu0 0.0
    %347 = vmatprep.subr.mxu0 0.0
    %348 = vmatpush2.msra.mxu0 0.0
    %349 = vmatprep.subr.mxu0 0.0
    %350 = vmatpush2.msra.mxu0 0.0
    %351 = vmatprep.subr.mxu0 0.0
    %352 = vmatpush2.msra.mxu0 0.0
    %353 = vmatprep.subr.mxu0 0.0
    %354 = vmatpush2.msra.mxu0 0.0
    %355 = vmatprep.mubr.f32.mxu0 0.0
    %356 = vmatmul.mubr.f32.gmra.mxu0 %v289
    %v357 = vpop.f32.mrf.mxu0
    %v358 = vadd.f32 %v112, %v357
    %v359 = vpop.f32.mrf.mxu0
    %360 = vdwg.mxu0
    %v362 = vsel %vm141, %v48, 0
    %364 = vmatprep.subr.mxu0 0.0
    %365 = vmatpush1.msra.mxu0 0.0
    %366 = vmatprep.subr.mxu0 0.0
    %367 = vmatpush1.msra.mxu0 0.0
    %368 = vmatprep.subr.mxu0 0.0
    %369 = vmatpush1.msra.mxu0 0.0
    %370 = vmatprep.subr.mxu0 0.0
    %371 = vmatpush1.msra.mxu0 0.0
    %372 = vmatprep.subr.mxu0 0.0
    %373 = vmatpush1.msra.mxu0 0.0
    %374 = vmatprep.subr.mxu0 0.0
    %375 = vmatpush1.msra.mxu0 0.0
    %376 = vmatprep.subr.mxu0 0.0
    %377 = vmatpush1.msra.mxu0 0.0
    %378 = vmatprep.subr.mxu0 0.0
    %379 = vmatpush1.msra.mxu0 0.0
    %380 = vmatprep.subr.mxu0 0.0
    %381 = vmatpush1.msra.mxu0 0.0
    %382 = vmatprep.subr.mxu0 0.0
    %383 = vmatpush1.msra.mxu0 0.0
    %384 = vmatprep.subr.mxu0 0.0
    %385 = vmatpush1.msra.mxu0 0.0
    %386 = vmatprep.subr.mxu0 0.0
    %387 = vmatpush1.msra.mxu0 0.0
    %388 = vmatprep.subr.mxu0 0.0
    %389 = vmatpush1.msra.mxu0 %v68
    %390 = vmatprep.subr.mxu0 0.0
    %391 = vmatpush1.msra.mxu0 %v67
    %392 = vmatprep.subr.mxu0 0.0
    %393 = vmatpush1.msra.mxu0 %v66
    %394 = vmatprep.subr.mxu0 0.0
    %395 = vmatpush1.msra.mxu0 %v65
    %396 = vmatprep.subr.mxu0 0.0
    %397 = vmatpush2.msra.mxu0 0.0
    %398 = vmatprep.subr.mxu0 0.0
    %399 = vmatpush2.msra.mxu0 0.0
    %400 = vmatprep.subr.mxu0 0.0
    %401 = vmatpush2.msra.mxu0 0.0
    %402 = vmatprep.subr.mxu0 0.0
    %403 = vmatpush2.msra.mxu0 0.0
    %404 = vmatprep.subr.mxu0 0.0
    %405 = vmatpush2.msra.mxu0 0.0
    %406 = vmatprep.subr.mxu0 0.0
    %407 = vmatpush2.msra.mxu0 0.0
    %408 = vmatprep.subr.mxu0 0.0
    %409 = vmatpush2.msra.mxu0 0.0
    %410 = vmatprep.subr.mxu0 0.0
    %411 = vmatpush2.msra.mxu0 0.0
    %412 = vmatprep.subr.mxu0 0.0
    %413 = vmatpush2.msra.mxu0 0.0
    %414 = vmatprep.subr.mxu0 0.0
    %415 = vmatpush2.msra.mxu0 0.0
    %416 = vmatprep.subr.mxu0 0.0
    %417 = vmatpush2.msra.mxu0 0.0
    %418 = vmatprep.subr.mxu0 0.0
    %419 = vmatpush2.msra.mxu0 0.0
    %420 = vmatprep.subr.mxu0 0.0
    %421 = vmatpush2.msra.mxu0 0.0
    %422 = vmatprep.subr.mxu0 0.0
    %423 = vmatpush2.msra.mxu0 0.0
    %424 = vmatprep.subr.mxu0 0.0
    %425 = vmatpush2.msra.mxu0 0.0
    %426 = vmatprep.subr.mxu0 0.0
    %427 = vmatpush2.msra.mxu0 0.0
    %428 = vmatprep.mubr.f32.mxu0 0.0
    %429 = vmatmul.mubr.f32.gmra.mxu0 %v362
    %v430 = vpop.f32.mrf.mxu0
    %v431 = vadd.f32 %v116, %v430
    %v432 = vpop.f32.mrf.mxu0
    %433 = vdwg.mxu0
    %v435 = vsel %vm141, %v49, 0
    %437 = vmatprep.subr.mxu0 0.0
    %438 = vmatpush1.msra.mxu0 0.0
    %439 = vmatprep.subr.mxu0 0.0
    %440 = vmatpush1.msra.mxu0 0.0
    %441 = vmatprep.subr.mxu0 0.0
    %442 = vmatpush1.msra.mxu0 0.0
    %443 = vmatprep.subr.mxu0 0.0
    %444 = vmatpush1.msra.mxu0 0.0
    %445 = vmatprep.subr.mxu0 0.0
    %446 = vmatpush1.msra.mxu0 0.0
    %447 = vmatprep.subr.mxu0 0.0
    %448 = vmatpush1.msra.mxu0 0.0
    %449 = vmatprep.subr.mxu0 0.0
    %450 = vmatpush1.msra.mxu0 0.0
    %451 = vmatprep.subr.mxu0 0.0
    %452 = vmatpush1.msra.mxu0 0.0
    %453 = vmatprep.subr.mxu0 0.0
    %454 = vmatpush1.msra.mxu0 0.0
    %455 = vmatprep.subr.mxu0 0.0
    %456 = vmatpush1.msra.mxu0 0.0
    %457 = vmatprep.subr.mxu0 0.0
    %458 = vmatpush1.msra.mxu0 0.0
    %459 = vmatprep.subr.mxu0 0.0
    %460 = vmatpush1.msra.mxu0 0.0
    %461 = vmatprep.subr.mxu0 0.0
    %462 = vmatpush1.msra.mxu0 %v72
    %463 = vmatprep.subr.mxu0 0.0
    %464 = vmatpush1.msra.mxu0 %v71
    %465 = vmatprep.subr.mxu0 0.0
    %466 = vmatpush1.msra.mxu0 %v70
    %467 = vmatprep.subr.mxu0 0.0
    %468 = vmatpush1.msra.mxu0 %v69
    %469 = vmatprep.subr.mxu0 0.0
    %470 = vmatpush2.msra.mxu0 0.0
    %471 = vmatprep.subr.mxu0 0.0
    %472 = vmatpush2.msra.mxu0 0.0
    %473 = vmatprep.subr.mxu0 0.0
    %474 = vmatpush2.msra.mxu0 0.0
    %475 = vmatprep.subr.mxu0 0.0
    %476 = vmatpush2.msra.mxu0 0.0
    %477 = vmatprep.subr.mxu0 0.0
    %478 = vmatpush2.msra.mxu0 0.0
    %479 = vmatprep.subr.mxu0 0.0
    %480 = vmatpush2.msra.mxu0 0.0
    %481 = vmatprep.subr.mxu0 0.0
    %482 = vmatpush2.msra.mxu0 0.0
    %483 = vmatprep.subr.mxu0 0.0
    %484 = vmatpush2.msra.mxu0 0.0
    %485 = vmatprep.subr.mxu0 0.0
    %486 = vmatpush2.msra.mxu0 0.0
    %487 = vmatprep.subr.mxu0 0.0
    %488 = vmatpush2.msra.mxu0 0.0
    %489 = vmatprep.subr.mxu0 0.0
    %490 = vmatpush2.msra.mxu0 0.0
    %491 = vmatprep.subr.mxu0 0.0
    %492 = vmatpush2.msra.mxu0 0.0
    %493 = vmatprep.subr.mxu0 0.0
    %494 = vmatpush2.msra.mxu0 0.0
    %495 = vmatprep.subr.mxu0 0.0
    %496 = vmatpush2.msra.mxu0 0.0
    %497 = vmatprep.subr.mxu0 0.0
    %498 = vmatpush2.msra.mxu0 0.0
    %499 = vmatprep.subr.mxu0 0.0
    %500 = vmatpush2.msra.mxu0 0.0
    %501 = vmatprep.mubr.f32.mxu0 0.0
    %502 = vmatmul.mubr.f32.gmra.mxu0 %v435
    %v503 = vpop.f32.mrf.mxu0
    %v504 = vadd.f32 %v120, %v503
    %v505 = vpop.f32.mrf.mxu0
    %506 = vdwg.mxu0
    %v508 = vsel %vm141, %v50, 0
    %510 = vmatprep.subr.mxu0 0.0
    %511 = vmatpush1.msra.mxu0 0.0
    %512 = vmatprep.subr.mxu0 0.0
    %513 = vmatpush1.msra.mxu0 0.0
    %514 = vmatprep.subr.mxu0 0.0
    %515 = vmatpush1.msra.mxu0 0.0
    %516 = vmatprep.subr.mxu0 0.0
    %517 = vmatpush1.msra.mxu0 0.0
    %518 = vmatprep.subr.mxu0 0.0
    %519 = vmatpush1.msra.mxu0 0.0
    %520 = vmatprep.subr.mxu0 0.0
    %521 = vmatpush1.msra.mxu0 0.0
    %522 = vmatprep.subr.mxu0 0.0
    %523 = vmatpush1.msra.mxu0 0.0
    %524 = vmatprep.subr.mxu0 0.0
    %525 = vmatpush1.msra.mxu0 0.0
    %526 = vmatprep.subr.mxu0 0.0
    %527 = vmatpush1.msra.mxu0 0.0
    %528 = vmatprep.subr.mxu0 0.0
    %529 = vmatpush1.msra.mxu0 0.0
    %530 = vmatprep.subr.mxu0 0.0
    %531 = vmatpush1.msra.mxu0 0.0
    %532 = vmatprep.subr.mxu0 0.0
    %533 = vmatpush1.msra.mxu0 0.0
    %534 = vmatprep.subr.mxu0 0.0
    %535 = vmatpush1.msra.mxu0 %v76
    %536 = vmatprep.subr.mxu0 0.0
    %537 = vmatpush1.msra.mxu0 %v75
    %538 = vmatprep.subr.mxu0 0.0
    %539 = vmatpush1.msra.mxu0 %v74
    %540 = vmatprep.subr.mxu0 0.0
    %541 = vmatpush1.msra.mxu0 %v73
    %542 = vmatprep.subr.mxu0 0.0
    %543 = vmatpush2.msra.mxu0 0.0
    %544 = vmatprep.subr.mxu0 0.0
    %545 = vmatpush2.msra.mxu0 0.0
    %546 = vmatprep.subr.mxu0 0.0
    %547 = vmatpush2.msra.mxu0 0.0
    %548 = vmatprep.subr.mxu0 0.0
    %549 = vmatpush2.msra.mxu0 0.0
    %550 = vmatprep.subr.mxu0 0.0
    %551 = vmatpush2.msra.mxu0 0.0
    %552 = vmatprep.subr.mxu0 0.0
    %553 = vmatpush2.msra.mxu0 0.0
    %554 = vmatprep.subr.mxu0 0.0
    %555 = vmatpush2.msra.mxu0 0.0
    %556 = vmatprep.subr.mxu0 0.0
    %557 = vmatpush2.msra.mxu0 0.0
    %558 = vmatprep.subr.mxu0 0.0
    %559 = vmatpush2.msra.mxu0 0.0
    %560 = vmatprep.subr.mxu0 0.0
    %561 = vmatpush2.msra.mxu0 0.0
    %562 = vmatprep.subr.mxu0 0.0
    %563 = vmatpush2.msra.mxu0 0.0
    %564 = vmatprep.subr.mxu0 0.0
    %565 = vmatpush2.msra.mxu0 0.0
    %566 = vmatprep.subr.mxu0 0.0
    %567 = vmatpush2.msra.mxu0 0.0
    %568 = vmatprep.subr.mxu0 0.0
    %569 = vmatpush2.msra.mxu0 0.0
    %570 = vmatprep.subr.mxu0 0.0
    %571 = vmatpush2.msra.mxu0 0.0
    %572 = vmatprep.subr.mxu0 0.0
    %573 = vmatpush2.msra.mxu0 0.0
    %574 = vmatprep.mubr.f32.mxu0 0.0
    %575 = vmatmul.mubr.f32.gmra.mxu0 %v508
    %v576 = vpop.f32.mrf.mxu0
    %v577 = vadd.f32 %v124, %v576
    %v578 = vpop.f32.mrf.mxu0
    %579 = vdwg.mxu0
    %v581 = vsel %vm141, %v51, 0
    %583 = vmatprep.subr.mxu0 0.0
    %584 = vmatpush1.msra.mxu0 0.0
    %585 = vmatprep.subr.mxu0 0.0
    %586 = vmatpush1.msra.mxu0 0.0
    %587 = vmatprep.subr.mxu0 0.0
    %588 = vmatpush1.msra.mxu0 0.0
    %589 = vmatprep.subr.mxu0 0.0
    %590 = vmatpush1.msra.mxu0 0.0
    %591 = vmatprep.subr.mxu0 0.0
    %592 = vmatpush1.msra.mxu0 0.0
    %593 = vmatprep.subr.mxu0 0.0
    %594 = vmatpush1.msra.mxu0 0.0
    %595 = vmatprep.subr.mxu0 0.0
    %596 = vmatpush1.msra.mxu0 0.0
    %597 = vmatprep.subr.mxu0 0.0
    %598 = vmatpush1.msra.mxu0 0.0
    %599 = vmatprep.subr.mxu0 0.0
    %600 = vmatpush1.msra.mxu0 0.0
    %601 = vmatprep.subr.mxu0 0.0
    %602 = vmatpush1.msra.mxu0 0.0
    %603 = vmatprep.subr.mxu0 0.0
    %604 = vmatpush1.msra.mxu0 0.0
    %605 = vmatprep.subr.mxu0 0.0
    %606 = vmatpush1.msra.mxu0 0.0
    %607 = vmatprep.subr.mxu0 0.0
    %608 = vmatpush1.msra.mxu0 %v80
    %609 = vmatprep.subr.mxu0 0.0
    %610 = vmatpush1.msra.mxu0 %v79
    %611 = vmatprep.subr.mxu0 0.0
    %612 = vmatpush1.msra.mxu0 %v78
    %613 = vmatprep.subr.mxu0 0.0
    %614 = vmatpush1.msra.mxu0 %v77
    %615 = vmatprep.subr.mxu0 0.0
    %616 = vmatpush2.msra.mxu0 0.0
    %617 = vmatprep.subr.mxu0 0.0
    %618 = vmatpush2.msra.mxu0 0.0
    %619 = vmatprep.subr.mxu0 0.0
    %620 = vmatpush2.msra.mxu0 0.0
    %621 = vmatprep.subr.mxu0 0.0
    %622 = vmatpush2.msra.mxu0 0.0
    %623 = vmatprep.subr.mxu0 0.0
    %624 = vmatpush2.msra.mxu0 0.0
    %625 = vmatprep.subr.mxu0 0.0
    %626 = vmatpush2.msra.mxu0 0.0
    %627 = vmatprep.subr.mxu0 0.0
    %628 = vmatpush2.msra.mxu0 0.0
    %629 = vmatprep.subr.mxu0 0.0
    %630 = vmatpush2.msra.mxu0 0.0
    %631 = vmatprep.subr.mxu0 0.0
    %632 = vmatpush2.msra.mxu0 0.0
    %633 = vmatprep.subr.mxu0 0.0
    %634 = vmatpush2.msra.mxu0 0.0
    %635 = vmatprep.subr.mxu0 0.0
    %636 = vmatpush2.msra.mxu0 0.0
    %637 = vmatprep.subr.mxu0 0.0
    %638 = vmatpush2.msra.mxu0 0.0
    %639 = vmatprep.subr.mxu0 0.0
    %640 = vmatpush2.msra.mxu0 0.0
    %641 = vmatprep.subr.mxu0 0.0
    %642 = vmatpush2.msra.mxu0 0.0
    %643 = vmatprep.subr.mxu0 0.0
    %644 = vmatpush2.msra.mxu0 0.0
    %645 = vmatprep.subr.mxu0 0.0
    %646 = vmatpush2.msra.mxu0 0.0
    %647 = vmatprep.mubr.f32.mxu0 0.0
    %648 = vmatmul.mubr.f32.gmra.mxu0 %v581
    %v649 = vpop.f32.mrf.mxu0
    %v650 = vadd.f32 %v128, %v649
    %v651 = vpop.f32.mrf.mxu0
    %652 = vdwg.mxu0
    %v654 = vsel %vm141, %v52, 0
    %656 = vmatprep.subr.mxu0 0.0
    %657 = vmatpush1.msra.mxu0 0.0
    %658 = vmatprep.subr.mxu0 0.0
    %659 = vmatpush1.msra.mxu0 0.0
    %660 = vmatprep.subr.mxu0 0.0
    %661 = vmatpush1.msra.mxu0 0.0
    %662 = vmatprep.subr.mxu0 0.0
    %663 = vmatpush1.msra.mxu0 0.0
    %664 = vmatprep.subr.mxu0 0.0
    %665 = vmatpush1.msra.mxu0 0.0
    %666 = vmatprep.subr.mxu0 0.0
    %667 = vmatpush1.msra.mxu0 0.0
    %668 = vmatprep.subr.mxu0 0.0
    %669 = vmatpush1.msra.mxu0 0.0
    %670 = vmatprep.subr.mxu0 0.0
    %671 = vmatpush1.msra.mxu0 0.0
    %672 = vmatprep.subr.mxu0 0.0
    %673 = vmatpush1.msra.mxu0 0.0
    %674 = vmatprep.subr.mxu0 0.0
    %675 = vmatpush1.msra.mxu0 0.0
    %676 = vmatprep.subr.mxu0 0.0
    %677 = vmatpush1.msra.mxu0 0.0
    %678 = vmatprep.subr.mxu0 0.0
    %679 = vmatpush1.msra.mxu0 0.0
    %680 = vmatprep.subr.mxu0 0.0
    %681 = vmatpush1.msra.mxu0 %v84
    %682 = vmatprep.subr.mxu0 0.0
    %683 = vmatpush1.msra.mxu0 %v83
    %684 = vmatprep.subr.mxu0 0.0
    %685 = vmatpush1.msra.mxu0 %v82
    %686 = vmatprep.subr.mxu0 0.0
    %687 = vmatpush1.msra.mxu0 %v81
    %688 = vmatprep.subr.mxu0 0.0
    %689 = vmatpush2.msra.mxu0 0.0
    %690 = vmatprep.subr.mxu0 0.0
    %691 = vmatpush2.msra.mxu0 0.0
    %692 = vmatprep.subr.mxu0 0.0
    %693 = vmatpush2.msra.mxu0 0.0
    %694 = vmatprep.subr.mxu0 0.0
    %695 = vmatpush2.msra.mxu0 0.0
    %696 = vmatprep.subr.mxu0 0.0
    %697 = vmatpush2.msra.mxu0 0.0
    %698 = vmatprep.subr.mxu0 0.0
    %699 = vmatpush2.msra.mxu0 0.0
    %700 = vmatprep.subr.mxu0 0.0
    %701 = vmatpush2.msra.mxu0 0.0
    %702 = vmatprep.subr.mxu0 0.0
    %703 = vmatpush2.msra.mxu0 0.0
    %704 = vmatprep.subr.mxu0 0.0
    %705 = vmatpush2.msra.mxu0 0.0
    %706 = vmatprep.subr.mxu0 0.0
    %707 = vmatpush2.msra.mxu0 0.0
    %708 = vmatprep.subr.mxu0 0.0
    %709 = vmatpush2.msra.mxu0 0.0
    %710 = vmatprep.subr.mxu0 0.0
    %711 = vmatpush2.msra.mxu0 0.0
    %712 = vmatprep.subr.mxu0 0.0
    %713 = vmatpush2.msra.mxu0 0.0
    %714 = vmatprep.subr.mxu0 0.0
    %715 = vmatpush2.msra.mxu0 0.0
    %716 = vmatprep.subr.mxu0 0.0
    %717 = vmatpush2.msra.mxu0 0.0
    %718 = vmatprep.subr.mxu0 0.0
    %719 = vmatpush2.msra.mxu0 0.0
    %720 = vmatprep.mubr.f32.mxu0 0.0
    %721 = vmatmul.mubr.f32.gmra.mxu0 %v654
    %v722 = vpop.f32.mrf.mxu0
    %v723 = vadd.f32 %v132, %v722
    %v724 = vpop.f32.mrf.mxu0
    %725 = vdwg.mxu0
    %v726 = vld [vmem:[%s3] sm:$0xff]
    %v727 = vld [vmem:[%s3 + $0x8] sm:$0xff]
    %v728 = vld [vmem:[%s3 + $0x10] sm:$0xff]
    %v729 = vld [vmem:[%s3 + $0x18] sm:$0xff]
    %v730 = vld [vmem:[%s3 + $0x20] sm:$0xff]
    %v731 = vld [vmem:[%s3 + $0x28] sm:$0xff]
    %v732 = vld [vmem:[%s3 + $0x30] sm:$0xff]
    %v733 = vld [vmem:[%s3 + $0x38] sm:$0xff]
    %v734 = vld [vmem:[%s3 + $0x40] sm:$0xff]
    %v735 = vld [vmem:[%s3 + $0x48] sm:$0xff]
    %v736 = vld [vmem:[%s3 + $0x50] sm:$0xff]
    %v737 = vld [vmem:[%s3 + $0x58] sm:$0xff]
    %v738 = vld [vmem:[%s3 + $0x60] sm:$0xff]
    %v739 = vld [vmem:[%s3 + $0x68] sm:$0xff]
    %v740 = vld [vmem:[%s3 + $0x70] sm:$0xff]
    %v741 = vld [vmem:[%s3 + $0x78] sm:$0xff]
    %v742 = vld [vmem:[%s3 + $0x80] sm:$0xff]
    %v743 = vld [vmem:[%s3 + $0x88] sm:$0xff]
    %v744 = vld [vmem:[%s3 + $0x90] sm:$0xff]
    %v745 = vld [vmem:[%s3 + $0x98] sm:$0xff]
    %v746 = vld [vmem:[%s3 + $0xa0] sm:$0xff]
    %v747 = vld [vmem:[%s3 + $0xa8] sm:$0xff]
    %v748 = vld [vmem:[%s3 + $0xb0] sm:$0xff]
    %v749 = vld [vmem:[%s3 + $0xb8] sm:$0xff]
    %v750 = vld [vmem:[%s3 + $0xc0] sm:$0xff]
    %v751 = vld [vmem:[%s3 + $0xc8] sm:$0xff]
    %v752 = vld [vmem:[%s3 + $0xd0] sm:$0xff]
    %v753 = vld [vmem:[%s3 + $0xd8] sm:$0xff]
    %v754 = vld [vmem:[%s3 + $0xe0] sm:$0xff]
    %v755 = vld [vmem:[%s3 + $0xe8] sm:$0xff]
    %v756 = vld [vmem:[%s3 + $0xf0] sm:$0xff]
    %v757 = vld [vmem:[%s3 + $0xf8] sm:$0xff]
    %v758 = vld [vmem:[%s4] sm:$0x1]
    %v759 = vld [vmem:[%s4 + $0x1] sm:$0x1]
    %v760 = vld [vmem:[%s4 + $0x2] sm:$0x1]
    %v761 = vld [vmem:[%s4 + $0x3] sm:$0x1]
    %v762 = vld [vmem:[%s4 + $0x4] sm:$0x1]
    %v763 = vld [vmem:[%s4 + $0x5] sm:$0x1]
    %v764 = vld [vmem:[%s4 + $0x6] sm:$0x1]
    %v765 = vld [vmem:[%s4 + $0x7] sm:$0x1]
    %v774 = vlaneseq
    %v775 = vshrl.u32 %v774, 7
    %v776 = vsub.s32 0, %v775
    %v777 = vrot.slane %v758, %v776
    %v778 = vlaneseq
    %v779 = vshrl.u32 %v778, 7
    %v780 = vsub.s32 0, %v779
    %v781 = vrot.slane %v759, %v780
    %v782 = vlaneseq
    %v783 = vshrl.u32 %v782, 7
    %v784 = vsub.s32 0, %v783
    %v785 = vrot.slane %v760, %v784
    %v786 = vlaneseq
    %v787 = vshrl.u32 %v786, 7
    %v788 = vsub.s32 0, %v787
    %v789 = vrot.slane %v761, %v788
    %v790 = vlaneseq
    %v791 = vshrl.u32 %v790, 7
    %v792 = vsub.s32 0, %v791
    %v793 = vrot.slane %v762, %v792
    %v794 = vlaneseq
    %v795 = vshrl.u32 %v794, 7
    %v796 = vsub.s32 0, %v795
    %v797 = vrot.slane %v763, %v796
    %v798 = vlaneseq
    %v799 = vshrl.u32 %v798, 7
    %v800 = vsub.s32 0, %v799
    %v801 = vrot.slane %v764, %v800
    %v802 = vlaneseq
    %v803 = vshrl.u32 %v802, 7
    %v804 = vsub.s32 0, %v803
    %v805 = vrot.slane %v765, %v804
    %814 = vmatprep.subr.mxu0 0.0
    %815 = vmatpush1.msra.mxu0 0.0
    %816 = vmatprep.subr.mxu0 0.0
    %817 = vmatpush1.msra.mxu0 0.0
    %818 = vmatprep.subr.mxu0 0.0
    %819 = vmatpush1.msra.mxu0 0.0
    %820 = vmatprep.subr.mxu0 0.0
    %821 = vmatpush1.msra.mxu0 0.0
    %822 = vmatprep.subr.mxu0 0.0
    %823 = vmatpush1.msra.mxu0 0.0
    %824 = vmatprep.subr.mxu0 0.0
    %825 = vmatpush1.msra.mxu0 0.0
    %826 = vmatprep.subr.mxu0 0.0
    %827 = vmatpush1.msra.mxu0 0.0
    %828 = vmatprep.subr.mxu0 0.0
    %829 = vmatpush1.msra.mxu0 0.0
    %830 = vmatprep.subr.mxu0 0.0
    %831 = vmatpush1.msra.mxu0 0.0
    %832 = vmatprep.subr.mxu0 0.0
    %833 = vmatpush1.msra.mxu0 0.0
    %834 = vmatprep.subr.mxu0 0.0
    %835 = vmatpush1.msra.mxu0 0.0
    %836 = vmatprep.subr.mxu0 0.0
    %837 = vmatpush1.msra.mxu0 0.0
    %838 = vmatprep.subr.mxu0 0.0
    %839 = vmatpush1.msra.mxu0 %v729
    %840 = vmatprep.subr.mxu0 0.0
    %841 = vmatpush1.msra.mxu0 %v728
    %842 = vmatprep.subr.mxu0 0.0
    %843 = vmatpush1.msra.mxu0 %v727
    %844 = vmatprep.subr.mxu0 0.0
    %845 = vmatpush1.msra.mxu0 %v726
    %846 = vmatprep.subr.mxu0 0.0
    %847 = vmatpush2.msra.mxu0 0.0
    %848 = vmatprep.subr.mxu0 0.0
    %849 = vmatpush2.msra.mxu0 0.0
    %850 = vmatprep.subr.mxu0 0.0
    %851 = vmatpush2.msra.mxu0 0.0
    %852 = vmatprep.subr.mxu0 0.0
    %853 = vmatpush2.msra.mxu0 0.0
    %854 = vmatprep.subr.mxu0 0.0
    %855 = vmatpush2.msra.mxu0 0.0
    %856 = vmatprep.subr.mxu0 0.0
    %857 = vmatpush2.msra.mxu0 0.0
    %858 = vmatprep.subr.mxu0 0.0
    %859 = vmatpush2.msra.mxu0 0.0
    %860 = vmatprep.subr.mxu0 0.0
    %861 = vmatpush2.msra.mxu0 0.0
    %862 = vmatprep.subr.mxu0 0.0
    %863 = vmatpush2.msra.mxu0 0.0
    %864 = vmatprep.subr.mxu0 0.0
    %865 = vmatpush2.msra.mxu0 0.0
    %866 = vmatprep.subr.mxu0 0.0
    %867 = vmatpush2.msra.mxu0 0.0
    %868 = vmatprep.subr.mxu0 0.0
    %869 = vmatpush2.msra.mxu0 0.0
    %870 = vmatprep.subr.mxu0 0.0
    %871 = vmatpush2.msra.mxu0 0.0
    %872 = vmatprep.subr.mxu0 0.0
    %873 = vmatpush2.msra.mxu0 0.0
    %874 = vmatprep.subr.mxu0 0.0
    %875 = vmatpush2.msra.mxu0 0.0
    %876 = vmatprep.subr.mxu0 0.0
    %877 = vmatpush2.msra.mxu0 0.0
    %878 = vmatprep.mubr.f32.mxu0 0.0
    %879 = vmatmul.mubr.f32.gmra.mxu0 %v143
    %v880 = vpop.f32.mrf.mxu0
    %v881 = vadd.f32 %v777, %v880
    %v882 = vpop.f32.mrf.mxu0
    %883 = vdwg.mxu0
    %884 = vmatprep.subr.mxu0 0.0
    %885 = vmatpush1.msra.mxu0 0.0
    %886 = vmatprep.subr.mxu0 0.0
    %887 = vmatpush1.msra.mxu0 0.0
    %888 = vmatprep.subr.mxu0 0.0
    %889 = vmatpush1.msra.mxu0 0.0
    %890 = vmatprep.subr.mxu0 0.0
    %891 = vmatpush1.msra.mxu0 0.0
    %892 = vmatprep.subr.mxu0 0.0
    %893 = vmatpush1.msra.mxu0 0.0
    %894 = vmatprep.subr.mxu0 0.0
    %895 = vmatpush1.msra.mxu0 0.0
    %896 = vmatprep.subr.mxu0 0.0
    %897 = vmatpush1.msra.mxu0 0.0
    %898 = vmatprep.subr.mxu0 0.0
    %899 = vmatpush1.msra.mxu0 0.0
    %900 = vmatprep.subr.mxu0 0.0
    %901 = vmatpush1.msra.mxu0 0.0
    %902 = vmatprep.subr.mxu0 0.0
    %903 = vmatpush1.msra.mxu0 0.0
    %904 = vmatprep.subr.mxu0 0.0
    %905 = vmatpush1.msra.mxu0 0.0
    %906 = vmatprep.subr.mxu0 0.0
    %907 = vmatpush1.msra.mxu0 0.0
    %908 = vmatprep.subr.mxu0 0.0
    %909 = vmatpush1.msra.mxu0 %v733
    %910 = vmatprep.subr.mxu0 0.0
    %911 = vmatpush1.msra.mxu0 %v732
    %912 = vmatprep.subr.mxu0 0.0
    %913 = vmatpush1.msra.mxu0 %v731
    %914 = vmatprep.subr.mxu0 0.0
    %915 = vmatpush1.msra.mxu0 %v730
    %916 = vmatprep.subr.mxu0 0.0
    %917 = vmatpush2.msra.mxu0 0.0
    %918 = vmatprep.subr.mxu0 0.0
    %919 = vmatpush2.msra.mxu0 0.0
    %920 = vmatprep.subr.mxu0 0.0
    %921 = vmatpush2.msra.mxu0 0.0
    %922 = vmatprep.subr.mxu0 0.0
    %923 = vmatpush2.msra.mxu0 0.0
    %924 = vmatprep.subr.mxu0 0.0
    %925 = vmatpush2.msra.mxu0 0.0
    %926 = vmatprep.subr.mxu0 0.0
    %927 = vmatpush2.msra.mxu0 0.0
    %928 = vmatprep.subr.mxu0 0.0
    %929 = vmatpush2.msra.mxu0 0.0
    %930 = vmatprep.subr.mxu0 0.0
    %931 = vmatpush2.msra.mxu0 0.0
    %932 = vmatprep.subr.mxu0 0.0
    %933 = vmatpush2.msra.mxu0 0.0
    %934 = vmatprep.subr.mxu0 0.0
    %935 = vmatpush2.msra.mxu0 0.0
    %936 = vmatprep.subr.mxu0 0.0
    %937 = vmatpush2.msra.mxu0 0.0
    %938 = vmatprep.subr.mxu0 0.0
    %939 = vmatpush2.msra.mxu0 0.0
    %940 = vmatprep.subr.mxu0 0.0
    %941 = vmatpush2.msra.mxu0 0.0
    %942 = vmatprep.subr.mxu0 0.0
    %943 = vmatpush2.msra.mxu0 0.0
    %944 = vmatprep.subr.mxu0 0.0
    %945 = vmatpush2.msra.mxu0 0.0
    %946 = vmatprep.subr.mxu0 0.0
    %947 = vmatpush2.msra.mxu0 0.0
    %948 = vmatprep.mubr.f32.mxu0 0.0
    %949 = vmatmul.mubr.f32.gmra.mxu0 %v216
    %v950 = vpop.f32.mrf.mxu0
    %v951 = vadd.f32 %v781, %v950
    %v952 = vpop.f32.mrf.mxu0
    %953 = vdwg.mxu0
    %954 = vmatprep.subr.mxu0 0.0
    %955 = vmatpush1.msra.mxu0 0.0
    %956 = vmatprep.subr.mxu0 0.0
    %957 = vmatpush1.msra.mxu0 0.0
    %958 = vmatprep.subr.mxu0 0.0
    %959 = vmatpush1.msra.mxu0 0.0
    %960 = vmatprep.subr.mxu0 0.0
    %961 = vmatpush1.msra.mxu0 0.0
    %962 = vmatprep.subr.mxu0 0.0
    %963 = vmatpush1.msra.mxu0 0.0
    %964 = vmatprep.subr.mxu0 0.0
    %965 = vmatpush1.msra.mxu0 0.0
    %966 = vmatprep.subr.mxu0 0.0
    %967 = vmatpush1.msra.mxu0 0.0
    %968 = vmatprep.subr.mxu0 0.0
    %969 = vmatpush1.msra.mxu0 0.0
    %970 = vmatprep.subr.mxu0 0.0
    %971 = vmatpush1.msra.mxu0 0.0
    %972 = vmatprep.subr.mxu0 0.0
    %973 = vmatpush1.msra.mxu0 0.0
    %974 = vmatprep.subr.mxu0 0.0
    %975 = vmatpush1.msra.mxu0 0.0
    %976 = vmatprep.subr.mxu0 0.0
    %977 = vmatpush1.msra.mxu0 0.0
    %978 = vmatprep.subr.mxu0 0.0
    %979 = vmatpush1.msra.mxu0 %v737
    %980 = vmatprep.subr.mxu0 0.0
    %981 = vmatpush1.msra.mxu0 %v736
    %982 = vmatprep.subr.mxu0 0.0
    %983 = vmatpush1.msra.mxu0 %v735
    %984 = vmatprep.subr.mxu0 0.0
    %985 = vmatpush1.msra.mxu0 %v734
    %986 = vmatprep.subr.mxu0 0.0
    %987 = vmatpush2.msra.mxu0 0.0
    %988 = vmatprep.subr.mxu0 0.0
    %989 = vmatpush2.msra.mxu0 0.0
    %990 = vmatprep.subr.mxu0 0.0
    %991 = vmatpush2.msra.mxu0 0.0
    %992 = vmatprep.subr.mxu0 0.0
    %993 = vmatpush2.msra.mxu0 0.0
    %994 = vmatprep.subr.mxu0 0.0
    %995 = vmatpush2.msra.mxu0 0.0
    %996 = vmatprep.subr.mxu0 0.0
    %997 = vmatpush2.msra.mxu0 0.0
    %998 = vmatprep.subr.mxu0 0.0
    %999 = vmatpush2.msra.mxu0 0.0
    %1000 = vmatprep.subr.mxu0 0.0
    %1001 = vmatpush2.msra.mxu0 0.0
    %1002 = vmatprep.subr.mxu0 0.0
    %1003 = vmatpush2.msra.mxu0 0.0
    %1004 = vmatprep.subr.mxu0 0.0
    %1005 = vmatpush2.msra.mxu0 0.0
    %1006 = vmatprep.subr.mxu0 0.0
    %1007 = vmatpush2.msra.mxu0 0.0
    %1008 = vmatprep.subr.mxu0 0.0
    %1009 = vmatpush2.msra.mxu0 0.0
    %1010 = vmatprep.subr.mxu0 0.0
    %1011 = vmatpush2.msra.mxu0 0.0
    %1012 = vmatprep.subr.mxu0 0.0
    %1013 = vmatpush2.msra.mxu0 0.0
    %1014 = vmatprep.subr.mxu0 0.0
    %1015 = vmatpush2.msra.mxu0 0.0
    %1016 = vmatprep.subr.mxu0 0.0
    %1017 = vmatpush2.msra.mxu0 0.0
    %1018 = vmatprep.mubr.f32.mxu0 0.0
    %1019 = vmatmul.mubr.f32.gmra.mxu0 %v289
    %v1020 = vpop.f32.mrf.mxu0
    %v1021 = vadd.f32 %v785, %v1020
    %v1022 = vpop.f32.mrf.mxu0
    %1023 = vdwg.mxu0
    %1024 = vmatprep.subr.mxu0 0.0
    %1025 = vmatpush1.msra.mxu0 0.0
    %1026 = vmatprep.subr.mxu0 0.0
    %1027 = vmatpush1.msra.mxu0 0.0
    %1028 = vmatprep.subr.mxu0 0.0
    %1029 = vmatpush1.msra.mxu0 0.0
    %1030 = vmatprep.subr.mxu0 0.0
    %1031 = vmatpush1.msra.mxu0 0.0
    %1032 = vmatprep.subr.mxu0 0.0
    %1033 = vmatpush1.msra.mxu0 0.0
    %1034 = vmatprep.subr.mxu0 0.0
    %1035 = vmatpush1.msra.mxu0 0.0
    %1036 = vmatprep.subr.mxu0 0.0
    %1037 = vmatpush1.msra.mxu0 0.0
    %1038 = vmatprep.subr.mxu0 0.0
    %1039 = vmatpush1.msra.mxu0 0.0
    %1040 = vmatprep.subr.mxu0 0.0
    %1041 = vmatpush1.msra.mxu0 0.0
    %1042 = vmatprep.subr.mxu0 0.0
    %1043 = vmatpush1.msra.mxu0 0.0
    %1044 = vmatprep.subr.mxu0 0.0
    %1045 = vmatpush1.msra.mxu0 0.0
    %1046 = vmatprep.subr.mxu0 0.0
    %1047 = vmatpush1.msra.mxu0 0.0
    %1048 = vmatprep.subr.mxu0 0.0
    %1049 = vmatpush1.msra.mxu0 %v741
    %1050 = vmatprep.subr.mxu0 0.0
    %1051 = vmatpush1.msra.mxu0 %v740
    %1052 = vmatprep.subr.mxu0 0.0
    %1053 = vmatpush1.msra.mxu0 %v739
    %1054 = vmatprep.subr.mxu0 0.0
    %1055 = vmatpush1.msra.mxu0 %v738
    %1056 = vmatprep.subr.mxu0 0.0
    %1057 = vmatpush2.msra.mxu0 0.0
    %1058 = vmatprep.subr.mxu0 0.0
    %1059 = vmatpush2.msra.mxu0 0.0
    %1060 = vmatprep.subr.mxu0 0.0
    %1061 = vmatpush2.msra.mxu0 0.0
    %1062 = vmatprep.subr.mxu0 0.0
    %1063 = vmatpush2.msra.mxu0 0.0
    %1064 = vmatprep.subr.mxu0 0.0
    %1065 = vmatpush2.msra.mxu0 0.0
    %1066 = vmatprep.subr.mxu0 0.0
    %1067 = vmatpush2.msra.mxu0 0.0
    %1068 = vmatprep.subr.mxu0 0.0
    %1069 = vmatpush2.msra.mxu0 0.0
    %1070 = vmatprep.subr.mxu0 0.0
    %1071 = vmatpush2.msra.mxu0 0.0
    %1072 = vmatprep.subr.mxu0 0.0
    %1073 = vmatpush2.msra.mxu0 0.0
    %1074 = vmatprep.subr.mxu0 0.0
    %1075 = vmatpush2.msra.mxu0 0.0
    %1076 = vmatprep.subr.mxu0 0.0
    %1077 = vmatpush2.msra.mxu0 0.0
    %1078 = vmatprep.subr.mxu0 0.0
    %1079 = vmatpush2.msra.mxu0 0.0
    %1080 = vmatprep.subr.mxu0 0.0
    %1081 = vmatpush2.msra.mxu0 0.0
    %1082 = vmatprep.subr.mxu0 0.0
    %1083 = vmatpush2.msra.mxu0 0.0
    %1084 = vmatprep.subr.mxu0 0.0
    %1085 = vmatpush2.msra.mxu0 0.0
    %1086 = vmatprep.subr.mxu0 0.0
    %1087 = vmatpush2.msra.mxu0 0.0
    %1088 = vmatprep.mubr.f32.mxu0 0.0
    %1089 = vmatmul.mubr.f32.gmra.mxu0 %v362
    %v1090 = vpop.f32.mrf.mxu0
    %v1091 = vadd.f32 %v789, %v1090
    %v1092 = vpop.f32.mrf.mxu0
    %1093 = vdwg.mxu0
    %1094 = vmatprep.subr.mxu0 0.0
    %1095 = vmatpush1.msra.mxu0 0.0
    %1096 = vmatprep.subr.mxu0 0.0
    %1097 = vmatpush1.msra.mxu0 0.0
    %1098 = vmatprep.subr.mxu0 0.0
    %1099 = vmatpush1.msra.mxu0 0.0
    %1100 = vmatprep.subr.mxu0 0.0
    %1101 = vmatpush1.msra.mxu0 0.0
    %1102 = vmatprep.subr.mxu0 0.0
    %1103 = vmatpush1.msra.mxu0 0.0
    %1104 = vmatprep.subr.mxu0 0.0
    %1105 = vmatpush1.msra.mxu0 0.0
    %1106 = vmatprep.subr.mxu0 0.0
    %1107 = vmatpush1.msra.mxu0 0.0
    %1108 = vmatprep.subr.mxu0 0.0
    %1109 = vmatpush1.msra.mxu0 0.0
    %1110 = vmatprep.subr.mxu0 0.0
    %1111 = vmatpush1.msra.mxu0 0.0
    %1112 = vmatprep.subr.mxu0 0.0
    %1113 = vmatpush1.msra.mxu0 0.0
    %1114 = vmatprep.subr.mxu0 0.0
    %1115 = vmatpush1.msra.mxu0 0.0
    %1116 = vmatprep.subr.mxu0 0.0
    %1117 = vmatpush1.msra.mxu0 0.0
    %1118 = vmatprep.subr.mxu0 0.0
    %1119 = vmatpush1.msra.mxu0 %v745
    %1120 = vmatprep.subr.mxu0 0.0
    %1121 = vmatpush1.msra.mxu0 %v744
    %1122 = vmatprep.subr.mxu0 0.0
    %1123 = vmatpush1.msra.mxu0 %v743
    %1124 = vmatprep.subr.mxu0 0.0
    %1125 = vmatpush1.msra.mxu0 %v742
    %1126 = vmatprep.subr.mxu0 0.0
    %1127 = vmatpush2.msra.mxu0 0.0
    %1128 = vmatprep.subr.mxu0 0.0
    %1129 = vmatpush2.msra.mxu0 0.0
    %1130 = vmatprep.subr.mxu0 0.0
    %1131 = vmatpush2.msra.mxu0 0.0
    %1132 = vmatprep.subr.mxu0 0.0
    %1133 = vmatpush2.msra.mxu0 0.0
    %1134 = vmatprep.subr.mxu0 0.0
    %1135 = vmatpush2.msra.mxu0 0.0
    %1136 = vmatprep.subr.mxu0 0.0
    %1137 = vmatpush2.msra.mxu0 0.0
    %1138 = vmatprep.subr.mxu0 0.0
    %1139 = vmatpush2.msra.mxu0 0.0
    %1140 = vmatprep.subr.mxu0 0.0
    %1141 = vmatpush2.msra.mxu0 0.0
    %1142 = vmatprep.subr.mxu0 0.0
    %1143 = vmatpush2.msra.mxu0 0.0
    %1144 = vmatprep.subr.mxu0 0.0
    %1145 = vmatpush2.msra.mxu0 0.0
    %1146 = vmatprep.subr.mxu0 0.0
    %1147 = vmatpush2.msra.mxu0 0.0
    %1148 = vmatprep.subr.mxu0 0.0
    %1149 = vmatpush2.msra.mxu0 0.0
    %1150 = vmatprep.subr.mxu0 0.0
    %1151 = vmatpush2.msra.mxu0 0.0
    %1152 = vmatprep.subr.mxu0 0.0
    %1153 = vmatpush2.msra.mxu0 0.0
    %1154 = vmatprep.subr.mxu0 0.0
    %1155 = vmatpush2.msra.mxu0 0.0
    %1156 = vmatprep.subr.mxu0 0.0
    %1157 = vmatpush2.msra.mxu0 0.0
    %1158 = vmatprep.mubr.f32.mxu0 0.0
    %1159 = vmatmul.mubr.f32.gmra.mxu0 %v435
    %v1160 = vpop.f32.mrf.mxu0
    %v1161 = vadd.f32 %v793, %v1160
    %v1162 = vpop.f32.mrf.mxu0
    %1163 = vdwg.mxu0
    %1164 = vmatprep.subr.mxu0 0.0
    %1165 = vmatpush1.msra.mxu0 0.0
    %1166 = vmatprep.subr.mxu0 0.0
    %1167 = vmatpush1.msra.mxu0 0.0
    %1168 = vmatprep.subr.mxu0 0.0
    %1169 = vmatpush1.msra.mxu0 0.0
    %1170 = vmatprep.subr.mxu0 0.0
    %1171 = vmatpush1.msra.mxu0 0.0
    %1172 = vmatprep.subr.mxu0 0.0
    %1173 = vmatpush1.msra.mxu0 0.0
    %1174 = vmatprep.subr.mxu0 0.0
    %1175 = vmatpush1.msra.mxu0 0.0
    %1176 = vmatprep.subr.mxu0 0.0
    %1177 = vmatpush1.msra.mxu0 0.0
    %1178 = vmatprep.subr.mxu0 0.0
    %1179 = vmatpush1.msra.mxu0 0.0
    %1180 = vmatprep.subr.mxu0 0.0
    %1181 = vmatpush1.msra.mxu0 0.0
    %1182 = vmatprep.subr.mxu0 0.0
    %1183 = vmatpush1.msra.mxu0 0.0
    %1184 = vmatprep.subr.mxu0 0.0
    %1185 = vmatpush1.msra.mxu0 0.0
    %1186 = vmatprep.subr.mxu0 0.0
    %1187 = vmatpush1.msra.mxu0 0.0
    %1188 = vmatprep.subr.mxu0 0.0
    %1189 = vmatpush1.msra.mxu0 %v749
    %1190 = vmatprep.subr.mxu0 0.0
    %1191 = vmatpush1.msra.mxu0 %v748
    %1192 = vmatprep.subr.mxu0 0.0
    %1193 = vmatpush1.msra.mxu0 %v747
    %1194 = vmatprep.subr.mxu0 0.0
    %1195 = vmatpush1.msra.mxu0 %v746
    %1196 = vmatprep.subr.mxu0 0.0
    %1197 = vmatpush2.msra.mxu0 0.0
    %1198 = vmatprep.subr.mxu0 0.0
    %1199 = vmatpush2.msra.mxu0 0.0
    %1200 = vmatprep.subr.mxu0 0.0
    %1201 = vmatpush2.msra.mxu0 0.0
    %1202 = vmatprep.subr.mxu0 0.0
    %1203 = vmatpush2.msra.mxu0 0.0
    %1204 = vmatprep.subr.mxu0 0.0
    %1205 = vmatpush2.msra.mxu0 0.0
    %1206 = vmatprep.subr.mxu0 0.0
    %1207 = vmatpush2.msra.mxu0 0.0
    %1208 = vmatprep.subr.mxu0 0.0
    %1209 = vmatpush2.msra.mxu0 0.0
    %1210 = vmatprep.subr.mxu0 0.0
    %1211 = vmatpush2.msra.mxu0 0.0
    %1212 = vmatprep.subr.mxu0 0.0
    %1213 = vmatpush2.msra.mxu0 0.0
    %1214 = vmatprep.subr.mxu0 0.0
    %1215 = vmatpush2.msra.mxu0 0.0
    %1216 = vmatprep.subr.mxu0 0.0
    %1217 = vmatpush2.msra.mxu0 0.0
    %1218 = vmatprep.subr.mxu0 0.0
    %1219 = vmatpush2.msra.mxu0 0.0
    %1220 = vmatprep.subr.mxu0 0.0
    %1221 = vmatpush2.msra.mxu0 0.0
    %1222 = vmatprep.subr.mxu0 0.0
    %1223 = vmatpush2.msra.mxu0 0.0
    %1224 = vmatprep.subr.mxu0 0.0
    %1225 = vmatpush2.msra.mxu0 0.0
    %1226 = vmatprep.subr.mxu0 0.0
    %1227 = vmatpush2.msra.mxu0 0.0
    %1228 = vmatprep.mubr.f32.mxu0 0.0
    %1229 = vmatmul.mubr.f32.gmra.mxu0 %v508
    %v1230 = vpop.f32.mrf.mxu0
    %v1231 = vadd.f32 %v797, %v1230
    %v1232 = vpop.f32.mrf.mxu0
    %1233 = vdwg.mxu0
    %1234 = vmatprep.subr.mxu0 0.0
    %1235 = vmatpush1.msra.mxu0 0.0
    %1236 = vmatprep.subr.mxu0 0.0
    %1237 = vmatpush1.msra.mxu0 0.0
    %1238 = vmatprep.subr.mxu0 0.0
    %1239 = vmatpush1.msra.mxu0 0.0
    %1240 = vmatprep.subr.mxu0 0.0
    %1241 = vmatpush1.msra.mxu0 0.0
    %1242 = vmatprep.subr.mxu0 0.0
    %1243 = vmatpush1.msra.mxu0 0.0
    %1244 = vmatprep.subr.mxu0 0.0
    %1245 = vmatpush1.msra.mxu0 0.0
    %1246 = vmatprep.subr.mxu0 0.0
    %1247 = vmatpush1.msra.mxu0 0.0
    %1248 = vmatprep.subr.mxu0 0.0
    %1249 = vmatpush1.msra.mxu0 0.0
    %1250 = vmatprep.subr.mxu0 0.0
    %1251 = vmatpush1.msra.mxu0 0.0
    %1252 = vmatprep.subr.mxu0 0.0
    %1253 = vmatpush1.msra.mxu0 0.0
    %1254 = vmatprep.subr.mxu0 0.0
    %1255 = vmatpush1.msra.mxu0 0.0
    %1256 = vmatprep.subr.mxu0 0.0
    %1257 = vmatpush1.msra.mxu0 0.0
    %1258 = vmatprep.subr.mxu0 0.0
    %1259 = vmatpush1.msra.mxu0 %v753
    %1260 = vmatprep.subr.mxu0 0.0
    %1261 = vmatpush1.msra.mxu0 %v752
    %1262 = vmatprep.subr.mxu0 0.0
    %1263 = vmatpush1.msra.mxu0 %v751
    %1264 = vmatprep.subr.mxu0 0.0
    %1265 = vmatpush1.msra.mxu0 %v750
    %1266 = vmatprep.subr.mxu0 0.0
    %1267 = vmatpush2.msra.mxu0 0.0
    %1268 = vmatprep.subr.mxu0 0.0
    %1269 = vmatpush2.msra.mxu0 0.0
    %1270 = vmatprep.subr.mxu0 0.0
    %1271 = vmatpush2.msra.mxu0 0.0
    %1272 = vmatprep.subr.mxu0 0.0
    %1273 = vmatpush2.msra.mxu0 0.0
    %1274 = vmatprep.subr.mxu0 0.0
    %1275 = vmatpush2.msra.mxu0 0.0
    %1276 = vmatprep.subr.mxu0 0.0
    %1277 = vmatpush2.msra.mxu0 0.0
    %1278 = vmatprep.subr.mxu0 0.0
    %1279 = vmatpush2.msra.mxu0 0.0
    %1280 = vmatprep.subr.mxu0 0.0
    %1281 = vmatpush2.msra.mxu0 0.0
    %1282 = vmatprep.subr.mxu0 0.0
    %1283 = vmatpush2.msra.mxu0 0.0
    %1284 = vmatprep.subr.mxu0 0.0
    %1285 = vmatpush2.msra.mxu0 0.0
    %1286 = vmatprep.subr.mxu0 0.0
    %1287 = vmatpush2.msra.mxu0 0.0
    %1288 = vmatprep.subr.mxu0 0.0
    %1289 = vmatpush2.msra.mxu0 0.0
    %1290 = vmatprep.subr.mxu0 0.0
    %1291 = vmatpush2.msra.mxu0 0.0
    %1292 = vmatprep.subr.mxu0 0.0
    %1293 = vmatpush2.msra.mxu0 0.0
    %1294 = vmatprep.subr.mxu0 0.0
    %1295 = vmatpush2.msra.mxu0 0.0
    %1296 = vmatprep.subr.mxu0 0.0
    %1297 = vmatpush2.msra.mxu0 0.0
    %1298 = vmatprep.mubr.f32.mxu0 0.0
    %1299 = vmatmul.mubr.f32.gmra.mxu0 %v581
    %v1300 = vpop.f32.mrf.mxu0
    %v1301 = vadd.f32 %v801, %v1300
    %v1302 = vpop.f32.mrf.mxu0
    %1303 = vdwg.mxu0
    %1304 = vmatprep.subr.mxu0 0.0
    %1305 = vmatpush1.msra.mxu0 0.0
    %1306 = vmatprep.subr.mxu0 0.0
    %1307 = vmatpush1.msra.mxu0 0.0
    %1308 = vmatprep.subr.mxu0 0.0
    %1309 = vmatpush1.msra.mxu0 0.0
    %1310 = vmatprep.subr.mxu0 0.0
    %1311 = vmatpush1.msra.mxu0 0.0
    %1312 = vmatprep.subr.mxu0 0.0
    %1313 = vmatpush1.msra.mxu0 0.0
    %1314 = vmatprep.subr.mxu0 0.0
    %1315 = vmatpush1.msra.mxu0 0.0
    %1316 = vmatprep.subr.mxu0 0.0
    %1317 = vmatpush1.msra.mxu0 0.0
    %1318 = vmatprep.subr.mxu0 0.0
    %1319 = vmatpush1.msra.mxu0 0.0
    %1320 = vmatprep.subr.mxu0 0.0
    %1321 = vmatpush1.msra.mxu0 0.0
    %1322 = vmatprep.subr.mxu0 0.0
    %1323 = vmatpush1.msra.mxu0 0.0
    %1324 = vmatprep.subr.mxu0 0.0
    %1325 = vmatpush1.msra.mxu0 0.0
    %1326 = vmatprep.subr.mxu0 0.0
    %1327 = vmatpush1.msra.mxu0 0.0
    %1328 = vmatprep.subr.mxu0 0.0
    %1329 = vmatpush1.msra.mxu0 %v757
    %1330 = vmatprep.subr.mxu0 0.0
    %1331 = vmatpush1.msra.mxu0 %v756
    %1332 = vmatprep.subr.mxu0 0.0
    %1333 = vmatpush1.msra.mxu0 %v755
    %1334 = vmatprep.subr.mxu0 0.0
    %1335 = vmatpush1.msra.mxu0 %v754
    %1336 = vmatprep.subr.mxu0 0.0
    %1337 = vmatpush2.msra.mxu0 0.0
    %1338 = vmatprep.subr.mxu0 0.0
    %1339 = vmatpush2.msra.mxu0 0.0
    %1340 = vmatprep.subr.mxu0 0.0
    %1341 = vmatpush2.msra.mxu0 0.0
    %1342 = vmatprep.subr.mxu0 0.0
    %1343 = vmatpush2.msra.mxu0 0.0
    %1344 = vmatprep.subr.mxu0 0.0
    %1345 = vmatpush2.msra.mxu0 0.0
    %1346 = vmatprep.subr.mxu0 0.0
    %1347 = vmatpush2.msra.mxu0 0.0
    %1348 = vmatprep.subr.mxu0 0.0
    %1349 = vmatpush2.msra.mxu0 0.0
    %1350 = vmatprep.subr.mxu0 0.0
    %1351 = vmatpush2.msra.mxu0 0.0
    %1352 = vmatprep.subr.mxu0 0.0
    %1353 = vmatpush2.msra.mxu0 0.0
    %1354 = vmatprep.subr.mxu0 0.0
    %1355 = vmatpush2.msra.mxu0 0.0
    %1356 = vmatprep.subr.mxu0 0.0
    %1357 = vmatpush2.msra.mxu0 0.0
    %1358 = vmatprep.subr.mxu0 0.0
    %1359 = vmatpush2.msra.mxu0 0.0
    %1360 = vmatprep.subr.mxu0 0.0
    %1361 = vmatpush2.msra.mxu0 0.0
    %1362 = vmatprep.subr.mxu0 0.0
    %1363 = vmatpush2.msra.mxu0 0.0
    %1364 = vmatprep.subr.mxu0 0.0
    %1365 = vmatpush2.msra.mxu0 0.0
    %1366 = vmatprep.subr.mxu0 0.0
    %1367 = vmatpush2.msra.mxu0 0.0
    %1368 = vmatprep.mubr.f32.mxu0 0.0
    %1369 = vmatmul.mubr.f32.gmra.mxu0 %v654
    %v1370 = vpop.f32.mrf.mxu0
    %v1371 = vadd.f32 %v805, %v1370
    %v1372 = vpop.f32.mrf.mxu0
    %1373 = vdwg.mxu0
    %v1374 = vld [vmem:[%s5] sm:$0xff]
    %v1375 = vld [vmem:[%s5 + $0x8] sm:$0xff]
    %v1376 = vld [vmem:[%s5 + $0x10] sm:$0xff]
    %v1377 = vld [vmem:[%s5 + $0x18] sm:$0xff]
    %v1378 = vld [vmem:[%s5 + $0x20] sm:$0xff]
    %v1379 = vld [vmem:[%s5 + $0x28] sm:$0xff]
    %v1380 = vld [vmem:[%s5 + $0x30] sm:$0xff]
    %v1381 = vld [vmem:[%s5 + $0x38] sm:$0xff]
    %v1382 = vld [vmem:[%s5 + $0x40] sm:$0xff]
    %v1383 = vld [vmem:[%s5 + $0x48] sm:$0xff]
    %v1384 = vld [vmem:[%s5 + $0x50] sm:$0xff]
    %v1385 = vld [vmem:[%s5 + $0x58] sm:$0xff]
    %v1386 = vld [vmem:[%s5 + $0x60] sm:$0xff]
    %v1387 = vld [vmem:[%s5 + $0x68] sm:$0xff]
    %v1388 = vld [vmem:[%s5 + $0x70] sm:$0xff]
    %v1389 = vld [vmem:[%s5 + $0x78] sm:$0xff]
    %v1390 = vld [vmem:[%s5 + $0x80] sm:$0xff]
    %v1391 = vld [vmem:[%s5 + $0x88] sm:$0xff]
    %v1392 = vld [vmem:[%s5 + $0x90] sm:$0xff]
    %v1393 = vld [vmem:[%s5 + $0x98] sm:$0xff]
    %v1394 = vld [vmem:[%s5 + $0xa0] sm:$0xff]
    %v1395 = vld [vmem:[%s5 + $0xa8] sm:$0xff]
    %v1396 = vld [vmem:[%s5 + $0xb0] sm:$0xff]
    %v1397 = vld [vmem:[%s5 + $0xb8] sm:$0xff]
    %v1398 = vld [vmem:[%s5 + $0xc0] sm:$0xff]
    %v1399 = vld [vmem:[%s5 + $0xc8] sm:$0xff]
    %v1400 = vld [vmem:[%s5 + $0xd0] sm:$0xff]
    %v1401 = vld [vmem:[%s5 + $0xd8] sm:$0xff]
    %v1402 = vld [vmem:[%s5 + $0xe0] sm:$0xff]
    %v1403 = vld [vmem:[%s5 + $0xe8] sm:$0xff]
    %v1404 = vld [vmem:[%s5 + $0xf0] sm:$0xff]
    %v1405 = vld [vmem:[%s5 + $0xf8] sm:$0xff]
    %v1406 = vld [vmem:[%s6] sm:$0x1]
    %v1407 = vld [vmem:[%s6 + $0x1] sm:$0x1]
    %v1408 = vld [vmem:[%s6 + $0x2] sm:$0x1]
    %v1409 = vld [vmem:[%s6 + $0x3] sm:$0x1]
    %v1410 = vld [vmem:[%s6 + $0x4] sm:$0x1]
    %v1411 = vld [vmem:[%s6 + $0x5] sm:$0x1]
    %v1412 = vld [vmem:[%s6 + $0x6] sm:$0x1]
    %v1413 = vld [vmem:[%s6 + $0x7] sm:$0x1]
    %v1422 = vlaneseq
    %v1423 = vshrl.u32 %v1422, 7
    %v1424 = vsub.s32 0, %v1423
    %v1425 = vrot.slane %v1406, %v1424
    %v1426 = vlaneseq
    %v1427 = vshrl.u32 %v1426, 7
    %v1428 = vsub.s32 0, %v1427
    %v1429 = vrot.slane %v1407, %v1428
    %v1430 = vlaneseq
    %v1431 = vshrl.u32 %v1430, 7
    %v1432 = vsub.s32 0, %v1431
    %v1433 = vrot.slane %v1408, %v1432
    %v1434 = vlaneseq
    %v1435 = vshrl.u32 %v1434, 7
    %v1436 = vsub.s32 0, %v1435
    %v1437 = vrot.slane %v1409, %v1436
    %v1438 = vlaneseq
    %v1439 = vshrl.u32 %v1438, 7
    %v1440 = vsub.s32 0, %v1439
    %v1441 = vrot.slane %v1410, %v1440
    %v1442 = vlaneseq
    %v1443 = vshrl.u32 %v1442, 7
    %v1444 = vsub.s32 0, %v1443
    %v1445 = vrot.slane %v1411, %v1444
    %v1446 = vlaneseq
    %v1447 = vshrl.u32 %v1446, 7
    %v1448 = vsub.s32 0, %v1447
    %v1449 = vrot.slane %v1412, %v1448
    %v1450 = vlaneseq
    %v1451 = vshrl.u32 %v1450, 7
    %v1452 = vsub.s32 0, %v1451
    %v1453 = vrot.slane %v1413, %v1452
    %1462 = vmatprep.subr.mxu0 0.0
    %1463 = vmatpush1.msra.mxu0 0.0
    %1464 = vmatprep.subr.mxu0 0.0
    %1465 = vmatpush1.msra.mxu0 0.0
    %1466 = vmatprep.subr.mxu0 0.0
    %1467 = vmatpush1.msra.mxu0 0.0
    %1468 = vmatprep.subr.mxu0 0.0
    %1469 = vmatpush1.msra.mxu0 0.0
    %1470 = vmatprep.subr.mxu0 0.0
    %1471 = vmatpush1.msra.mxu0 0.0
    %1472 = vmatprep.subr.mxu0 0.0
    %1473 = vmatpush1.msra.mxu0 0.0
    %1474 = vmatprep.subr.mxu0 0.0
    %1475 = vmatpush1.msra.mxu0 0.0
    %1476 = vmatprep.subr.mxu0 0.0
    %1477 = vmatpush1.msra.mxu0 0.0
    %1478 = vmatprep.subr.mxu0 0.0
    %1479 = vmatpush1.msra.mxu0 0.0
    %1480 = vmatprep.subr.mxu0 0.0
    %1481 = vmatpush1.msra.mxu0 0.0
    %1482 = vmatprep.subr.mxu0 0.0
    %1483 = vmatpush1.msra.mxu0 0.0
    %1484 = vmatprep.subr.mxu0 0.0
    %1485 = vmatpush1.msra.mxu0 0.0
    %1486 = vmatprep.subr.mxu0 0.0
    %1487 = vmatpush1.msra.mxu0 %v1377
    %1488 = vmatprep.subr.mxu0 0.0
    %1489 = vmatpush1.msra.mxu0 %v1376
    %1490 = vmatprep.subr.mxu0 0.0
    %1491 = vmatpush1.msra.mxu0 %v1375
    %1492 = vmatprep.subr.mxu0 0.0
    %1493 = vmatpush1.msra.mxu0 %v1374
    %1494 = vmatprep.subr.mxu0 0.0
    %1495 = vmatpush2.msra.mxu0 0.0
    %1496 = vmatprep.subr.mxu0 0.0
    %1497 = vmatpush2.msra.mxu0 0.0
    %1498 = vmatprep.subr.mxu0 0.0
    %1499 = vmatpush2.msra.mxu0 0.0
    %1500 = vmatprep.subr.mxu0 0.0
    %1501 = vmatpush2.msra.mxu0 0.0
    %1502 = vmatprep.subr.mxu0 0.0
    %1503 = vmatpush2.msra.mxu0 0.0
    %1504 = vmatprep.subr.mxu0 0.0
    %1505 = vmatpush2.msra.mxu0 0.0
    %1506 = vmatprep.subr.mxu0 0.0
    %1507 = vmatpush2.msra.mxu0 0.0
    %1508 = vmatprep.subr.mxu0 0.0
    %1509 = vmatpush2.msra.mxu0 0.0
    %1510 = vmatprep.subr.mxu0 0.0
    %1511 = vmatpush2.msra.mxu0 0.0
    %1512 = vmatprep.subr.mxu0 0.0
    %1513 = vmatpush2.msra.mxu0 0.0
    %1514 = vmatprep.subr.mxu0 0.0
    %1515 = vmatpush2.msra.mxu0 0.0
    %1516 = vmatprep.subr.mxu0 0.0
    %1517 = vmatpush2.msra.mxu0 0.0
    %1518 = vmatprep.subr.mxu0 0.0
    %1519 = vmatpush2.msra.mxu0 0.0
    %1520 = vmatprep.subr.mxu0 0.0
    %1521 = vmatpush2.msra.mxu0 0.0
    %1522 = vmatprep.subr.mxu0 0.0
    %1523 = vmatpush2.msra.mxu0 0.0
    %1524 = vmatprep.subr.mxu0 0.0
    %1525 = vmatpush2.msra.mxu0 0.0
    %1526 = vmatprep.mubr.f32.mxu0 0.0
    %1527 = vmatmul.mubr.f32.gmra.mxu0 %v143
    %v1528 = vpop.f32.mrf.mxu0
    %v1529 = vadd.f32 %v1425, %v1528
    %v1530 = vpop.f32.mrf.mxu0
    %1531 = vdwg.mxu0
    %1532 = vmatprep.subr.mxu0 0.0
    %1533 = vmatpush1.msra.mxu0 0.0
    %1534 = vmatprep.subr.mxu0 0.0
    %1535 = vmatpush1.msra.mxu0 0.0
    %1536 = vmatprep.subr.mxu0 0.0
    %1537 = vmatpush1.msra.mxu0 0.0
    %1538 = vmatprep.subr.mxu0 0.0
    %1539 = vmatpush1.msra.mxu0 0.0
    %1540 = vmatprep.subr.mxu0 0.0
    %1541 = vmatpush1.msra.mxu0 0.0
    %1542 = vmatprep.subr.mxu0 0.0
    %1543 = vmatpush1.msra.mxu0 0.0
    %1544 = vmatprep.subr.mxu0 0.0
    %1545 = vmatpush1.msra.mxu0 0.0
    %1546 = vmatprep.subr.mxu0 0.0
    %1547 = vmatpush1.msra.mxu0 0.0
    %1548 = vmatprep.subr.mxu0 0.0
    %1549 = vmatpush1.msra.mxu0 0.0
    %1550 = vmatprep.subr.mxu0 0.0
    %1551 = vmatpush1.msra.mxu0 0.0
    %1552 = vmatprep.subr.mxu0 0.0
    %1553 = vmatpush1.msra.mxu0 0.0
    %1554 = vmatprep.subr.mxu0 0.0
    %1555 = vmatpush1.msra.mxu0 0.0
    %1556 = vmatprep.subr.mxu0 0.0
    %1557 = vmatpush1.msra.mxu0 %v1381
    %1558 = vmatprep.subr.mxu0 0.0
    %1559 = vmatpush1.msra.mxu0 %v1380
    %1560 = vmatprep.subr.mxu0 0.0
    %1561 = vmatpush1.msra.mxu0 %v1379
    %1562 = vmatprep.subr.mxu0 0.0
    %1563 = vmatpush1.msra.mxu0 %v1378
    %1564 = vmatprep.subr.mxu0 0.0
    %1565 = vmatpush2.msra.mxu0 0.0
    %1566 = vmatprep.subr.mxu0 0.0
    %1567 = vmatpush2.msra.mxu0 0.0
    %1568 = vmatprep.subr.mxu0 0.0
    %1569 = vmatpush2.msra.mxu0 0.0
    %1570 = vmatprep.subr.mxu0 0.0
    %1571 = vmatpush2.msra.mxu0 0.0
    %1572 = vmatprep.subr.mxu0 0.0
    %1573 = vmatpush2.msra.mxu0 0.0
    %1574 = vmatprep.subr.mxu0 0.0
    %1575 = vmatpush2.msra.mxu0 0.0
    %1576 = vmatprep.subr.mxu0 0.0
    %1577 = vmatpush2.msra.mxu0 0.0
    %1578 = vmatprep.subr.mxu0 0.0
    %1579 = vmatpush2.msra.mxu0 0.0
    %1580 = vmatprep.subr.mxu0 0.0
    %1581 = vmatpush2.msra.mxu0 0.0
    %1582 = vmatprep.subr.mxu0 0.0
    %1583 = vmatpush2.msra.mxu0 0.0
    %1584 = vmatprep.subr.mxu0 0.0
    %1585 = vmatpush2.msra.mxu0 0.0
    %1586 = vmatprep.subr.mxu0 0.0
    %1587 = vmatpush2.msra.mxu0 0.0
    %1588 = vmatprep.subr.mxu0 0.0
    %1589 = vmatpush2.msra.mxu0 0.0
    %1590 = vmatprep.subr.mxu0 0.0
    %1591 = vmatpush2.msra.mxu0 0.0
    %1592 = vmatprep.subr.mxu0 0.0
    %1593 = vmatpush2.msra.mxu0 0.0
    %1594 = vmatprep.subr.mxu0 0.0
    %1595 = vmatpush2.msra.mxu0 0.0
    %1596 = vmatprep.mubr.f32.mxu0 0.0
    %1597 = vmatmul.mubr.f32.gmra.mxu0 %v216
    %v1598 = vpop.f32.mrf.mxu0
    %v1599 = vadd.f32 %v1429, %v1598
    %v1600 = vpop.f32.mrf.mxu0
    %1601 = vdwg.mxu0
    %1602 = vmatprep.subr.mxu0 0.0
    %1603 = vmatpush1.msra.mxu0 0.0
    %1604 = vmatprep.subr.mxu0 0.0
    %1605 = vmatpush1.msra.mxu0 0.0
    %1606 = vmatprep.subr.mxu0 0.0
    %1607 = vmatpush1.msra.mxu0 0.0
    %1608 = vmatprep.subr.mxu0 0.0
    %1609 = vmatpush1.msra.mxu0 0.0
    %1610 = vmatprep.subr.mxu0 0.0
    %1611 = vmatpush1.msra.mxu0 0.0
    %1612 = vmatprep.subr.mxu0 0.0
    %1613 = vmatpush1.msra.mxu0 0.0
    %1614 = vmatprep.subr.mxu0 0.0
    %1615 = vmatpush1.msra.mxu0 0.0
    %1616 = vmatprep.subr.mxu0 0.0
    %1617 = vmatpush1.msra.mxu0 0.0
    %1618 = vmatprep.subr.mxu0 0.0
    %1619 = vmatpush1.msra.mxu0 0.0
    %1620 = vmatprep.subr.mxu0 0.0
    %1621 = vmatpush1.msra.mxu0 0.0
    %1622 = vmatprep.subr.mxu0 0.0
    %1623 = vmatpush1.msra.mxu0 0.0
    %1624 = vmatprep.subr.mxu0 0.0
    %1625 = vmatpush1.msra.mxu0 0.0
    %1626 = vmatprep.subr.mxu0 0.0
    %1627 = vmatpush1.msra.mxu0 %v1385
    %1628 = vmatprep.subr.mxu0 0.0
    %1629 = vmatpush1.msra.mxu0 %v1384
    %1630 = vmatprep.subr.mxu0 0.0
    %1631 = vmatpush1.msra.mxu0 %v1383
    %1632 = vmatprep.subr.mxu0 0.0
    %1633 = vmatpush1.msra.mxu0 %v1382
    %1634 = vmatprep.subr.mxu0 0.0
    %1635 = vmatpush2.msra.mxu0 0.0
    %1636 = vmatprep.subr.mxu0 0.0
    %1637 = vmatpush2.msra.mxu0 0.0
    %1638 = vmatprep.subr.mxu0 0.0
    %1639 = vmatpush2.msra.mxu0 0.0
    %1640 = vmatprep.subr.mxu0 0.0
    %1641 = vmatpush2.msra.mxu0 0.0
    %1642 = vmatprep.subr.mxu0 0.0
    %1643 = vmatpush2.msra.mxu0 0.0
    %1644 = vmatprep.subr.mxu0 0.0
    %1645 = vmatpush2.msra.mxu0 0.0
    %1646 = vmatprep.subr.mxu0 0.0
    %1647 = vmatpush2.msra.mxu0 0.0
    %1648 = vmatprep.subr.mxu0 0.0
    %1649 = vmatpush2.msra.mxu0 0.0
    %1650 = vmatprep.subr.mxu0 0.0
    %1651 = vmatpush2.msra.mxu0 0.0
    %1652 = vmatprep.subr.mxu0 0.0
    %1653 = vmatpush2.msra.mxu0 0.0
    %1654 = vmatprep.subr.mxu0 0.0
    %1655 = vmatpush2.msra.mxu0 0.0
    %1656 = vmatprep.subr.mxu0 0.0
    %1657 = vmatpush2.msra.mxu0 0.0
    %1658 = vmatprep.subr.mxu0 0.0
    %1659 = vmatpush2.msra.mxu0 0.0
    %1660 = vmatprep.subr.mxu0 0.0
    %1661 = vmatpush2.msra.mxu0 0.0
    %1662 = vmatprep.subr.mxu0 0.0
    %1663 = vmatpush2.msra.mxu0 0.0
    %1664 = vmatprep.subr.mxu0 0.0
    %1665 = vmatpush2.msra.mxu0 0.0
    %1666 = vmatprep.mubr.f32.mxu0 0.0
    %1667 = vmatmul.mubr.f32.gmra.mxu0 %v289
    %v1668 = vpop.f32.mrf.mxu0
    %v1669 = vadd.f32 %v1433, %v1668
    %v1670 = vpop.f32.mrf.mxu0
    %1671 = vdwg.mxu0
    %1672 = vmatprep.subr.mxu0 0.0
    %1673 = vmatpush1.msra.mxu0 0.0
    %1674 = vmatprep.subr.mxu0 0.0
    %1675 = vmatpush1.msra.mxu0 0.0
    %1676 = vmatprep.subr.mxu0 0.0
    %1677 = vmatpush1.msra.mxu0 0.0
    %1678 = vmatprep.subr.mxu0 0.0
    %1679 = vmatpush1.msra.mxu0 0.0
    %1680 = vmatprep.subr.mxu0 0.0
    %1681 = vmatpush1.msra.mxu0 0.0
    %1682 = vmatprep.subr.mxu0 0.0
    %1683 = vmatpush1.msra.mxu0 0.0
    %1684 = vmatprep.subr.mxu0 0.0
    %1685 = vmatpush1.msra.mxu0 0.0
    %1686 = vmatprep.subr.mxu0 0.0
    %1687 = vmatpush1.msra.mxu0 0.0
    %1688 = vmatprep.subr.mxu0 0.0
    %1689 = vmatpush1.msra.mxu0 0.0
    %1690 = vmatprep.subr.mxu0 0.0
    %1691 = vmatpush1.msra.mxu0 0.0
    %1692 = vmatprep.subr.mxu0 0.0
    %1693 = vmatpush1.msra.mxu0 0.0
    %1694 = vmatprep.subr.mxu0 0.0
    %1695 = vmatpush1.msra.mxu0 0.0
    %1696 = vmatprep.subr.mxu0 0.0
    %1697 = vmatpush1.msra.mxu0 %v1389
    %1698 = vmatprep.subr.mxu0 0.0
    %1699 = vmatpush1.msra.mxu0 %v1388
    %1700 = vmatprep.subr.mxu0 0.0
    %1701 = vmatpush1.msra.mxu0 %v1387
    %1702 = vmatprep.subr.mxu0 0.0
    %1703 = vmatpush1.msra.mxu0 %v1386
    %1704 = vmatprep.subr.mxu0 0.0
    %1705 = vmatpush2.msra.mxu0 0.0
    %1706 = vmatprep.subr.mxu0 0.0
    %1707 = vmatpush2.msra.mxu0 0.0
    %1708 = vmatprep.subr.mxu0 0.0
    %1709 = vmatpush2.msra.mxu0 0.0
    %1710 = vmatprep.subr.mxu0 0.0
    %1711 = vmatpush2.msra.mxu0 0.0
    %1712 = vmatprep.subr.mxu0 0.0
    %1713 = vmatpush2.msra.mxu0 0.0
    %1714 = vmatprep.subr.mxu0 0.0
    %1715 = vmatpush2.msra.mxu0 0.0
    %1716 = vmatprep.subr.mxu0 0.0
    %1717 = vmatpush2.msra.mxu0 0.0
    %1718 = vmatprep.subr.mxu0 0.0
    %1719 = vmatpush2.msra.mxu0 0.0
    %1720 = vmatprep.subr.mxu0 0.0
    %1721 = vmatpush2.msra.mxu0 0.0
    %1722 = vmatprep.subr.mxu0 0.0
    %1723 = vmatpush2.msra.mxu0 0.0
    %1724 = vmatprep.subr.mxu0 0.0
    %1725 = vmatpush2.msra.mxu0 0.0
    %1726 = vmatprep.subr.mxu0 0.0
    %1727 = vmatpush2.msra.mxu0 0.0
    %1728 = vmatprep.subr.mxu0 0.0
    %1729 = vmatpush2.msra.mxu0 0.0
    %1730 = vmatprep.subr.mxu0 0.0
    %1731 = vmatpush2.msra.mxu0 0.0
    %1732 = vmatprep.subr.mxu0 0.0
    %1733 = vmatpush2.msra.mxu0 0.0
    %1734 = vmatprep.subr.mxu0 0.0
    %1735 = vmatpush2.msra.mxu0 0.0
    %1736 = vmatprep.mubr.f32.mxu0 0.0
    %1737 = vmatmul.mubr.f32.gmra.mxu0 %v362
    %v1738 = vpop.f32.mrf.mxu0
    %v1739 = vadd.f32 %v1437, %v1738
    %v1740 = vpop.f32.mrf.mxu0
    %1741 = vdwg.mxu0
    %1742 = vmatprep.subr.mxu0 0.0
    %1743 = vmatpush1.msra.mxu0 0.0
    %1744 = vmatprep.subr.mxu0 0.0
    %1745 = vmatpush1.msra.mxu0 0.0
    %1746 = vmatprep.subr.mxu0 0.0
    %1747 = vmatpush1.msra.mxu0 0.0
    %1748 = vmatprep.subr.mxu0 0.0
    %1749 = vmatpush1.msra.mxu0 0.0
    %1750 = vmatprep.subr.mxu0 0.0
    %1751 = vmatpush1.msra.mxu0 0.0
    %1752 = vmatprep.subr.mxu0 0.0
    %1753 = vmatpush1.msra.mxu0 0.0
    %1754 = vmatprep.subr.mxu0 0.0
    %1755 = vmatpush1.msra.mxu0 0.0
    %1756 = vmatprep.subr.mxu0 0.0
    %1757 = vmatpush1.msra.mxu0 0.0
    %1758 = vmatprep.subr.mxu0 0.0
    %1759 = vmatpush1.msra.mxu0 0.0
    %1760 = vmatprep.subr.mxu0 0.0
    %1761 = vmatpush1.msra.mxu0 0.0
    %1762 = vmatprep.subr.mxu0 0.0
    %1763 = vmatpush1.msra.mxu0 0.0
    %1764 = vmatprep.subr.mxu0 0.0
    %1765 = vmatpush1.msra.mxu0 0.0
    %1766 = vmatprep.subr.mxu0 0.0
    %1767 = vmatpush1.msra.mxu0 %v1393
    %1768 = vmatprep.subr.mxu0 0.0
    %1769 = vmatpush1.msra.mxu0 %v1392
    %1770 = vmatprep.subr.mxu0 0.0
    %1771 = vmatpush1.msra.mxu0 %v1391
    %1772 = vmatprep.subr.mxu0 0.0
    %1773 = vmatpush1.msra.mxu0 %v1390
    %1774 = vmatprep.subr.mxu0 0.0
    %1775 = vmatpush2.msra.mxu0 0.0
    %1776 = vmatprep.subr.mxu0 0.0
    %1777 = vmatpush2.msra.mxu0 0.0
    %1778 = vmatprep.subr.mxu0 0.0
    %1779 = vmatpush2.msra.mxu0 0.0
    %1780 = vmatprep.subr.mxu0 0.0
    %1781 = vmatpush2.msra.mxu0 0.0
    %1782 = vmatprep.subr.mxu0 0.0
    %1783 = vmatpush2.msra.mxu0 0.0
    %1784 = vmatprep.subr.mxu0 0.0
    %1785 = vmatpush2.msra.mxu0 0.0
    %1786 = vmatprep.subr.mxu0 0.0
    %1787 = vmatpush2.msra.mxu0 0.0
    %1788 = vmatprep.subr.mxu0 0.0
    %1789 = vmatpush2.msra.mxu0 0.0
    %1790 = vmatprep.subr.mxu0 0.0
    %1791 = vmatpush2.msra.mxu0 0.0
    %1792 = vmatprep.subr.mxu0 0.0
    %1793 = vmatpush2.msra.mxu0 0.0
    %1794 = vmatprep.subr.mxu0 0.0
    %1795 = vmatpush2.msra.mxu0 0.0
    %1796 = vmatprep.subr.mxu0 0.0
    %1797 = vmatpush2.msra.mxu0 0.0
    %1798 = vmatprep.subr.mxu0 0.0
    %1799 = vmatpush2.msra.mxu0 0.0
    %1800 = vmatprep.subr.mxu0 0.0
    %1801 = vmatpush2.msra.mxu0 0.0
    %1802 = vmatprep.subr.mxu0 0.0
    %1803 = vmatpush2.msra.mxu0 0.0
    %1804 = vmatprep.subr.mxu0 0.0
    %1805 = vmatpush2.msra.mxu0 0.0
    %1806 = vmatprep.mubr.f32.mxu0 0.0
    %1807 = vmatmul.mubr.f32.gmra.mxu0 %v435
    %v1808 = vpop.f32.mrf.mxu0
    %v1809 = vadd.f32 %v1441, %v1808
    %v1810 = vpop.f32.mrf.mxu0
    %1811 = vdwg.mxu0
    %1812 = vmatprep.subr.mxu0 0.0
    %1813 = vmatpush1.msra.mxu0 0.0
    %1814 = vmatprep.subr.mxu0 0.0
    %1815 = vmatpush1.msra.mxu0 0.0
    %1816 = vmatprep.subr.mxu0 0.0
    %1817 = vmatpush1.msra.mxu0 0.0
    %1818 = vmatprep.subr.mxu0 0.0
    %1819 = vmatpush1.msra.mxu0 0.0
    %1820 = vmatprep.subr.mxu0 0.0
    %1821 = vmatpush1.msra.mxu0 0.0
    %1822 = vmatprep.subr.mxu0 0.0
    %1823 = vmatpush1.msra.mxu0 0.0
    %1824 = vmatprep.subr.mxu0 0.0
    %1825 = vmatpush1.msra.mxu0 0.0
    %1826 = vmatprep.subr.mxu0 0.0
    %1827 = vmatpush1.msra.mxu0 0.0
    %1828 = vmatprep.subr.mxu0 0.0
    %1829 = vmatpush1.msra.mxu0 0.0
    %1830 = vmatprep.subr.mxu0 0.0
    %1831 = vmatpush1.msra.mxu0 0.0
    %1832 = vmatprep.subr.mxu0 0.0
    %1833 = vmatpush1.msra.mxu0 0.0
    %1834 = vmatprep.subr.mxu0 0.0
    %1835 = vmatpush1.msra.mxu0 0.0
    %1836 = vmatprep.subr.mxu0 0.0
    %1837 = vmatpush1.msra.mxu0 %v1397
    %1838 = vmatprep.subr.mxu0 0.0
    %1839 = vmatpush1.msra.mxu0 %v1396
    %1840 = vmatprep.subr.mxu0 0.0
    %1841 = vmatpush1.msra.mxu0 %v1395
    %1842 = vmatprep.subr.mxu0 0.0
    %1843 = vmatpush1.msra.mxu0 %v1394
    %1844 = vmatprep.subr.mxu0 0.0
    %1845 = vmatpush2.msra.mxu0 0.0
    %1846 = vmatprep.subr.mxu0 0.0
    %1847 = vmatpush2.msra.mxu0 0.0
    %1848 = vmatprep.subr.mxu0 0.0
    %1849 = vmatpush2.msra.mxu0 0.0
    %1850 = vmatprep.subr.mxu0 0.0
    %1851 = vmatpush2.msra.mxu0 0.0
    %1852 = vmatprep.subr.mxu0 0.0
    %1853 = vmatpush2.msra.mxu0 0.0
    %1854 = vmatprep.subr.mxu0 0.0
    %1855 = vmatpush2.msra.mxu0 0.0
    %1856 = vmatprep.subr.mxu0 0.0
    %1857 = vmatpush2.msra.mxu0 0.0
    %1858 = vmatprep.subr.mxu0 0.0
    %1859 = vmatpush2.msra.mxu0 0.0
    %1860 = vmatprep.subr.mxu0 0.0
    %1861 = vmatpush2.msra.mxu0 0.0
    %1862 = vmatprep.subr.mxu0 0.0
    %1863 = vmatpush2.msra.mxu0 0.0
    %1864 = vmatprep.subr.mxu0 0.0
    %1865 = vmatpush2.msra.mxu0 0.0
    %1866 = vmatprep.subr.mxu0 0.0
    %1867 = vmatpush2.msra.mxu0 0.0
    %1868 = vmatprep.subr.mxu0 0.0
    %1869 = vmatpush2.msra.mxu0 0.0
    %1870 = vmatprep.subr.mxu0 0.0
    %1871 = vmatpush2.msra.mxu0 0.0
    %1872 = vmatprep.subr.mxu0 0.0
    %1873 = vmatpush2.msra.mxu0 0.0
    %1874 = vmatprep.subr.mxu0 0.0
    %1875 = vmatpush2.msra.mxu0 0.0
    %1876 = vmatprep.mubr.f32.mxu0 0.0
    %1877 = vmatmul.mubr.f32.gmra.mxu0 %v508
    %v1878 = vpop.f32.mrf.mxu0
    %v1879 = vadd.f32 %v1445, %v1878
    %v1880 = vpop.f32.mrf.mxu0
    %1881 = vdwg.mxu0
    %1882 = vmatprep.subr.mxu0 0.0
    %1883 = vmatpush1.msra.mxu0 0.0
    %1884 = vmatprep.subr.mxu0 0.0
    %1885 = vmatpush1.msra.mxu0 0.0
    %1886 = vmatprep.subr.mxu0 0.0
    %1887 = vmatpush1.msra.mxu0 0.0
    %1888 = vmatprep.subr.mxu0 0.0
    %1889 = vmatpush1.msra.mxu0 0.0
    %1890 = vmatprep.subr.mxu0 0.0
    %1891 = vmatpush1.msra.mxu0 0.0
    %1892 = vmatprep.subr.mxu0 0.0
    %1893 = vmatpush1.msra.mxu0 0.0
    %1894 = vmatprep.subr.mxu0 0.0
    %1895 = vmatpush1.msra.mxu0 0.0
    %1896 = vmatprep.subr.mxu0 0.0
    %1897 = vmatpush1.msra.mxu0 0.0
    %1898 = vmatprep.subr.mxu0 0.0
    %1899 = vmatpush1.msra.mxu0 0.0
    %1900 = vmatprep.subr.mxu0 0.0
    %1901 = vmatpush1.msra.mxu0 0.0
    %1902 = vmatprep.subr.mxu0 0.0
    %1903 = vmatpush1.msra.mxu0 0.0
    %1904 = vmatprep.subr.mxu0 0.0
    %1905 = vmatpush1.msra.mxu0 0.0
    %1906 = vmatprep.subr.mxu0 0.0
    %1907 = vmatpush1.msra.mxu0 %v1401
    %1908 = vmatprep.subr.mxu0 0.0
    %1909 = vmatpush1.msra.mxu0 %v1400
    %1910 = vmatprep.subr.mxu0 0.0
    %1911 = vmatpush1.msra.mxu0 %v1399
    %1912 = vmatprep.subr.mxu0 0.0
    %1913 = vmatpush1.msra.mxu0 %v1398
    %1914 = vmatprep.subr.mxu0 0.0
    %1915 = vmatpush2.msra.mxu0 0.0
    %1916 = vmatprep.subr.mxu0 0.0
    %1917 = vmatpush2.msra.mxu0 0.0
    %1918 = vmatprep.subr.mxu0 0.0
    %1919 = vmatpush2.msra.mxu0 0.0
    %1920 = vmatprep.subr.mxu0 0.0
    %1921 = vmatpush2.msra.mxu0 0.0
    %1922 = vmatprep.subr.mxu0 0.0
    %1923 = vmatpush2.msra.mxu0 0.0
    %1924 = vmatprep.subr.mxu0 0.0
    %1925 = vmatpush2.msra.mxu0 0.0
    %1926 = vmatprep.subr.mxu0 0.0
    %1927 = vmatpush2.msra.mxu0 0.0
    %1928 = vmatprep.subr.mxu0 0.0
    %1929 = vmatpush2.msra.mxu0 0.0
    %1930 = vmatprep.subr.mxu0 0.0
    %1931 = vmatpush2.msra.mxu0 0.0
    %1932 = vmatprep.subr.mxu0 0.0
    %1933 = vmatpush2.msra.mxu0 0.0
    %1934 = vmatprep.subr.mxu0 0.0
    %1935 = vmatpush2.msra.mxu0 0.0
    %1936 = vmatprep.subr.mxu0 0.0
    %1937 = vmatpush2.msra.mxu0 0.0
    %1938 = vmatprep.subr.mxu0 0.0
    %1939 = vmatpush2.msra.mxu0 0.0
    %1940 = vmatprep.subr.mxu0 0.0
    %1941 = vmatpush2.msra.mxu0 0.0
    %1942 = vmatprep.subr.mxu0 0.0
    %1943 = vmatpush2.msra.mxu0 0.0
    %1944 = vmatprep.subr.mxu0 0.0
    %1945 = vmatpush2.msra.mxu0 0.0
    %1946 = vmatprep.mubr.f32.mxu0 0.0
    %1947 = vmatmul.mubr.f32.gmra.mxu0 %v581
    %v1948 = vpop.f32.mrf.mxu0
    %v1949 = vadd.f32 %v1449, %v1948
    %v1950 = vpop.f32.mrf.mxu0
    %1951 = vdwg.mxu0
    %1952 = vmatprep.subr.mxu0 0.0
    %1953 = vmatpush1.msra.mxu0 0.0
    %1954 = vmatprep.subr.mxu0 0.0
    %1955 = vmatpush1.msra.mxu0 0.0
    %1956 = vmatprep.subr.mxu0 0.0
    %1957 = vmatpush1.msra.mxu0 0.0
    %1958 = vmatprep.subr.mxu0 0.0
    %1959 = vmatpush1.msra.mxu0 0.0
    %1960 = vmatprep.subr.mxu0 0.0
    %1961 = vmatpush1.msra.mxu0 0.0
    %1962 = vmatprep.subr.mxu0 0.0
    %1963 = vmatpush1.msra.mxu0 0.0
    %1964 = vmatprep.subr.mxu0 0.0
    %1965 = vmatpush1.msra.mxu0 0.0
    %1966 = vmatprep.subr.mxu0 0.0
    %1967 = vmatpush1.msra.mxu0 0.0
    %1968 = vmatprep.subr.mxu0 0.0
    %1969 = vmatpush1.msra.mxu0 0.0
    %1970 = vmatprep.subr.mxu0 0.0
    %1971 = vmatpush1.msra.mxu0 0.0
    %1972 = vmatprep.subr.mxu0 0.0
    %1973 = vmatpush1.msra.mxu0 0.0
    %1974 = vmatprep.subr.mxu0 0.0
    %1975 = vmatpush1.msra.mxu0 0.0
    %1976 = vmatprep.subr.mxu0 0.0
    %1977 = vmatpush1.msra.mxu0 %v1405
    %1978 = vmatprep.subr.mxu0 0.0
    %1979 = vmatpush1.msra.mxu0 %v1404
    %1980 = vmatprep.subr.mxu0 0.0
    %1981 = vmatpush1.msra.mxu0 %v1403
    %1982 = vmatprep.subr.mxu0 0.0
    %1983 = vmatpush1.msra.mxu0 %v1402
    %1984 = vmatprep.subr.mxu0 0.0
    %1985 = vmatpush2.msra.mxu0 0.0
    %1986 = vmatprep.subr.mxu0 0.0
    %1987 = vmatpush2.msra.mxu0 0.0
    %1988 = vmatprep.subr.mxu0 0.0
    %1989 = vmatpush2.msra.mxu0 0.0
    %1990 = vmatprep.subr.mxu0 0.0
    %1991 = vmatpush2.msra.mxu0 0.0
    %1992 = vmatprep.subr.mxu0 0.0
    %1993 = vmatpush2.msra.mxu0 0.0
    %1994 = vmatprep.subr.mxu0 0.0
    %1995 = vmatpush2.msra.mxu0 0.0
    %1996 = vmatprep.subr.mxu0 0.0
    %1997 = vmatpush2.msra.mxu0 0.0
    %1998 = vmatprep.subr.mxu0 0.0
    %1999 = vmatpush2.msra.mxu0 0.0
    %2000 = vmatprep.subr.mxu0 0.0
    %2001 = vmatpush2.msra.mxu0 0.0
    %2002 = vmatprep.subr.mxu0 0.0
    %2003 = vmatpush2.msra.mxu0 0.0
    %2004 = vmatprep.subr.mxu0 0.0
    %2005 = vmatpush2.msra.mxu0 0.0
    %2006 = vmatprep.subr.mxu0 0.0
    %2007 = vmatpush2.msra.mxu0 0.0
    %2008 = vmatprep.subr.mxu0 0.0
    %2009 = vmatpush2.msra.mxu0 0.0
    %2010 = vmatprep.subr.mxu0 0.0
    %2011 = vmatpush2.msra.mxu0 0.0
    %2012 = vmatprep.subr.mxu0 0.0
    %2013 = vmatpush2.msra.mxu0 0.0
    %2014 = vmatprep.subr.mxu0 0.0
    %2015 = vmatpush2.msra.mxu0 0.0
    %2016 = vmatprep.mubr.f32.mxu0 0.0
    %2017 = vmatmul.mubr.f32.gmra.mxu0 %v654
    %v2018 = vpop.f32.mrf.mxu0
    %v2019 = vadd.f32 %v1453, %v2018
    %v2020 = vpop.f32.mrf.mxu0
    %2021 = vdwg.mxu0
    %vm2022 = vcmask 64512
    %v2024 = vsel %vm2022, %v212, 0
    %v2027 = vsel %vm2022, %v881, 0
    %2029 = vmatprep.subr.mxu0 0.0
    %2030 = vmatpush1.xpose.msra.mxu0 0.0
    %2031 = vmatprep.subr.mxu0 0.0
    %2032 = vmatpush1.xpose.msra.mxu0 0.0
    %2033 = vmatprep.subr.mxu0 0.0
    %2034 = vmatpush1.xpose.msra.mxu0 0.0
    %2035 = vmatprep.subr.mxu0 0.0
    %2036 = vmatpush1.xpose.msra.mxu0 0.0
    %2037 = vmatprep.subr.mxu0 0.0
    %2038 = vmatpush1.xpose.msra.mxu0 0.0
    %2039 = vmatprep.subr.mxu0 0.0
    %2040 = vmatpush1.xpose.msra.mxu0 0.0
    %2041 = vmatprep.subr.mxu0 0.0
    %2042 = vmatpush1.xpose.msra.mxu0 0.0
    %2043 = vmatprep.subr.mxu0 0.0
    %2044 = vmatpush1.xpose.msra.mxu0 0.0
    %2045 = vmatprep.subr.mxu0 0.0
    %2046 = vmatpush1.xpose.msra.mxu0 0.0
    %2047 = vmatprep.subr.mxu0 0.0
    %2048 = vmatpush1.xpose.msra.mxu0 0.0
    %2049 = vmatprep.subr.mxu0 0.0
    %2050 = vmatpush1.xpose.msra.mxu0 0.0
    %2051 = vmatprep.subr.mxu0 0.0
    %2052 = vmatpush1.xpose.msra.mxu0 0.0
    %2053 = vmatprep.subr.mxu0 0.0
    %2054 = vmatpush1.xpose.msra.mxu0 0.0
    %2055 = vmatprep.subr.mxu0 0.0
    %2056 = vmatpush1.xpose.msra.mxu0 0.0
    %2057 = vmatprep.subr.mxu0 0.0
    %2058 = vmatpush1.xpose.msra.mxu0 0.0
    %2059 = vmatprep.subr.mxu0 0.0
    %2060 = vmatpush1.xpose.msra.mxu0 %v2027
    %2061 = vmatprep.subr.mxu0 0.0
    %2062 = vmatpush2.xpose.msra.mxu0 0.0
    %2063 = vmatprep.subr.mxu0 0.0
    %2064 = vmatpush2.xpose.msra.mxu0 0.0
    %2065 = vmatprep.subr.mxu0 0.0
    %2066 = vmatpush2.xpose.msra.mxu0 0.0
    %2067 = vmatprep.subr.mxu0 0.0
    %2068 = vmatpush2.xpose.msra.mxu0 0.0
    %2069 = vmatprep.subr.mxu0 0.0
    %2070 = vmatpush2.xpose.msra.mxu0 0.0
    %2071 = vmatprep.subr.mxu0 0.0
    %2072 = vmatpush2.xpose.msra.mxu0 0.0
    %2073 = vmatprep.subr.mxu0 0.0
    %2074 = vmatpush2.xpose.msra.mxu0 0.0
    %2075 = vmatprep.subr.mxu0 0.0
    %2076 = vmatpush2.xpose.msra.mxu0 0.0
    %2077 = vmatprep.subr.mxu0 0.0
    %2078 = vmatpush2.xpose.msra.mxu0 0.0
    %2079 = vmatprep.subr.mxu0 0.0
    %2080 = vmatpush2.xpose.msra.mxu0 0.0
    %2081 = vmatprep.subr.mxu0 0.0
    %2082 = vmatpush2.xpose.msra.mxu0 0.0
    %2083 = vmatprep.subr.mxu0 0.0
    %2084 = vmatpush2.xpose.msra.mxu0 0.0
    %2085 = vmatprep.subr.mxu0 0.0
    %2086 = vmatpush2.xpose.msra.mxu0 0.0
    %2087 = vmatprep.subr.mxu0 0.0
    %2088 = vmatpush2.xpose.msra.mxu0 0.0
    %2089 = vmatprep.subr.mxu0 0.0
    %2090 = vmatpush2.xpose.msra.mxu0 0.0
    %2091 = vmatprep.subr.mxu0 0.0
    %2092 = vmatpush2.xpose.msra.mxu0 0.0
    %2093 = vmatprep.mubr.f32.mxu0 0.0
    %2094 = vmatmul.mubr.f32.gmra.mxu0 %v2024
    %v2095 = vpop.f32.mrf.mxu0
    %v2096 = vadd.f32 0.0, %v2095
    %v2097 = vpop.f32.mrf.mxu0
    %2098 = vdwg.mxu0
    %v2100 = vsel %vm2022, %v285, 0
    %v2103 = vsel %vm2022, %v951, 0
    %2105 = vmatprep.subr.mxu0 0.0
    %2106 = vmatpush1.xpose.msra.mxu0 0.0
    %2107 = vmatprep.subr.mxu0 0.0
    %2108 = vmatpush1.xpose.msra.mxu0 0.0
    %2109 = vmatprep.subr.mxu0 0.0
    %2110 = vmatpush1.xpose.msra.mxu0 0.0
    %2111 = vmatprep.subr.mxu0 0.0
    %2112 = vmatpush1.xpose.msra.mxu0 0.0
    %2113 = vmatprep.subr.mxu0 0.0
    %2114 = vmatpush1.xpose.msra.mxu0 0.0
    %2115 = vmatprep.subr.mxu0 0.0
    %2116 = vmatpush1.xpose.msra.mxu0 0.0
    %2117 = vmatprep.subr.mxu0 0.0
    %2118 = vmatpush1.xpose.msra.mxu0 0.0
    %2119 = vmatprep.subr.mxu0 0.0
    %2120 = vmatpush1.xpose.msra.mxu0 0.0
    %2121 = vmatprep.subr.mxu0 0.0
    %2122 = vmatpush1.xpose.msra.mxu0 0.0
    %2123 = vmatprep.subr.mxu0 0.0
    %2124 = vmatpush1.xpose.msra.mxu0 0.0
    %2125 = vmatprep.subr.mxu0 0.0
    %2126 = vmatpush1.xpose.msra.mxu0 0.0
    %2127 = vmatprep.subr.mxu0 0.0
    %2128 = vmatpush1.xpose.msra.mxu0 0.0
    %2129 = vmatprep.subr.mxu0 0.0
    %2130 = vmatpush1.xpose.msra.mxu0 0.0
    %2131 = vmatprep.subr.mxu0 0.0
    %2132 = vmatpush1.xpose.msra.mxu0 0.0
    %2133 = vmatprep.subr.mxu0 0.0
    %2134 = vmatpush1.xpose.msra.mxu0 0.0
    %2135 = vmatprep.subr.mxu0 0.0
    %2136 = vmatpush1.xpose.msra.mxu0 %v2103
    %2137 = vmatprep.subr.mxu0 0.0
    %2138 = vmatpush2.xpose.msra.mxu0 0.0
    %2139 = vmatprep.subr.mxu0 0.0
    %2140 = vmatpush2.xpose.msra.mxu0 0.0
    %2141 = vmatprep.subr.mxu0 0.0
    %2142 = vmatpush2.xpose.msra.mxu0 0.0
    %2143 = vmatprep.subr.mxu0 0.0
    %2144 = vmatpush2.xpose.msra.mxu0 0.0
    %2145 = vmatprep.subr.mxu0 0.0
    %2146 = vmatpush2.xpose.msra.mxu0 0.0
    %2147 = vmatprep.subr.mxu0 0.0
    %2148 = vmatpush2.xpose.msra.mxu0 0.0
    %2149 = vmatprep.subr.mxu0 0.0
    %2150 = vmatpush2.xpose.msra.mxu0 0.0
    %2151 = vmatprep.subr.mxu0 0.0
    %2152 = vmatpush2.xpose.msra.mxu0 0.0
    %2153 = vmatprep.subr.mxu0 0.0
    %2154 = vmatpush2.xpose.msra.mxu0 0.0
    %2155 = vmatprep.subr.mxu0 0.0
    %2156 = vmatpush2.xpose.msra.mxu0 0.0
    %2157 = vmatprep.subr.mxu0 0.0
    %2158 = vmatpush2.xpose.msra.mxu0 0.0
    %2159 = vmatprep.subr.mxu0 0.0
    %2160 = vmatpush2.xpose.msra.mxu0 0.0
    %2161 = vmatprep.subr.mxu0 0.0
    %2162 = vmatpush2.xpose.msra.mxu0 0.0
    %2163 = vmatprep.subr.mxu0 0.0
    %2164 = vmatpush2.xpose.msra.mxu0 0.0
    %2165 = vmatprep.subr.mxu0 0.0
    %2166 = vmatpush2.xpose.msra.mxu0 0.0
    %2167 = vmatprep.subr.mxu0 0.0
    %2168 = vmatpush2.xpose.msra.mxu0 0.0
    %2169 = vmatprep.mubr.f32.mxu0 0.0
    %2170 = vmatmul.mubr.f32.gmra.mxu0 %v2100
    %v2171 = vpop.f32.mrf.mxu0
    %v2172 = vadd.f32 0.0, %v2171
    %v2173 = vpop.f32.mrf.mxu0
    %2174 = vdwg.mxu0
    %v2176 = vsel %vm2022, %v358, 0
    %v2179 = vsel %vm2022, %v1021, 0
    %2181 = vmatprep.subr.mxu0 0.0
    %2182 = vmatpush1.xpose.msra.mxu0 0.0
    %2183 = vmatprep.subr.mxu0 0.0
    %2184 = vmatpush1.xpose.msra.mxu0 0.0
    %2185 = vmatprep.subr.mxu0 0.0
    %2186 = vmatpush1.xpose.msra.mxu0 0.0
    %2187 = vmatprep.subr.mxu0 0.0
    %2188 = vmatpush1.xpose.msra.mxu0 0.0
    %2189 = vmatprep.subr.mxu0 0.0
    %2190 = vmatpush1.xpose.msra.mxu0 0.0
    %2191 = vmatprep.subr.mxu0 0.0
    %2192 = vmatpush1.xpose.msra.mxu0 0.0
    %2193 = vmatprep.subr.mxu0 0.0
    %2194 = vmatpush1.xpose.msra.mxu0 0.0
    %2195 = vmatprep.subr.mxu0 0.0
    %2196 = vmatpush1.xpose.msra.mxu0 0.0
    %2197 = vmatprep.subr.mxu0 0.0
    %2198 = vmatpush1.xpose.msra.mxu0 0.0
    %2199 = vmatprep.subr.mxu0 0.0
    %2200 = vmatpush1.xpose.msra.mxu0 0.0
    %2201 = vmatprep.subr.mxu0 0.0
    %2202 = vmatpush1.xpose.msra.mxu0 0.0
    %2203 = vmatprep.subr.mxu0 0.0
    %2204 = vmatpush1.xpose.msra.mxu0 0.0
    %2205 = vmatprep.subr.mxu0 0.0
    %2206 = vmatpush1.xpose.msra.mxu0 0.0
    %2207 = vmatprep.subr.mxu0 0.0
    %2208 = vmatpush1.xpose.msra.mxu0 0.0
    %2209 = vmatprep.subr.mxu0 0.0
    %2210 = vmatpush1.xpose.msra.mxu0 0.0
    %2211 = vmatprep.subr.mxu0 0.0
    %2212 = vmatpush1.xpose.msra.mxu0 %v2179
    %2213 = vmatprep.subr.mxu0 0.0
    %2214 = vmatpush2.xpose.msra.mxu0 0.0
    %2215 = vmatprep.subr.mxu0 0.0
    %2216 = vmatpush2.xpose.msra.mxu0 0.0
    %2217 = vmatprep.subr.mxu0 0.0
    %2218 = vmatpush2.xpose.msra.mxu0 0.0
    %2219 = vmatprep.subr.mxu0 0.0
    %2220 = vmatpush2.xpose.msra.mxu0 0.0
    %2221 = vmatprep.subr.mxu0 0.0
    %2222 = vmatpush2.xpose.msra.mxu0 0.0
    %2223 = vmatprep.subr.mxu0 0.0
    %2224 = vmatpush2.xpose.msra.mxu0 0.0
    %2225 = vmatprep.subr.mxu0 0.0
    %2226 = vmatpush2.xpose.msra.mxu0 0.0
    %2227 = vmatprep.subr.mxu0 0.0
    %2228 = vmatpush2.xpose.msra.mxu0 0.0
    %2229 = vmatprep.subr.mxu0 0.0
    %2230 = vmatpush2.xpose.msra.mxu0 0.0
    %2231 = vmatprep.subr.mxu0 0.0
    %2232 = vmatpush2.xpose.msra.mxu0 0.0
    %2233 = vmatprep.subr.mxu0 0.0
    %2234 = vmatpush2.xpose.msra.mxu0 0.0
    %2235 = vmatprep.subr.mxu0 0.0
    %2236 = vmatpush2.xpose.msra.mxu0 0.0
    %2237 = vmatprep.subr.mxu0 0.0
    %2238 = vmatpush2.xpose.msra.mxu0 0.0
    %2239 = vmatprep.subr.mxu0 0.0
    %2240 = vmatpush2.xpose.msra.mxu0 0.0
    %2241 = vmatprep.subr.mxu0 0.0
    %2242 = vmatpush2.xpose.msra.mxu0 0.0
    %2243 = vmatprep.subr.mxu0 0.0
    %2244 = vmatpush2.xpose.msra.mxu0 0.0
    %2245 = vmatprep.mubr.f32.mxu0 0.0
    %2246 = vmatmul.mubr.f32.gmra.mxu0 %v2176
    %v2247 = vpop.f32.mrf.mxu0
    %v2248 = vadd.f32 0.0, %v2247
    %v2249 = vpop.f32.mrf.mxu0
    %2250 = vdwg.mxu0
    %v2252 = vsel %vm2022, %v431, 0
    %v2255 = vsel %vm2022, %v1091, 0
    %2257 = vmatprep.subr.mxu0 0.0
    %2258 = vmatpush1.xpose.msra.mxu0 0.0
    %2259 = vmatprep.subr.mxu0 0.0
    %2260 = vmatpush1.xpose.msra.mxu0 0.0
    %2261 = vmatprep.subr.mxu0 0.0
    %2262 = vmatpush1.xpose.msra.mxu0 0.0
    %2263 = vmatprep.subr.mxu0 0.0
    %2264 = vmatpush1.xpose.msra.mxu0 0.0
    %2265 = vmatprep.subr.mxu0 0.0
    %2266 = vmatpush1.xpose.msra.mxu0 0.0
    %2267 = vmatprep.subr.mxu0 0.0
    %2268 = vmatpush1.xpose.msra.mxu0 0.0
    %2269 = vmatprep.subr.mxu0 0.0
    %2270 = vmatpush1.xpose.msra.mxu0 0.0
    %2271 = vmatprep.subr.mxu0 0.0
    %2272 = vmatpush1.xpose.msra.mxu0 0.0
    %2273 = vmatprep.subr.mxu0 0.0
    %2274 = vmatpush1.xpose.msra.mxu0 0.0
    %2275 = vmatprep.subr.mxu0 0.0
    %2276 = vmatpush1.xpose.msra.mxu0 0.0
    %2277 = vmatprep.subr.mxu0 0.0
    %2278 = vmatpush1.xpose.msra.mxu0 0.0
    %2279 = vmatprep.subr.mxu0 0.0
    %2280 = vmatpush1.xpose.msra.mxu0 0.0
    %2281 = vmatprep.subr.mxu0 0.0
    %2282 = vmatpush1.xpose.msra.mxu0 0.0
    %2283 = vmatprep.subr.mxu0 0.0
    %2284 = vmatpush1.xpose.msra.mxu0 0.0
    %2285 = vmatprep.subr.mxu0 0.0
    %2286 = vmatpush1.xpose.msra.mxu0 0.0
    %2287 = vmatprep.subr.mxu0 0.0
    %2288 = vmatpush1.xpose.msra.mxu0 %v2255
    %2289 = vmatprep.subr.mxu0 0.0
    %2290 = vmatpush2.xpose.msra.mxu0 0.0
    %2291 = vmatprep.subr.mxu0 0.0
    %2292 = vmatpush2.xpose.msra.mxu0 0.0
    %2293 = vmatprep.subr.mxu0 0.0
    %2294 = vmatpush2.xpose.msra.mxu0 0.0
    %2295 = vmatprep.subr.mxu0 0.0
    %2296 = vmatpush2.xpose.msra.mxu0 0.0
    %2297 = vmatprep.subr.mxu0 0.0
    %2298 = vmatpush2.xpose.msra.mxu0 0.0
    %2299 = vmatprep.subr.mxu0 0.0
    %2300 = vmatpush2.xpose.msra.mxu0 0.0
    %2301 = vmatprep.subr.mxu0 0.0
    %2302 = vmatpush2.xpose.msra.mxu0 0.0
    %2303 = vmatprep.subr.mxu0 0.0
    %2304 = vmatpush2.xpose.msra.mxu0 0.0
    %2305 = vmatprep.subr.mxu0 0.0
    %2306 = vmatpush2.xpose.msra.mxu0 0.0
    %2307 = vmatprep.subr.mxu0 0.0
    %2308 = vmatpush2.xpose.msra.mxu0 0.0
    %2309 = vmatprep.subr.mxu0 0.0
    %2310 = vmatpush2.xpose.msra.mxu0 0.0
    %2311 = vmatprep.subr.mxu0 0.0
    %2312 = vmatpush2.xpose.msra.mxu0 0.0
    %2313 = vmatprep.subr.mxu0 0.0
    %2314 = vmatpush2.xpose.msra.mxu0 0.0
    %2315 = vmatprep.subr.mxu0 0.0
    %2316 = vmatpush2.xpose.msra.mxu0 0.0
    %2317 = vmatprep.subr.mxu0 0.0
    %2318 = vmatpush2.xpose.msra.mxu0 0.0
    %2319 = vmatprep.subr.mxu0 0.0
    %2320 = vmatpush2.xpose.msra.mxu0 0.0
    %2321 = vmatprep.mubr.f32.mxu0 0.0
    %2322 = vmatmul.mubr.f32.gmra.mxu0 %v2252
    %v2323 = vpop.f32.mrf.mxu0
    %v2324 = vadd.f32 0.0, %v2323
    %v2325 = vpop.f32.mrf.mxu0
    %2326 = vdwg.mxu0
    %v2328 = vsel %vm2022, %v504, 0
    %v2331 = vsel %vm2022, %v1161, 0
    %2333 = vmatprep.subr.mxu0 0.0
    %2334 = vmatpush1.xpose.msra.mxu0 0.0
    %2335 = vmatprep.subr.mxu0 0.0
    %2336 = vmatpush1.xpose.msra.mxu0 0.0
    %2337 = vmatprep.subr.mxu0 0.0
    %2338 = vmatpush1.xpose.msra.mxu0 0.0
    %2339 = vmatprep.subr.mxu0 0.0
    %2340 = vmatpush1.xpose.msra.mxu0 0.0
    %2341 = vmatprep.subr.mxu0 0.0
    %2342 = vmatpush1.xpose.msra.mxu0 0.0
    %2343 = vmatprep.subr.mxu0 0.0
    %2344 = vmatpush1.xpose.msra.mxu0 0.0
    %2345 = vmatprep.subr.mxu0 0.0
    %2346 = vmatpush1.xpose.msra.mxu0 0.0
    %2347 = vmatprep.subr.mxu0 0.0
    %2348 = vmatpush1.xpose.msra.mxu0 0.0
    %2349 = vmatprep.subr.mxu0 0.0
    %2350 = vmatpush1.xpose.msra.mxu0 0.0
    %2351 = vmatprep.subr.mxu0 0.0
    %2352 = vmatpush1.xpose.msra.mxu0 0.0
    %2353 = vmatprep.subr.mxu0 0.0
    %2354 = vmatpush1.xpose.msra.mxu0 0.0
    %2355 = vmatprep.subr.mxu0 0.0
    %2356 = vmatpush1.xpose.msra.mxu0 0.0
    %2357 = vmatprep.subr.mxu0 0.0
    %2358 = vmatpush1.xpose.msra.mxu0 0.0
    %2359 = vmatprep.subr.mxu0 0.0
    %2360 = vmatpush1.xpose.msra.mxu0 0.0
    %2361 = vmatprep.subr.mxu0 0.0
    %2362 = vmatpush1.xpose.msra.mxu0 0.0
    %2363 = vmatprep.subr.mxu0 0.0
    %2364 = vmatpush1.xpose.msra.mxu0 %v2331
    %2365 = vmatprep.subr.mxu0 0.0
    %2366 = vmatpush2.xpose.msra.mxu0 0.0
    %2367 = vmatprep.subr.mxu0 0.0
    %2368 = vmatpush2.xpose.msra.mxu0 0.0
    %2369 = vmatprep.subr.mxu0 0.0
    %2370 = vmatpush2.xpose.msra.mxu0 0.0
    %2371 = vmatprep.subr.mxu0 0.0
    %2372 = vmatpush2.xpose.msra.mxu0 0.0
    %2373 = vmatprep.subr.mxu0 0.0
    %2374 = vmatpush2.xpose.msra.mxu0 0.0
    %2375 = vmatprep.subr.mxu0 0.0
    %2376 = vmatpush2.xpose.msra.mxu0 0.0
    %2377 = vmatprep.subr.mxu0 0.0
    %2378 = vmatpush2.xpose.msra.mxu0 0.0
    %2379 = vmatprep.subr.mxu0 0.0
    %2380 = vmatpush2.xpose.msra.mxu0 0.0
    %2381 = vmatprep.subr.mxu0 0.0
    %2382 = vmatpush2.xpose.msra.mxu0 0.0
    %2383 = vmatprep.subr.mxu0 0.0
    %2384 = vmatpush2.xpose.msra.mxu0 0.0
    %2385 = vmatprep.subr.mxu0 0.0
    %2386 = vmatpush2.xpose.msra.mxu0 0.0
    %2387 = vmatprep.subr.mxu0 0.0
    %2388 = vmatpush2.xpose.msra.mxu0 0.0
    %2389 = vmatprep.subr.mxu0 0.0
    %2390 = vmatpush2.xpose.msra.mxu0 0.0
    %2391 = vmatprep.subr.mxu0 0.0
    %2392 = vmatpush2.xpose.msra.mxu0 0.0
    %2393 = vmatprep.subr.mxu0 0.0
    %2394 = vmatpush2.xpose.msra.mxu0 0.0
    %2395 = vmatprep.subr.mxu0 0.0
    %2396 = vmatpush2.xpose.msra.mxu0 0.0
    %2397 = vmatprep.mubr.f32.mxu0 0.0
    %2398 = vmatmul.mubr.f32.gmra.mxu0 %v2328
    %v2399 = vpop.f32.mrf.mxu0
    %v2400 = vadd.f32 0.0, %v2399
    %v2401 = vpop.f32.mrf.mxu0
    %2402 = vdwg.mxu0
    %v2404 = vsel %vm2022, %v577, 0
    %v2407 = vsel %vm2022, %v1231, 0
    %2409 = vmatprep.subr.mxu0 0.0
    %2410 = vmatpush1.xpose.msra.mxu0 0.0
    %2411 = vmatprep.subr.mxu0 0.0
    %2412 = vmatpush1.xpose.msra.mxu0 0.0
    %2413 = vmatprep.subr.mxu0 0.0
    %2414 = vmatpush1.xpose.msra.mxu0 0.0
    %2415 = vmatprep.subr.mxu0 0.0
    %2416 = vmatpush1.xpose.msra.mxu0 0.0
    %2417 = vmatprep.subr.mxu0 0.0
    %2418 = vmatpush1.xpose.msra.mxu0 0.0
    %2419 = vmatprep.subr.mxu0 0.0
    %2420 = vmatpush1.xpose.msra.mxu0 0.0
    %2421 = vmatprep.subr.mxu0 0.0
    %2422 = vmatpush1.xpose.msra.mxu0 0.0
    %2423 = vmatprep.subr.mxu0 0.0
    %2424 = vmatpush1.xpose.msra.mxu0 0.0
    %2425 = vmatprep.subr.mxu0 0.0
    %2426 = vmatpush1.xpose.msra.mxu0 0.0
    %2427 = vmatprep.subr.mxu0 0.0
    %2428 = vmatpush1.xpose.msra.mxu0 0.0
    %2429 = vmatprep.subr.mxu0 0.0
    %2430 = vmatpush1.xpose.msra.mxu0 0.0
    %2431 = vmatprep.subr.mxu0 0.0
    %2432 = vmatpush1.xpose.msra.mxu0 0.0
    %2433 = vmatprep.subr.mxu0 0.0
    %2434 = vmatpush1.xpose.msra.mxu0 0.0
    %2435 = vmatprep.subr.mxu0 0.0
    %2436 = vmatpush1.xpose.msra.mxu0 0.0
    %2437 = vmatprep.subr.mxu0 0.0
    %2438 = vmatpush1.xpose.msra.mxu0 0.0
    %2439 = vmatprep.subr.mxu0 0.0
    %2440 = vmatpush1.xpose.msra.mxu0 %v2407
    %2441 = vmatprep.subr.mxu0 0.0
    %2442 = vmatpush2.xpose.msra.mxu0 0.0
    %2443 = vmatprep.subr.mxu0 0.0
    %2444 = vmatpush2.xpose.msra.mxu0 0.0
    %2445 = vmatprep.subr.mxu0 0.0
    %2446 = vmatpush2.xpose.msra.mxu0 0.0
    %2447 = vmatprep.subr.mxu0 0.0
    %2448 = vmatpush2.xpose.msra.mxu0 0.0
    %2449 = vmatprep.subr.mxu0 0.0
    %2450 = vmatpush2.xpose.msra.mxu0 0.0
    %2451 = vmatprep.subr.mxu0 0.0
    %2452 = vmatpush2.xpose.msra.mxu0 0.0
    %2453 = vmatprep.subr.mxu0 0.0
    %2454 = vmatpush2.xpose.msra.mxu0 0.0
    %2455 = vmatprep.subr.mxu0 0.0
    %2456 = vmatpush2.xpose.msra.mxu0 0.0
    %2457 = vmatprep.subr.mxu0 0.0
    %2458 = vmatpush2.xpose.msra.mxu0 0.0
    %2459 = vmatprep.subr.mxu0 0.0
    %2460 = vmatpush2.xpose.msra.mxu0 0.0
    %2461 = vmatprep.subr.mxu0 0.0
    %2462 = vmatpush2.xpose.msra.mxu0 0.0
    %2463 = vmatprep.subr.mxu0 0.0
    %2464 = vmatpush2.xpose.msra.mxu0 0.0
    %2465 = vmatprep.subr.mxu0 0.0
    %2466 = vmatpush2.xpose.msra.mxu0 0.0
    %2467 = vmatprep.subr.mxu0 0.0
    %2468 = vmatpush2.xpose.msra.mxu0 0.0
    %2469 = vmatprep.subr.mxu0 0.0
    %2470 = vmatpush2.xpose.msra.mxu0 0.0
    %2471 = vmatprep.subr.mxu0 0.0
    %2472 = vmatpush2.xpose.msra.mxu0 0.0
    %2473 = vmatprep.mubr.f32.mxu0 0.0
    %2474 = vmatmul.mubr.f32.gmra.mxu0 %v2404
    %v2475 = vpop.f32.mrf.mxu0
    %v2476 = vadd.f32 0.0, %v2475
    %v2477 = vpop.f32.mrf.mxu0
    %2478 = vdwg.mxu0
    %v2480 = vsel %vm2022, %v650, 0
    %v2483 = vsel %vm2022, %v1301, 0
    %2485 = vmatprep.subr.mxu0 0.0
    %2486 = vmatpush1.xpose.msra.mxu0 0.0
    %2487 = vmatprep.subr.mxu0 0.0
    %2488 = vmatpush1.xpose.msra.mxu0 0.0
    %2489 = vmatprep.subr.mxu0 0.0
    %2490 = vmatpush1.xpose.msra.mxu0 0.0
    %2491 = vmatprep.subr.mxu0 0.0
    %2492 = vmatpush1.xpose.msra.mxu0 0.0
    %2493 = vmatprep.subr.mxu0 0.0
    %2494 = vmatpush1.xpose.msra.mxu0 0.0
    %2495 = vmatprep.subr.mxu0 0.0
    %2496 = vmatpush1.xpose.msra.mxu0 0.0
    %2497 = vmatprep.subr.mxu0 0.0
    %2498 = vmatpush1.xpose.msra.mxu0 0.0
    %2499 = vmatprep.subr.mxu0 0.0
    %2500 = vmatpush1.xpose.msra.mxu0 0.0
    %2501 = vmatprep.subr.mxu0 0.0
    %2502 = vmatpush1.xpose.msra.mxu0 0.0
    %2503 = vmatprep.subr.mxu0 0.0
    %2504 = vmatpush1.xpose.msra.mxu0 0.0
    %2505 = vmatprep.subr.mxu0 0.0
    %2506 = vmatpush1.xpose.msra.mxu0 0.0
    %2507 = vmatprep.subr.mxu0 0.0
    %2508 = vmatpush1.xpose.msra.mxu0 0.0
    %2509 = vmatprep.subr.mxu0 0.0
    %2510 = vmatpush1.xpose.msra.mxu0 0.0
    %2511 = vmatprep.subr.mxu0 0.0
    %2512 = vmatpush1.xpose.msra.mxu0 0.0
    %2513 = vmatprep.subr.mxu0 0.0
    %2514 = vmatpush1.xpose.msra.mxu0 0.0
    %2515 = vmatprep.subr.mxu0 0.0
    %2516 = vmatpush1.xpose.msra.mxu0 %v2483
    %2517 = vmatprep.subr.mxu0 0.0
    %2518 = vmatpush2.xpose.msra.mxu0 0.0
    %2519 = vmatprep.subr.mxu0 0.0
    %2520 = vmatpush2.xpose.msra.mxu0 0.0
    %2521 = vmatprep.subr.mxu0 0.0
    %2522 = vmatpush2.xpose.msra.mxu0 0.0
    %2523 = vmatprep.subr.mxu0 0.0
    %2524 = vmatpush2.xpose.msra.mxu0 0.0
    %2525 = vmatprep.subr.mxu0 0.0
    %2526 = vmatpush2.xpose.msra.mxu0 0.0
    %2527 = vmatprep.subr.mxu0 0.0
    %2528 = vmatpush2.xpose.msra.mxu0 0.0
    %2529 = vmatprep.subr.mxu0 0.0
    %2530 = vmatpush2.xpose.msra.mxu0 0.0
    %2531 = vmatprep.subr.mxu0 0.0
    %2532 = vmatpush2.xpose.msra.mxu0 0.0
    %2533 = vmatprep.subr.mxu0 0.0
    %2534 = vmatpush2.xpose.msra.mxu0 0.0
    %2535 = vmatprep.subr.mxu0 0.0
    %2536 = vmatpush2.xpose.msra.mxu0 0.0
    %2537 = vmatprep.subr.mxu0 0.0
    %2538 = vmatpush2.xpose.msra.mxu0 0.0
    %2539 = vmatprep.subr.mxu0 0.0
    %2540 = vmatpush2.xpose.msra.mxu0 0.0
    %2541 = vmatprep.subr.mxu0 0.0
    %2542 = vmatpush2.xpose.msra.mxu0 0.0
    %2543 = vmatprep.subr.mxu0 0.0
    %2544 = vmatpush2.xpose.msra.mxu0 0.0
    %2545 = vmatprep.subr.mxu0 0.0
    %2546 = vmatpush2.xpose.msra.mxu0 0.0
    %2547 = vmatprep.subr.mxu0 0.0
    %2548 = vmatpush2.xpose.msra.mxu0 0.0
    %2549 = vmatprep.mubr.f32.mxu0 0.0
    %2550 = vmatmul.mubr.f32.gmra.mxu0 %v2480
    %v2551 = vpop.f32.mrf.mxu0
    %v2552 = vadd.f32 0.0, %v2551
    %v2553 = vpop.f32.mrf.mxu0
    %2554 = vdwg.mxu0
    %v2556 = vsel %vm2022, %v723, 0
    %v2559 = vsel %vm2022, %v1371, 0
    %2561 = vmatprep.subr.mxu0 0.0
    %2562 = vmatpush1.xpose.msra.mxu0 0.0
    %2563 = vmatprep.subr.mxu0 0.0
    %2564 = vmatpush1.xpose.msra.mxu0 0.0
    %2565 = vmatprep.subr.mxu0 0.0
    %2566 = vmatpush1.xpose.msra.mxu0 0.0
    %2567 = vmatprep.subr.mxu0 0.0
    %2568 = vmatpush1.xpose.msra.mxu0 0.0
    %2569 = vmatprep.subr.mxu0 0.0
    %2570 = vmatpush1.xpose.msra.mxu0 0.0
    %2571 = vmatprep.subr.mxu0 0.0
    %2572 = vmatpush1.xpose.msra.mxu0 0.0
    %2573 = vmatprep.subr.mxu0 0.0
    %2574 = vmatpush1.xpose.msra.mxu0 0.0
    %2575 = vmatprep.subr.mxu0 0.0
    %2576 = vmatpush1.xpose.msra.mxu0 0.0
    %2577 = vmatprep.subr.mxu0 0.0
    %2578 = vmatpush1.xpose.msra.mxu0 0.0
    %2579 = vmatprep.subr.mxu0 0.0
    %2580 = vmatpush1.xpose.msra.mxu0 0.0
    %2581 = vmatprep.subr.mxu0 0.0
    %2582 = vmatpush1.xpose.msra.mxu0 0.0
    %2583 = vmatprep.subr.mxu0 0.0
    %2584 = vmatpush1.xpose.msra.mxu0 0.0
    %2585 = vmatprep.subr.mxu0 0.0
    %2586 = vmatpush1.xpose.msra.mxu0 0.0
    %2587 = vmatprep.subr.mxu0 0.0
    %2588 = vmatpush1.xpose.msra.mxu0 0.0
    %2589 = vmatprep.subr.mxu0 0.0
    %2590 = vmatpush1.xpose.msra.mxu0 0.0
    %2591 = vmatprep.subr.mxu0 0.0
    %2592 = vmatpush1.xpose.msra.mxu0 %v2559
    %2593 = vmatprep.subr.mxu0 0.0
    %2594 = vmatpush2.xpose.msra.mxu0 0.0
    %2595 = vmatprep.subr.mxu0 0.0
    %2596 = vmatpush2.xpose.msra.mxu0 0.0
    %2597 = vmatprep.subr.mxu0 0.0
    %2598 = vmatpush2.xpose.msra.mxu0 0.0
    %2599 = vmatprep.subr.mxu0 0.0
    %2600 = vmatpush2.xpose.msra.mxu0 0.0
    %2601 = vmatprep.subr.mxu0 0.0
    %2602 = vmatpush2.xpose.msra.mxu0 0.0
    %2603 = vmatprep.subr.mxu0 0.0
    %2604 = vmatpush2.xpose.msra.mxu0 0.0
    %2605 = vmatprep.subr.mxu0 0.0
    %2606 = vmatpush2.xpose.msra.mxu0 0.0
    %2607 = vmatprep.subr.mxu0 0.0
    %2608 = vmatpush2.xpose.msra.mxu0 0.0
    %2609 = vmatprep.subr.mxu0 0.0
    %2610 = vmatpush2.xpose.msra.mxu0 0.0
    %2611 = vmatprep.subr.mxu0 0.0
    %2612 = vmatpush2.xpose.msra.mxu0 0.0
    %2613 = vmatprep.subr.mxu0 0.0
    %2614 = vmatpush2.xpose.msra.mxu0 0.0
    %2615 = vmatprep.subr.mxu0 0.0
    %2616 = vmatpush2.xpose.msra.mxu0 0.0
    %2617 = vmatprep.subr.mxu0 0.0
    %2618 = vmatpush2.xpose.msra.mxu0 0.0
    %2619 = vmatprep.subr.mxu0 0.0
    %2620 = vmatpush2.xpose.msra.mxu0 0.0
    %2621 = vmatprep.subr.mxu0 0.0
    %2622 = vmatpush2.xpose.msra.mxu0 0.0
    %2623 = vmatprep.subr.mxu0 0.0
    %2624 = vmatpush2.xpose.msra.mxu0 0.0
    %2625 = vmatprep.mubr.f32.mxu0 0.0
    %2626 = vmatmul.mubr.f32.gmra.mxu0 %v2556
    %v2627 = vpop.f32.mrf.mxu0
    %v2628 = vadd.f32 0.0, %v2627
    %v2629 = vpop.f32.mrf.mxu0
    %2630 = vdwg.mxu0
    %v2631 = vmul.f32 %v2096, 0.35355338
    %v2632 = vmul.f32 %v2172, 0.35355338
    %v2633 = vmul.f32 %v2248, 0.35355338
    %v2634 = vmul.f32 %v2324, 0.35355338
    %v2635 = vmul.f32 %v2400, 0.35355338
    %v2636 = vmul.f32 %v2476, 0.35355338
    %v2637 = vmul.f32 %v2552, 0.35355338
    %v2638 = vmul.f32 %v2628, 0.35355338
    %v2639 = vsel %vm2022, %v2631, -inf
    %2640 = vmax.xlane.f32.xlu0 %v2639
    %v2641 = vpop.xlane.xlu0 %2640
    %v2642 = vsel %vm2022, %v2632, -inf
    %2643 = vmax.xlane.f32.xlu0 %v2642
    %v2644 = vpop.xlane.xlu0 %2643
    %v2645 = vsel %vm2022, %v2633, -inf
    %2646 = vmax.xlane.f32.xlu0 %v2645
    %v2647 = vpop.xlane.xlu0 %2646
    %v2648 = vsel %vm2022, %v2634, -inf
    %2649 = vmax.xlane.f32.xlu0 %v2648
    %v2650 = vpop.xlane.xlu0 %2649
    %v2651 = vsel %vm2022, %v2635, -inf
    %2652 = vmax.xlane.f32.xlu0 %v2651
    %v2653 = vpop.xlane.xlu0 %2652
    %v2654 = vsel %vm2022, %v2636, -inf
    %2655 = vmax.xlane.f32.xlu0 %v2654
    %v2656 = vpop.xlane.xlu0 %2655
    %v2657 = vsel %vm2022, %v2637, -inf
    %2658 = vmax.xlane.f32.xlu0 %v2657
    %v2659 = vpop.xlane.xlu0 %2658
    %v2660 = vsel %vm2022, %v2638, -inf
    %2661 = vmax.xlane.f32.xlu0 %v2660
    %v2662 = vpop.xlane.xlu0 %2661
    %v2663 = vsub.f32 %v2631, %v2641
    %v2664 = vsub.f32 %v2632, %v2644
    %v2665 = vsub.f32 %v2633, %v2647
    %v2666 = vsub.f32 %v2634, %v2650
    %v2667 = vsub.f32 %v2635, %v2653
    %v2668 = vsub.f32 %v2636, %v2656
    %v2669 = vsub.f32 %v2637, %v2659
    %v2670 = vsub.f32 %v2638, %v2662
    %v2671 = vmul.f32 %v2663, 1.442695
    %v2672 = vpow.pop %v2671
    %v2673 = vmul.f32 %v2664, 1.442695
    %v2674 = vpow.pop %v2673
    %v2675 = vmul.f32 %v2665, 1.442695
    %v2676 = vpow.pop %v2675
    %v2677 = vmul.f32 %v2666, 1.442695
    %v2678 = vpow.pop %v2677
    %v2679 = vmul.f32 %v2667, 1.442695
    %v2680 = vpow.pop %v2679
    %v2681 = vmul.f32 %v2668, 1.442695
    %v2682 = vpow.pop %v2681
    %v2683 = vmul.f32 %v2669, 1.442695
    %v2684 = vpow.pop %v2683
    %v2685 = vmul.f32 %v2670, 1.442695
    %v2686 = vpow.pop %v2685
    %v2687 = vsel %vm2022, %v2672, 0.0
    %2688 = vadd.xlane.f32.xlu0 %v2687
    %v2689 = vpop.xlane.xlu0 %2688
    %v2690 = vsel %vm2022, %v2674, 0.0
    %2691 = vadd.xlane.f32.xlu0 %v2690
    %v2692 = vpop.xlane.xlu0 %2691
    %v2693 = vsel %vm2022, %v2676, 0.0
    %2694 = vadd.xlane.f32.xlu0 %v2693
    %v2695 = vpop.xlane.xlu0 %2694
    %v2696 = vsel %vm2022, %v2678, 0.0
    %2697 = vadd.xlane.f32.xlu0 %v2696
    %v2698 = vpop.xlane.xlu0 %2697
    %v2699 = vsel %vm2022, %v2680, 0.0
    %2700 = vadd.xlane.f32.xlu0 %v2699
    %v2701 = vpop.xlane.xlu0 %2700
    %v2702 = vsel %vm2022, %v2682, 0.0
    %2703 = vadd.xlane.f32.xlu0 %v2702
    %v2704 = vpop.xlane.xlu0 %2703
    %v2705 = vsel %vm2022, %v2684, 0.0
    %2706 = vadd.xlane.f32.xlu0 %v2705
    %v2707 = vpop.xlane.xlu0 %2706
    %v2708 = vsel %vm2022, %v2686, 0.0
    %2709 = vadd.xlane.f32.xlu0 %v2708
    %v2710 = vpop.xlane.xlu0 %2709
    %v2711 = vrcp.pop %v2689
    %v2712 = vrcp.pop %v2692
    %v2713 = vrcp.pop %v2695
    %v2714 = vrcp.pop %v2698
    %v2715 = vrcp.pop %v2701
    %v2716 = vrcp.pop %v2704
    %v2717 = vrcp.pop %v2707
    %v2718 = vrcp.pop %v2710
    %v2719 = vmul.f32 %v2672, %v2711
    %v2720 = vmul.f32 %v2674, %v2712
    %v2721 = vmul.f32 %v2676, %v2713
    %v2722 = vmul.f32 %v2678, %v2714
    %v2723 = vmul.f32 %v2680, %v2715
    %v2724 = vmul.f32 %v2682, %v2716
    %v2725 = vmul.f32 %v2684, %v2717
    %v2726 = vmul.f32 %v2686, %v2718
    %v2728 = vsel %vm2022, %v2719, 0
    %2730 = vmatprep.subr.mxu0 0.0
    %2731 = vmatpush1.msra.mxu0 0.0
    %2732 = vmatprep.subr.mxu0 0.0
    %2733 = vmatpush1.msra.mxu0 0.0
    %2734 = vmatprep.subr.mxu0 0.0
    %2735 = vmatpush1.msra.mxu0 0.0
    %2736 = vmatprep.subr.mxu0 0.0
    %2737 = vmatpush1.msra.mxu0 0.0
    %2738 = vmatprep.subr.mxu0 0.0
    %2739 = vmatpush1.msra.mxu0 0.0
    %2740 = vmatprep.subr.mxu0 0.0
    %2741 = vmatpush1.msra.mxu0 0.0
    %2742 = vmatprep.subr.mxu0 0.0
    %2743 = vmatpush1.msra.mxu0 0.0
    %2744 = vmatprep.subr.mxu0 0.0
    %2745 = vmatpush1.msra.mxu0 0.0
    %2746 = vmatprep.subr.mxu0 0.0
    %2747 = vmatpush1.msra.mxu0 0.0
    %2748 = vmatprep.subr.mxu0 0.0
    %2749 = vmatpush1.msra.mxu0 0.0
    %2750 = vmatprep.subr.mxu0 0.0
    %2751 = vmatpush1.msra.mxu0 0.0
    %2752 = vmatprep.subr.mxu0 0.0
    %2753 = vmatpush1.msra.mxu0 0.0
    %2754 = vmatprep.subr.mxu0 0.0
    %2755 = vmatpush1.msra.mxu0 0.0
    %2756 = vmatprep.subr.mxu0 0.0
    %2757 = vmatpush1.msra.mxu0 0.0
    %2758 = vmatprep.subr.mxu0 0.0
    %2759 = vmatpush1.msra.mxu0 0.0
    %2760 = vmatprep.subr.mxu0 0.0
    %2761 = vmatpush1.msra.mxu0 %v1529
    %2762 = vmatprep.subr.mxu0 0.0
    %2763 = vmatpush2.msra.mxu0 0.0
    %2764 = vmatprep.subr.mxu0 0.0
    %2765 = vmatpush2.msra.mxu0 0.0
    %2766 = vmatprep.subr.mxu0 0.0
    %2767 = vmatpush2.msra.mxu0 0.0
    %2768 = vmatprep.subr.mxu0 0.0
    %2769 = vmatpush2.msra.mxu0 0.0
    %2770 = vmatprep.subr.mxu0 0.0
    %2771 = vmatpush2.msra.mxu0 0.0
    %2772 = vmatprep.subr.mxu0 0.0
    %2773 = vmatpush2.msra.mxu0 0.0
    %2774 = vmatprep.subr.mxu0 0.0
    %2775 = vmatpush2.msra.mxu0 0.0
    %2776 = vmatprep.subr.mxu0 0.0
    %2777 = vmatpush2.msra.mxu0 0.0
    %2778 = vmatprep.subr.mxu0 0.0
    %2779 = vmatpush2.msra.mxu0 0.0
    %2780 = vmatprep.subr.mxu0 0.0
    %2781 = vmatpush2.msra.mxu0 0.0
    %2782 = vmatprep.subr.mxu0 0.0
    %2783 = vmatpush2.msra.mxu0 0.0
    %2784 = vmatprep.subr.mxu0 0.0
    %2785 = vmatpush2.msra.mxu0 0.0
    %2786 = vmatprep.subr.mxu0 0.0
    %2787 = vmatpush2.msra.mxu0 0.0
    %2788 = vmatprep.subr.mxu0 0.0
    %2789 = vmatpush2.msra.mxu0 0.0
    %2790 = vmatprep.subr.mxu0 0.0
    %2791 = vmatpush2.msra.mxu0 0.0
    %2792 = vmatprep.subr.mxu0 0.0
    %2793 = vmatpush2.msra.mxu0 0.0
    %2794 = vmatprep.mubr.f32.mxu0 0.0
    %2795 = vmatmul.mubr.f32.gmra.mxu0 %v2728
    %v2796 = vpop.f32.mrf.mxu0
    %v2797 = vadd.f32 0.0, %v2796
    %v2798 = vpop.f32.mrf.mxu0
    %2799 = vdwg.mxu0
    %v2801 = vsel %vm2022, %v2720, 0
    %2803 = vmatprep.subr.mxu0 0.0
    %2804 = vmatpush1.msra.mxu0 0.0
    %2805 = vmatprep.subr.mxu0 0.0
    %2806 = vmatpush1.msra.mxu0 0.0
    %2807 = vmatprep.subr.mxu0 0.0
    %2808 = vmatpush1.msra.mxu0 0.0
    %2809 = vmatprep.subr.mxu0 0.0
    %2810 = vmatpush1.msra.mxu0 0.0
    %2811 = vmatprep.subr.mxu0 0.0
    %2812 = vmatpush1.msra.mxu0 0.0
    %2813 = vmatprep.subr.mxu0 0.0
    %2814 = vmatpush1.msra.mxu0 0.0
    %2815 = vmatprep.subr.mxu0 0.0
    %2816 = vmatpush1.msra.mxu0 0.0
    %2817 = vmatprep.subr.mxu0 0.0
    %2818 = vmatpush1.msra.mxu0 0.0
    %2819 = vmatprep.subr.mxu0 0.0
    %2820 = vmatpush1.msra.mxu0 0.0
    %2821 = vmatprep.subr.mxu0 0.0
    %2822 = vmatpush1.msra.mxu0 0.0
    %2823 = vmatprep.subr.mxu0 0.0
    %2824 = vmatpush1.msra.mxu0 0.0
    %2825 = vmatprep.subr.mxu0 0.0
    %2826 = vmatpush1.msra.mxu0 0.0
    %2827 = vmatprep.subr.mxu0 0.0
    %2828 = vmatpush1.msra.mxu0 0.0
    %2829 = vmatprep.subr.mxu0 0.0
    %2830 = vmatpush1.msra.mxu0 0.0
    %2831 = vmatprep.subr.mxu0 0.0
    %2832 = vmatpush1.msra.mxu0 0.0
    %2833 = vmatprep.subr.mxu0 0.0
    %2834 = vmatpush1.msra.mxu0 %v1599
    %2835 = vmatprep.subr.mxu0 0.0
    %2836 = vmatpush2.msra.mxu0 0.0
    %2837 = vmatprep.subr.mxu0 0.0
    %2838 = vmatpush2.msra.mxu0 0.0
    %2839 = vmatprep.subr.mxu0 0.0
    %2840 = vmatpush2.msra.mxu0 0.0
    %2841 = vmatprep.subr.mxu0 0.0
    %2842 = vmatpush2.msra.mxu0 0.0
    %2843 = vmatprep.subr.mxu0 0.0
    %2844 = vmatpush2.msra.mxu0 0.0
    %2845 = vmatprep.subr.mxu0 0.0
    %2846 = vmatpush2.msra.mxu0 0.0
    %2847 = vmatprep.subr.mxu0 0.0
    %2848 = vmatpush2.msra.mxu0 0.0
    %2849 = vmatprep.subr.mxu0 0.0
    %2850 = vmatpush2.msra.mxu0 0.0
    %2851 = vmatprep.subr.mxu0 0.0
    %2852 = vmatpush2.msra.mxu0 0.0
    %2853 = vmatprep.subr.mxu0 0.0
    %2854 = vmatpush2.msra.mxu0 0.0
    %2855 = vmatprep.subr.mxu0 0.0
    %2856 = vmatpush2.msra.mxu0 0.0
    %2857 = vmatprep.subr.mxu0 0.0
    %2858 = vmatpush2.msra.mxu0 0.0
    %2859 = vmatprep.subr.mxu0 0.0
    %2860 = vmatpush2.msra.mxu0 0.0
    %2861 = vmatprep.subr.mxu0 0.0
    %2862 = vmatpush2.msra.mxu0 0.0
    %2863 = vmatprep.subr.mxu0 0.0
    %2864 = vmatpush2.msra.mxu0 0.0
    %2865 = vmatprep.subr.mxu0 0.0
    %2866 = vmatpush2.msra.mxu0 0.0
    %2867 = vmatprep.mubr.f32.mxu0 0.0
    %2868 = vmatmul.mubr.f32.gmra.mxu0 %v2801
    %v2869 = vpop.f32.mrf.mxu0
    %v2870 = vadd.f32 0.0, %v2869
    %v2871 = vpop.f32.mrf.mxu0
    %2872 = vdwg.mxu0
    %v2874 = vsel %vm2022, %v2721, 0
    %2876 = vmatprep.subr.mxu0 0.0
    %2877 = vmatpush1.msra.mxu0 0.0
    %2878 = vmatprep.subr.mxu0 0.0
    %2879 = vmatpush1.msra.mxu0 0.0
    %2880 = vmatprep.subr.mxu0 0.0
    %2881 = vmatpush1.msra.mxu0 0.0
    %2882 = vmatprep.subr.mxu0 0.0
    %2883 = vmatpush1.msra.mxu0 0.0
    %2884 = vmatprep.subr.mxu0 0.0
    %2885 = vmatpush1.msra.mxu0 0.0
    %2886 = vmatprep.subr.mxu0 0.0
    %2887 = vmatpush1.msra.mxu0 0.0
    %2888 = vmatprep.subr.mxu0 0.0
    %2889 = vmatpush1.msra.mxu0 0.0
    %2890 = vmatprep.subr.mxu0 0.0
    %2891 = vmatpush1.msra.mxu0 0.0
    %2892 = vmatprep.subr.mxu0 0.0
    %2893 = vmatpush1.msra.mxu0 0.0
    %2894 = vmatprep.subr.mxu0 0.0
    %2895 = vmatpush1.msra.mxu0 0.0
    %2896 = vmatprep.subr.mxu0 0.0
    %2897 = vmatpush1.msra.mxu0 0.0
    %2898 = vmatprep.subr.mxu0 0.0
    %2899 = vmatpush1.msra.mxu0 0.0
    %2900 = vmatprep.subr.mxu0 0.0
    %2901 = vmatpush1.msra.mxu0 0.0
    %2902 = vmatprep.subr.mxu0 0.0
    %2903 = vmatpush1.msra.mxu0 0.0
    %2904 = vmatprep.subr.mxu0 0.0
    %2905 = vmatpush1.msra.mxu0 0.0
    %2906 = vmatprep.subr.mxu0 0.0
    %2907 = vmatpush1.msra.mxu0 %v1669
    %2908 = vmatprep.subr.mxu0 0.0
    %2909 = vmatpush2.msra.mxu0 0.0
    %2910 = vmatprep.subr.mxu0 0.0
    %2911 = vmatpush2.msra.mxu0 0.0
    %2912 = vmatprep.subr.mxu0 0.0
    %2913 = vmatpush2.msra.mxu0 0.0
    %2914 = vmatprep.subr.mxu0 0.0
    %2915 = vmatpush2.msra.mxu0 0.0
    %2916 = vmatprep.subr.mxu0 0.0
    %2917 = vmatpush2.msra.mxu0 0.0
    %2918 = vmatprep.subr.mxu0 0.0
    %2919 = vmatpush2.msra.mxu0 0.0
    %2920 = vmatprep.subr.mxu0 0.0
    %2921 = vmatpush2.msra.mxu0 0.0
    %2922 = vmatprep.subr.mxu0 0.0
    %2923 = vmatpush2.msra.mxu0 0.0
    %2924 = vmatprep.subr.mxu0 0.0
    %2925 = vmatpush2.msra.mxu0 0.0
    %2926 = vmatprep.subr.mxu0 0.0
    %2927 = vmatpush2.msra.mxu0 0.0
    %2928 = vmatprep.subr.mxu0 0.0
    %2929 = vmatpush2.msra.mxu0 0.0
    %2930 = vmatprep.subr.mxu0 0.0
    %2931 = vmatpush2.msra.mxu0 0.0
    %2932 = vmatprep.subr.mxu0 0.0
    %2933 = vmatpush2.msra.mxu0 0.0
    %2934 = vmatprep.subr.mxu0 0.0
    %2935 = vmatpush2.msra.mxu0 0.0
    %2936 = vmatprep.subr.mxu0 0.0
    %2937 = vmatpush2.msra.mxu0 0.0
    %2938 = vmatprep.subr.mxu0 0.0
    %2939 = vmatpush2.msra.mxu0 0.0
    %2940 = vmatprep.mubr.f32.mxu0 0.0
    %2941 = vmatmul.mubr.f32.gmra.mxu0 %v2874
    %v2942 = vpop.f32.mrf.mxu0
    %v2943 = vadd.f32 0.0, %v2942
    %v2944 = vpop.f32.mrf.mxu0
    %2945 = vdwg.mxu0
    %v2947 = vsel %vm2022, %v2722, 0
    %2949 = vmatprep.subr.mxu0 0.0
    %2950 = vmatpush1.msra.mxu0 0.0
    %2951 = vmatprep.subr.mxu0 0.0
    %2952 = vmatpush1.msra.mxu0 0.0
    %2953 = vmatprep.subr.mxu0 0.0
    %2954 = vmatpush1.msra.mxu0 0.0
    %2955 = vmatprep.subr.mxu0 0.0
    %2956 = vmatpush1.msra.mxu0 0.0
    %2957 = vmatprep.subr.mxu0 0.0
    %2958 = vmatpush1.msra.mxu0 0.0
    %2959 = vmatprep.subr.mxu0 0.0
    %2960 = vmatpush1.msra.mxu0 0.0
    %2961 = vmatprep.subr.mxu0 0.0
    %2962 = vmatpush1.msra.mxu0 0.0
    %2963 = vmatprep.subr.mxu0 0.0
    %2964 = vmatpush1.msra.mxu0 0.0
    %2965 = vmatprep.subr.mxu0 0.0
    %2966 = vmatpush1.msra.mxu0 0.0
    %2967 = vmatprep.subr.mxu0 0.0
    %2968 = vmatpush1.msra.mxu0 0.0
    %2969 = vmatprep.subr.mxu0 0.0
    %2970 = vmatpush1.msra.mxu0 0.0
    %2971 = vmatprep.subr.mxu0 0.0
    %2972 = vmatpush1.msra.mxu0 0.0
    %2973 = vmatprep.subr.mxu0 0.0
    %2974 = vmatpush1.msra.mxu0 0.0
    %2975 = vmatprep.subr.mxu0 0.0
    %2976 = vmatpush1.msra.mxu0 0.0
    %2977 = vmatprep.subr.mxu0 0.0
    %2978 = vmatpush1.msra.mxu0 0.0
    %2979 = vmatprep.subr.mxu0 0.0
    %2980 = vmatpush1.msra.mxu0 %v1739
    %2981 = vmatprep.subr.mxu0 0.0
    %2982 = vmatpush2.msra.mxu0 0.0
    %2983 = vmatprep.subr.mxu0 0.0
    %2984 = vmatpush2.msra.mxu0 0.0
    %2985 = vmatprep.subr.mxu0 0.0
    %2986 = vmatpush2.msra.mxu0 0.0
    %2987 = vmatprep.subr.mxu0 0.0
    %2988 = vmatpush2.msra.mxu0 0.0
    %2989 = vmatprep.subr.mxu0 0.0
    %2990 = vmatpush2.msra.mxu0 0.0
    %2991 = vmatprep.subr.mxu0 0.0
    %2992 = vmatpush2.msra.mxu0 0.0
    %2993 = vmatprep.subr.mxu0 0.0
    %2994 = vmatpush2.msra.mxu0 0.0
    %2995 = vmatprep.subr.mxu0 0.0
    %2996 = vmatpush2.msra.mxu0 0.0
    %2997 = vmatprep.subr.mxu0 0.0
    %2998 = vmatpush2.msra.mxu0 0.0
    %2999 = vmatprep.subr.mxu0 0.0
    %3000 = vmatpush2.msra.mxu0 0.0
    %3001 = vmatprep.subr.mxu0 0.0
    %3002 = vmatpush2.msra.mxu0 0.0
    %3003 = vmatprep.subr.mxu0 0.0
    %3004 = vmatpush2.msra.mxu0 0.0
    %3005 = vmatprep.subr.mxu0 0.0
    %3006 = vmatpush2.msra.mxu0 0.0
    %3007 = vmatprep.subr.mxu0 0.0
    %3008 = vmatpush2.msra.mxu0 0.0
    %3009 = vmatprep.subr.mxu0 0.0
    %3010 = vmatpush2.msra.mxu0 0.0
    %3011 = vmatprep.subr.mxu0 0.0
    %3012 = vmatpush2.msra.mxu0 0.0
    %3013 = vmatprep.mubr.f32.mxu0 0.0
    %3014 = vmatmul.mubr.f32.gmra.mxu0 %v2947
    %v3015 = vpop.f32.mrf.mxu0
    %v3016 = vadd.f32 0.0, %v3015
    %v3017 = vpop.f32.mrf.mxu0
    %3018 = vdwg.mxu0
    %v3020 = vsel %vm2022, %v2723, 0
    %3022 = vmatprep.subr.mxu0 0.0
    %3023 = vmatpush1.msra.mxu0 0.0
    %3024 = vmatprep.subr.mxu0 0.0
    %3025 = vmatpush1.msra.mxu0 0.0
    %3026 = vmatprep.subr.mxu0 0.0
    %3027 = vmatpush1.msra.mxu0 0.0
    %3028 = vmatprep.subr.mxu0 0.0
    %3029 = vmatpush1.msra.mxu0 0.0
    %3030 = vmatprep.subr.mxu0 0.0
    %3031 = vmatpush1.msra.mxu0 0.0
    %3032 = vmatprep.subr.mxu0 0.0
    %3033 = vmatpush1.msra.mxu0 0.0
    %3034 = vmatprep.subr.mxu0 0.0
    %3035 = vmatpush1.msra.mxu0 0.0
    %3036 = vmatprep.subr.mxu0 0.0
    %3037 = vmatpush1.msra.mxu0 0.0
    %3038 = vmatprep.subr.mxu0 0.0
    %3039 = vmatpush1.msra.mxu0 0.0
    %3040 = vmatprep.subr.mxu0 0.0
    %3041 = vmatpush1.msra.mxu0 0.0
    %3042 = vmatprep.subr.mxu0 0.0
    %3043 = vmatpush1.msra.mxu0 0.0
    %3044 = vmatprep.subr.mxu0 0.0
    %3045 = vmatpush1.msra.mxu0 0.0
    %3046 = vmatprep.subr.mxu0 0.0
    %3047 = vmatpush1.msra.mxu0 0.0
    %3048 = vmatprep.subr.mxu0 0.0
    %3049 = vmatpush1.msra.mxu0 0.0
    %3050 = vmatprep.subr.mxu0 0.0
    %3051 = vmatpush1.msra.mxu0 0.0
    %3052 = vmatprep.subr.mxu0 0.0
    %3053 = vmatpush1.msra.mxu0 %v1809
    %3054 = vmatprep.subr.mxu0 0.0
    %3055 = vmatpush2.msra.mxu0 0.0
    %3056 = vmatprep.subr.mxu0 0.0
    %3057 = vmatpush2.msra.mxu0 0.0
    %3058 = vmatprep.subr.mxu0 0.0
    %3059 = vmatpush2.msra.mxu0 0.0
    %3060 = vmatprep.subr.mxu0 0.0
    %3061 = vmatpush2.msra.mxu0 0.0
    %3062 = vmatprep.subr.mxu0 0.0
    %3063 = vmatpush2.msra.mxu0 0.0
    %3064 = vmatprep.subr.mxu0 0.0
    %3065 = vmatpush2.msra.mxu0 0.0
    %3066 = vmatprep.subr.mxu0 0.0
    %3067 = vmatpush2.msra.mxu0 0.0
    %3068 = vmatprep.subr.mxu0 0.0
    %3069 = vmatpush2.msra.mxu0 0.0
    %3070 = vmatprep.subr.mxu0 0.0
    %3071 = vmatpush2.msra.mxu0 0.0
    %3072 = vmatprep.subr.mxu0 0.0
    %3073 = vmatpush2.msra.mxu0 0.0
    %3074 = vmatprep.subr.mxu0 0.0
    %3075 = vmatpush2.msra.mxu0 0.0
    %3076 = vmatprep.subr.mxu0 0.0
    %3077 = vmatpush2.msra.mxu0 0.0
    %3078 = vmatprep.subr.mxu0 0.0
    %3079 = vmatpush2.msra.mxu0 0.0
    %3080 = vmatprep.subr.mxu0 0.0
    %3081 = vmatpush2.msra.mxu0 0.0
    %3082 = vmatprep.subr.mxu0 0.0
    %3083 = vmatpush2.msra.mxu0 0.0
    %3084 = vmatprep.subr.mxu0 0.0
    %3085 = vmatpush2.msra.mxu0 0.0
    %3086 = vmatprep.mubr.f32.mxu0 0.0
    %3087 = vmatmul.mubr.f32.gmra.mxu0 %v3020
    %v3088 = vpop.f32.mrf.mxu0
    %v3089 = vadd.f32 0.0, %v3088
    %v3090 = vpop.f32.mrf.mxu0
    %3091 = vdwg.mxu0
    %v3093 = vsel %vm2022, %v2724, 0
    %3095 = vmatprep.subr.mxu0 0.0
    %3096 = vmatpush1.msra.mxu0 0.0
    %3097 = vmatprep.subr.mxu0 0.0
    %3098 = vmatpush1.msra.mxu0 0.0
    %3099 = vmatprep.subr.mxu0 0.0
    %3100 = vmatpush1.msra.mxu0 0.0
    %3101 = vmatprep.subr.mxu0 0.0
    %3102 = vmatpush1.msra.mxu0 0.0
    %3103 = vmatprep.subr.mxu0 0.0
    %3104 = vmatpush1.msra.mxu0 0.0
    %3105 = vmatprep.subr.mxu0 0.0
    %3106 = vmatpush1.msra.mxu0 0.0
    %3107 = vmatprep.subr.mxu0 0.0
    %3108 = vmatpush1.msra.mxu0 0.0
    %3109 = vmatprep.subr.mxu0 0.0
    %3110 = vmatpush1.msra.mxu0 0.0
    %3111 = vmatprep.subr.mxu0 0.0
    %3112 = vmatpush1.msra.mxu0 0.0
    %3113 = vmatprep.subr.mxu0 0.0
    %3114 = vmatpush1.msra.mxu0 0.0
    %3115 = vmatprep.subr.mxu0 0.0
    %3116 = vmatpush1.msra.mxu0 0.0
    %3117 = vmatprep.subr.mxu0 0.0
    %3118 = vmatpush1.msra.mxu0 0.0
    %3119 = vmatprep.subr.mxu0 0.0
    %3120 = vmatpush1.msra.mxu0 0.0
    %3121 = vmatprep.subr.mxu0 0.0
    %3122 = vmatpush1.msra.mxu0 0.0
    %3123 = vmatprep.subr.mxu0 0.0
    %3124 = vmatpush1.msra.mxu0 0.0
    %3125 = vmatprep.subr.mxu0 0.0
    %3126 = vmatpush1.msra.mxu0 %v1879
    %3127 = vmatprep.subr.mxu0 0.0
    %3128 = vmatpush2.msra.mxu0 0.0
    %3129 = vmatprep.subr.mxu0 0.0
    %3130 = vmatpush2.msra.mxu0 0.0
    %3131 = vmatprep.subr.mxu0 0.0
    %3132 = vmatpush2.msra.mxu0 0.0
    %3133 = vmatprep.subr.mxu0 0.0
    %3134 = vmatpush2.msra.mxu0 0.0
    %3135 = vmatprep.subr.mxu0 0.0
    %3136 = vmatpush2.msra.mxu0 0.0
    %3137 = vmatprep.subr.mxu0 0.0
    %3138 = vmatpush2.msra.mxu0 0.0
    %3139 = vmatprep.subr.mxu0 0.0
    %3140 = vmatpush2.msra.mxu0 0.0
    %3141 = vmatprep.subr.mxu0 0.0
    %3142 = vmatpush2.msra.mxu0 0.0
    %3143 = vmatprep.subr.mxu0 0.0
    %3144 = vmatpush2.msra.mxu0 0.0
    %3145 = vmatprep.subr.mxu0 0.0
    %3146 = vmatpush2.msra.mxu0 0.0
    %3147 = vmatprep.subr.mxu0 0.0
    %3148 = vmatpush2.msra.mxu0 0.0
    %3149 = vmatprep.subr.mxu0 0.0
    %3150 = vmatpush2.msra.mxu0 0.0
    %3151 = vmatprep.subr.mxu0 0.0
    %3152 = vmatpush2.msra.mxu0 0.0
    %3153 = vmatprep.subr.mxu0 0.0
    %3154 = vmatpush2.msra.mxu0 0.0
    %3155 = vmatprep.subr.mxu0 0.0
    %3156 = vmatpush2.msra.mxu0 0.0
    %3157 = vmatprep.subr.mxu0 0.0
    %3158 = vmatpush2.msra.mxu0 0.0
    %3159 = vmatprep.mubr.f32.mxu0 0.0
    %3160 = vmatmul.mubr.f32.gmra.mxu0 %v3093
    %v3161 = vpop.f32.mrf.mxu0
    %v3162 = vadd.f32 0.0, %v3161
    %v3163 = vpop.f32.mrf.mxu0
    %3164 = vdwg.mxu0
    %v3166 = vsel %vm2022, %v2725, 0
    %3168 = vmatprep.subr.mxu0 0.0
    %3169 = vmatpush1.msra.mxu0 0.0
    %3170 = vmatprep.subr.mxu0 0.0
    %3171 = vmatpush1.msra.mxu0 0.0
    %3172 = vmatprep.subr.mxu0 0.0
    %3173 = vmatpush1.msra.mxu0 0.0
    %3174 = vmatprep.subr.mxu0 0.0
    %3175 = vmatpush1.msra.mxu0 0.0
    %3176 = vmatprep.subr.mxu0 0.0
    %3177 = vmatpush1.msra.mxu0 0.0
    %3178 = vmatprep.subr.mxu0 0.0
    %3179 = vmatpush1.msra.mxu0 0.0
    %3180 = vmatprep.subr.mxu0 0.0
    %3181 = vmatpush1.msra.mxu0 0.0
    %3182 = vmatprep.subr.mxu0 0.0
    %3183 = vmatpush1.msra.mxu0 0.0
    %3184 = vmatprep.subr.mxu0 0.0
    %3185 = vmatpush1.msra.mxu0 0.0
    %3186 = vmatprep.subr.mxu0 0.0
    %3187 = vmatpush1.msra.mxu0 0.0
    %3188 = vmatprep.subr.mxu0 0.0
    %3189 = vmatpush1.msra.mxu0 0.0
    %3190 = vmatprep.subr.mxu0 0.0
    %3191 = vmatpush1.msra.mxu0 0.0
    %3192 = vmatprep.subr.mxu0 0.0
    %3193 = vmatpush1.msra.mxu0 0.0
    %3194 = vmatprep.subr.mxu0 0.0
    %3195 = vmatpush1.msra.mxu0 0.0
    %3196 = vmatprep.subr.mxu0 0.0
    %3197 = vmatpush1.msra.mxu0 0.0
    %3198 = vmatprep.subr.mxu0 0.0
    %3199 = vmatpush1.msra.mxu0 %v1949
    %3200 = vmatprep.subr.mxu0 0.0
    %3201 = vmatpush2.msra.mxu0 0.0
    %3202 = vmatprep.subr.mxu0 0.0
    %3203 = vmatpush2.msra.mxu0 0.0
    %3204 = vmatprep.subr.mxu0 0.0
    %3205 = vmatpush2.msra.mxu0 0.0
    %3206 = vmatprep.subr.mxu0 0.0
    %3207 = vmatpush2.msra.mxu0 0.0
    %3208 = vmatprep.subr.mxu0 0.0
    %3209 = vmatpush2.msra.mxu0 0.0
    %3210 = vmatprep.subr.mxu0 0.0
    %3211 = vmatpush2.msra.mxu0 0.0
    %3212 = vmatprep.subr.mxu0 0.0
    %3213 = vmatpush2.msra.mxu0 0.0
    %3214 = vmatprep.subr.mxu0 0.0
    %3215 = vmatpush2.msra.mxu0 0.0
    %3216 = vmatprep.subr.mxu0 0.0
    %3217 = vmatpush2.msra.mxu0 0.0
    %3218 = vmatprep.subr.mxu0 0.0
    %3219 = vmatpush2.msra.mxu0 0.0
    %3220 = vmatprep.subr.mxu0 0.0
    %3221 = vmatpush2.msra.mxu0 0.0
    %3222 = vmatprep.subr.mxu0 0.0
    %3223 = vmatpush2.msra.mxu0 0.0
    %3224 = vmatprep.subr.mxu0 0.0
    %3225 = vmatpush2.msra.mxu0 0.0
    %3226 = vmatprep.subr.mxu0 0.0
    %3227 = vmatpush2.msra.mxu0 0.0
    %3228 = vmatprep.subr.mxu0 0.0
    %3229 = vmatpush2.msra.mxu0 0.0
    %3230 = vmatprep.subr.mxu0 0.0
    %3231 = vmatpush2.msra.mxu0 0.0
    %3232 = vmatprep.mubr.f32.mxu0 0.0
    %3233 = vmatmul.mubr.f32.gmra.mxu0 %v3166
    %v3234 = vpop.f32.mrf.mxu0
    %v3235 = vadd.f32 0.0, %v3234
    %v3236 = vpop.f32.mrf.mxu0
    %3237 = vdwg.mxu0
    %v3239 = vsel %vm2022, %v2726, 0
    %3241 = vmatprep.subr.mxu0 0.0
    %3242 = vmatpush1.msra.mxu0 0.0
    %3243 = vmatprep.subr.mxu0 0.0
    %3244 = vmatpush1.msra.mxu0 0.0
    %3245 = vmatprep.subr.mxu0 0.0
    %3246 = vmatpush1.msra.mxu0 0.0
    %3247 = vmatprep.subr.mxu0 0.0
    %3248 = vmatpush1.msra.mxu0 0.0
    %3249 = vmatprep.subr.mxu0 0.0
    %3250 = vmatpush1.msra.mxu0 0.0
    %3251 = vmatprep.subr.mxu0 0.0
    %3252 = vmatpush1.msra.mxu0 0.0
    %3253 = vmatprep.subr.mxu0 0.0
    %3254 = vmatpush1.msra.mxu0 0.0
    %3255 = vmatprep.subr.mxu0 0.0
    %3256 = vmatpush1.msra.mxu0 0.0
    %3257 = vmatprep.subr.mxu0 0.0
    %3258 = vmatpush1.msra.mxu0 0.0
    %3259 = vmatprep.subr.mxu0 0.0
    %3260 = vmatpush1.msra.mxu0 0.0
    %3261 = vmatprep.subr.mxu0 0.0
    %3262 = vmatpush1.msra.mxu0 0.0
    %3263 = vmatprep.subr.mxu0 0.0
    %3264 = vmatpush1.msra.mxu0 0.0
    %3265 = vmatprep.subr.mxu0 0.0
    %3266 = vmatpush1.msra.mxu0 0.0
    %3267 = vmatprep.subr.mxu0 0.0
    %3268 = vmatpush1.msra.mxu0 0.0
    %3269 = vmatprep.subr.mxu0 0.0
    %3270 = vmatpush1.msra.mxu0 0.0
    %3271 = vmatprep.subr.mxu0 0.0
    %3272 = vmatpush1.msra.mxu0 %v2019
    %3273 = vmatprep.subr.mxu0 0.0
    %3274 = vmatpush2.msra.mxu0 0.0
    %3275 = vmatprep.subr.mxu0 0.0
    %3276 = vmatpush2.msra.mxu0 0.0
    %3277 = vmatprep.subr.mxu0 0.0
    %3278 = vmatpush2.msra.mxu0 0.0
    %3279 = vmatprep.subr.mxu0 0.0
    %3280 = vmatpush2.msra.mxu0 0.0
    %3281 = vmatprep.subr.mxu0 0.0
    %3282 = vmatpush2.msra.mxu0 0.0
    %3283 = vmatprep.subr.mxu0 0.0
    %3284 = vmatpush2.msra.mxu0 0.0
    %3285 = vmatprep.subr.mxu0 0.0
    %3286 = vmatpush2.msra.mxu0 0.0
    %3287 = vmatprep.subr.mxu0 0.0
    %3288 = vmatpush2.msra.mxu0 0.0
    %3289 = vmatprep.subr.mxu0 0.0
    %3290 = vmatpush2.msra.mxu0 0.0
    %3291 = vmatprep.subr.mxu0 0.0
    %3292 = vmatpush2.msra.mxu0 0.0
    %3293 = vmatprep.subr.mxu0 0.0
    %3294 = vmatpush2.msra.mxu0 0.0
    %3295 = vmatprep.subr.mxu0 0.0
    %3296 = vmatpush2.msra.mxu0 0.0
    %3297 = vmatprep.subr.mxu0 0.0
    %3298 = vmatpush2.msra.mxu0 0.0
    %3299 = vmatprep.subr.mxu0 0.0
    %3300 = vmatpush2.msra.mxu0 0.0
    %3301 = vmatprep.subr.mxu0 0.0
    %3302 = vmatpush2.msra.mxu0 0.0
    %3303 = vmatprep.subr.mxu0 0.0
    %3304 = vmatpush2.msra.mxu0 0.0
    %3305 = vmatprep.mubr.f32.mxu0 0.0
    %3306 = vmatmul.mubr.f32.gmra.mxu0 %v3239
    %v3307 = vpop.f32.mrf.mxu0
    %v3308 = vadd.f32 0.0, %v3307
    %v3309 = vpop.f32.mrf.mxu0
    %3310 = vdwg.mxu0
    %v3311 = vld [vmem:[%s7] sm:$0xff]
    %v3312 = vld [vmem:[%s7 + $0x8] sm:$0xff]
    %v3313 = vld [vmem:[%s7 + $0x10] sm:$0xff]
    %v3314 = vld [vmem:[%s7 + $0x18] sm:$0xff]
    %v3315 = vld [vmem:[%s7 + $0x20] sm:$0xff]
    %v3316 = vld [vmem:[%s7 + $0x28] sm:$0xff]
    %v3317 = vld [vmem:[%s7 + $0x30] sm:$0xff]
    %v3318 = vld [vmem:[%s7 + $0x38] sm:$0xff]
    %v3320 = vsel %vm2022, %v2797, 0
    %3322 = vmatprep.subr.mxu0 0.0
    %3323 = vmatpush1.msra.mxu0 0.0
    %3324 = vmatprep.subr.mxu0 0.0
    %3325 = vmatpush1.msra.mxu0 0.0
    %3326 = vmatprep.subr.mxu0 0.0
    %3327 = vmatpush1.msra.mxu0 0.0
    %3328 = vmatprep.subr.mxu0 0.0
    %3329 = vmatpush1.msra.mxu0 0.0
    %3330 = vmatprep.subr.mxu0 0.0
    %3331 = vmatpush1.msra.mxu0 0.0
    %3332 = vmatprep.subr.mxu0 0.0
    %3333 = vmatpush1.msra.mxu0 0.0
    %3334 = vmatprep.subr.mxu0 0.0
    %3335 = vmatpush1.msra.mxu0 0.0
    %3336 = vmatprep.subr.mxu0 0.0
    %3337 = vmatpush1.msra.mxu0 0.0
    %3338 = vmatprep.subr.mxu0 0.0
    %3339 = vmatpush1.msra.mxu0 0.0
    %3340 = vmatprep.subr.mxu0 0.0
    %3341 = vmatpush1.msra.mxu0 0.0
    %3342 = vmatprep.subr.mxu0 0.0
    %3343 = vmatpush1.msra.mxu0 0.0
    %3344 = vmatprep.subr.mxu0 0.0
    %3345 = vmatpush1.msra.mxu0 0.0
    %3346 = vmatprep.subr.mxu0 0.0
    %3347 = vmatpush1.msra.mxu0 0.0
    %3348 = vmatprep.subr.mxu0 0.0
    %3349 = vmatpush1.msra.mxu0 0.0
    %3350 = vmatprep.subr.mxu0 0.0
    %3351 = vmatpush1.msra.mxu0 0.0
    %3352 = vmatprep.subr.mxu0 0.0
    %3353 = vmatpush1.msra.mxu0 %v3311
    %3354 = vmatprep.subr.mxu0 0.0
    %3355 = vmatpush2.msra.mxu0 0.0
    %3356 = vmatprep.subr.mxu0 0.0
    %3357 = vmatpush2.msra.mxu0 0.0
    %3358 = vmatprep.subr.mxu0 0.0
    %3359 = vmatpush2.msra.mxu0 0.0
    %3360 = vmatprep.subr.mxu0 0.0
    %3361 = vmatpush2.msra.mxu0 0.0
    %3362 = vmatprep.subr.mxu0 0.0
    %3363 = vmatpush2.msra.mxu0 0.0
    %3364 = vmatprep.subr.mxu0 0.0
    %3365 = vmatpush2.msra.mxu0 0.0
    %3366 = vmatprep.subr.mxu0 0.0
    %3367 = vmatpush2.msra.mxu0 0.0
    %3368 = vmatprep.subr.mxu0 0.0
    %3369 = vmatpush2.msra.mxu0 0.0
    %3370 = vmatprep.subr.mxu0 0.0
    %3371 = vmatpush2.msra.mxu0 0.0
    %3372 = vmatprep.subr.mxu0 0.0
    %3373 = vmatpush2.msra.mxu0 0.0
    %3374 = vmatprep.subr.mxu0 0.0
    %3375 = vmatpush2.msra.mxu0 0.0
    %3376 = vmatprep.subr.mxu0 0.0
    %3377 = vmatpush2.msra.mxu0 0.0
    %3378 = vmatprep.subr.mxu0 0.0
    %3379 = vmatpush2.msra.mxu0 0.0
    %3380 = vmatprep.subr.mxu0 0.0
    %3381 = vmatpush2.msra.mxu0 0.0
    %3382 = vmatprep.subr.mxu0 0.0
    %3383 = vmatpush2.msra.mxu0 0.0
    %3384 = vmatprep.subr.mxu0 0.0
    %3385 = vmatpush2.msra.mxu0 0.0
    %3386 = vmatprep.mubr.f32.mxu0 0.0
    %3387 = vmatmul.mubr.f32.gmra.mxu0 %v3320
    %v3388 = vpop.f32.mrf.mxu0
    %v3389 = vadd.f32 0.0, %v3388
    %v3390 = vpop.f32.mrf.mxu0
    %3391 = vdwg.mxu0
    %v3393 = vsel %vm2022, %v2870, 0
    %3395 = vmatprep.subr.mxu0 0.0
    %3396 = vmatpush1.msra.mxu0 0.0
    %3397 = vmatprep.subr.mxu0 0.0
    %3398 = vmatpush1.msra.mxu0 0.0
    %3399 = vmatprep.subr.mxu0 0.0
    %3400 = vmatpush1.msra.mxu0 0.0
    %3401 = vmatprep.subr.mxu0 0.0
    %3402 = vmatpush1.msra.mxu0 0.0
    %3403 = vmatprep.subr.mxu0 0.0
    %3404 = vmatpush1.msra.mxu0 0.0
    %3405 = vmatprep.subr.mxu0 0.0
    %3406 = vmatpush1.msra.mxu0 0.0
    %3407 = vmatprep.subr.mxu0 0.0
    %3408 = vmatpush1.msra.mxu0 0.0
    %3409 = vmatprep.subr.mxu0 0.0
    %3410 = vmatpush1.msra.mxu0 0.0
    %3411 = vmatprep.subr.mxu0 0.0
    %3412 = vmatpush1.msra.mxu0 0.0
    %3413 = vmatprep.subr.mxu0 0.0
    %3414 = vmatpush1.msra.mxu0 0.0
    %3415 = vmatprep.subr.mxu0 0.0
    %3416 = vmatpush1.msra.mxu0 0.0
    %3417 = vmatprep.subr.mxu0 0.0
    %3418 = vmatpush1.msra.mxu0 0.0
    %3419 = vmatprep.subr.mxu0 0.0
    %3420 = vmatpush1.msra.mxu0 0.0
    %3421 = vmatprep.subr.mxu0 0.0
    %3422 = vmatpush1.msra.mxu0 0.0
    %3423 = vmatprep.subr.mxu0 0.0
    %3424 = vmatpush1.msra.mxu0 0.0
    %3425 = vmatprep.subr.mxu0 0.0
    %3426 = vmatpush1.msra.mxu0 %v3312
    %3427 = vmatprep.subr.mxu0 0.0
    %3428 = vmatpush2.msra.mxu0 0.0
    %3429 = vmatprep.subr.mxu0 0.0
    %3430 = vmatpush2.msra.mxu0 0.0
    %3431 = vmatprep.subr.mxu0 0.0
    %3432 = vmatpush2.msra.mxu0 0.0
    %3433 = vmatprep.subr.mxu0 0.0
    %3434 = vmatpush2.msra.mxu0 0.0
    %3435 = vmatprep.subr.mxu0 0.0
    %3436 = vmatpush2.msra.mxu0 0.0
    %3437 = vmatprep.subr.mxu0 0.0
    %3438 = vmatpush2.msra.mxu0 0.0
    %3439 = vmatprep.subr.mxu0 0.0
    %3440 = vmatpush2.msra.mxu0 0.0
    %3441 = vmatprep.subr.mxu0 0.0
    %3442 = vmatpush2.msra.mxu0 0.0
    %3443 = vmatprep.subr.mxu0 0.0
    %3444 = vmatpush2.msra.mxu0 0.0
    %3445 = vmatprep.subr.mxu0 0.0
    %3446 = vmatpush2.msra.mxu0 0.0
    %3447 = vmatprep.subr.mxu0 0.0
    %3448 = vmatpush2.msra.mxu0 0.0
    %3449 = vmatprep.subr.mxu0 0.0
    %3450 = vmatpush2.msra.mxu0 0.0
    %3451 = vmatprep.subr.mxu0 0.0
    %3452 = vmatpush2.msra.mxu0 0.0
    %3453 = vmatprep.subr.mxu0 0.0
    %3454 = vmatpush2.msra.mxu0 0.0
    %3455 = vmatprep.subr.mxu0 0.0
    %3456 = vmatpush2.msra.mxu0 0.0
    %3457 = vmatprep.subr.mxu0 0.0
    %3458 = vmatpush2.msra.mxu0 0.0
    %3459 = vmatprep.mubr.f32.mxu0 0.0
    %3460 = vmatmul.mubr.f32.gmra.mxu0 %v3393
    %v3461 = vpop.f32.mrf.mxu0
    %v3462 = vadd.f32 0.0, %v3461
    %v3463 = vpop.f32.mrf.mxu0
    %3464 = vdwg.mxu0
    %v3466 = vsel %vm2022, %v2943, 0
    %3468 = vmatprep.subr.mxu0 0.0
    %3469 = vmatpush1.msra.mxu0 0.0
    %3470 = vmatprep.subr.mxu0 0.0
    %3471 = vmatpush1.msra.mxu0 0.0
    %3472 = vmatprep.subr.mxu0 0.0
    %3473 = vmatpush1.msra.mxu0 0.0
    %3474 = vmatprep.subr.mxu0 0.0
    %3475 = vmatpush1.msra.mxu0 0.0
    %3476 = vmatprep.subr.mxu0 0.0
    %3477 = vmatpush1.msra.mxu0 0.0
    %3478 = vmatprep.subr.mxu0 0.0
    %3479 = vmatpush1.msra.mxu0 0.0
    %3480 = vmatprep.subr.mxu0 0.0
    %3481 = vmatpush1.msra.mxu0 0.0
    %3482 = vmatprep.subr.mxu0 0.0
    %3483 = vmatpush1.msra.mxu0 0.0
    %3484 = vmatprep.subr.mxu0 0.0
    %3485 = vmatpush1.msra.mxu0 0.0
    %3486 = vmatprep.subr.mxu0 0.0
    %3487 = vmatpush1.msra.mxu0 0.0
    %3488 = vmatprep.subr.mxu0 0.0
    %3489 = vmatpush1.msra.mxu0 0.0
    %3490 = vmatprep.subr.mxu0 0.0
    %3491 = vmatpush1.msra.mxu0 0.0
    %3492 = vmatprep.subr.mxu0 0.0
    %3493 = vmatpush1.msra.mxu0 0.0
    %3494 = vmatprep.subr.mxu0 0.0
    %3495 = vmatpush1.msra.mxu0 0.0
    %3496 = vmatprep.subr.mxu0 0.0
    %3497 = vmatpush1.msra.mxu0 0.0
    %3498 = vmatprep.subr.mxu0 0.0
    %3499 = vmatpush1.msra.mxu0 %v3313
    %3500 = vmatprep.subr.mxu0 0.0
    %3501 = vmatpush2.msra.mxu0 0.0
    %3502 = vmatprep.subr.mxu0 0.0
    %3503 = vmatpush2.msra.mxu0 0.0
    %3504 = vmatprep.subr.mxu0 0.0
    %3505 = vmatpush2.msra.mxu0 0.0
    %3506 = vmatprep.subr.mxu0 0.0
    %3507 = vmatpush2.msra.mxu0 0.0
    %3508 = vmatprep.subr.mxu0 0.0
    %3509 = vmatpush2.msra.mxu0 0.0
    %3510 = vmatprep.subr.mxu0 0.0
    %3511 = vmatpush2.msra.mxu0 0.0
    %3512 = vmatprep.subr.mxu0 0.0
    %3513 = vmatpush2.msra.mxu0 0.0
    %3514 = vmatprep.subr.mxu0 0.0
    %3515 = vmatpush2.msra.mxu0 0.0
    %3516 = vmatprep.subr.mxu0 0.0
    %3517 = vmatpush2.msra.mxu0 0.0
    %3518 = vmatprep.subr.mxu0 0.0
    %3519 = vmatpush2.msra.mxu0 0.0
    %3520 = vmatprep.subr.mxu0 0.0
    %3521 = vmatpush2.msra.mxu0 0.0
    %3522 = vmatprep.subr.mxu0 0.0
    %3523 = vmatpush2.msra.mxu0 0.0
    %3524 = vmatprep.subr.mxu0 0.0
    %3525 = vmatpush2.msra.mxu0 0.0
    %3526 = vmatprep.subr.mxu0 0.0
    %3527 = vmatpush2.msra.mxu0 0.0
    %3528 = vmatprep.subr.mxu0 0.0
    %3529 = vmatpush2.msra.mxu0 0.0
    %3530 = vmatprep.subr.mxu0 0.0
    %3531 = vmatpush2.msra.mxu0 0.0
    %3532 = vmatprep.mubr.f32.mxu0 0.0
    %3533 = vmatmul.mubr.f32.gmra.mxu0 %v3466
    %v3534 = vpop.f32.mrf.mxu0
    %v3535 = vadd.f32 0.0, %v3534
    %v3536 = vpop.f32.mrf.mxu0
    %3537 = vdwg.mxu0
    %v3539 = vsel %vm2022, %v3016, 0
    %3541 = vmatprep.subr.mxu0 0.0
    %3542 = vmatpush1.msra.mxu0 0.0
    %3543 = vmatprep.subr.mxu0 0.0
    %3544 = vmatpush1.msra.mxu0 0.0
    %3545 = vmatprep.subr.mxu0 0.0
    %3546 = vmatpush1.msra.mxu0 0.0
    %3547 = vmatprep.subr.mxu0 0.0
    %3548 = vmatpush1.msra.mxu0 0.0
    %3549 = vmatprep.subr.mxu0 0.0
    %3550 = vmatpush1.msra.mxu0 0.0
    %3551 = vmatprep.subr.mxu0 0.0
    %3552 = vmatpush1.msra.mxu0 0.0
    %3553 = vmatprep.subr.mxu0 0.0
    %3554 = vmatpush1.msra.mxu0 0.0
    %3555 = vmatprep.subr.mxu0 0.0
    %3556 = vmatpush1.msra.mxu0 0.0
    %3557 = vmatprep.subr.mxu0 0.0
    %3558 = vmatpush1.msra.mxu0 0.0
    %3559 = vmatprep.subr.mxu0 0.0
    %3560 = vmatpush1.msra.mxu0 0.0
    %3561 = vmatprep.subr.mxu0 0.0
    %3562 = vmatpush1.msra.mxu0 0.0
    %3563 = vmatprep.subr.mxu0 0.0
    %3564 = vmatpush1.msra.mxu0 0.0
    %3565 = vmatprep.subr.mxu0 0.0
    %3566 = vmatpush1.msra.mxu0 0.0
    %3567 = vmatprep.subr.mxu0 0.0
    %3568 = vmatpush1.msra.mxu0 0.0
    %3569 = vmatprep.subr.mxu0 0.0
    %3570 = vmatpush1.msra.mxu0 0.0
    %3571 = vmatprep.subr.mxu0 0.0
    %3572 = vmatpush1.msra.mxu0 %v3314
    %3573 = vmatprep.subr.mxu0 0.0
    %3574 = vmatpush2.msra.mxu0 0.0
    %3575 = vmatprep.subr.mxu0 0.0
    %3576 = vmatpush2.msra.mxu0 0.0
    %3577 = vmatprep.subr.mxu0 0.0
    %3578 = vmatpush2.msra.mxu0 0.0
    %3579 = vmatprep.subr.mxu0 0.0
    %3580 = vmatpush2.msra.mxu0 0.0
    %3581 = vmatprep.subr.mxu0 0.0
    %3582 = vmatpush2.msra.mxu0 0.0
    %3583 = vmatprep.subr.mxu0 0.0
    %3584 = vmatpush2.msra.mxu0 0.0
    %3585 = vmatprep.subr.mxu0 0.0
    %3586 = vmatpush2.msra.mxu0 0.0
    %3587 = vmatprep.subr.mxu0 0.0
    %3588 = vmatpush2.msra.mxu0 0.0
    %3589 = vmatprep.subr.mxu0 0.0
    %3590 = vmatpush2.msra.mxu0 0.0
    %3591 = vmatprep.subr.mxu0 0.0
    %3592 = vmatpush2.msra.mxu0 0.0
    %3593 = vmatprep.subr.mxu0 0.0
    %3594 = vmatpush2.msra.mxu0 0.0
    %3595 = vmatprep.subr.mxu0 0.0
    %3596 = vmatpush2.msra.mxu0 0.0
    %3597 = vmatprep.subr.mxu0 0.0
    %3598 = vmatpush2.msra.mxu0 0.0
    %3599 = vmatprep.subr.mxu0 0.0
    %3600 = vmatpush2.msra.mxu0 0.0
    %3601 = vmatprep.subr.mxu0 0.0
    %3602 = vmatpush2.msra.mxu0 0.0
    %3603 = vmatprep.subr.mxu0 0.0
    %3604 = vmatpush2.msra.mxu0 0.0
    %3605 = vmatprep.mubr.f32.mxu0 0.0
    %3606 = vmatmul.mubr.f32.gmra.mxu0 %v3539
    %v3607 = vpop.f32.mrf.mxu0
    %v3608 = vadd.f32 0.0, %v3607
    %v3609 = vpop.f32.mrf.mxu0
    %3610 = vdwg.mxu0
    %v3612 = vsel %vm2022, %v3089, 0
    %3614 = vmatprep.subr.mxu0 0.0
    %3615 = vmatpush1.msra.mxu0 0.0
    %3616 = vmatprep.subr.mxu0 0.0
    %3617 = vmatpush1.msra.mxu0 0.0
    %3618 = vmatprep.subr.mxu0 0.0
    %3619 = vmatpush1.msra.mxu0 0.0
    %3620 = vmatprep.subr.mxu0 0.0
    %3621 = vmatpush1.msra.mxu0 0.0
    %3622 = vmatprep.subr.mxu0 0.0
    %3623 = vmatpush1.msra.mxu0 0.0
    %3624 = vmatprep.subr.mxu0 0.0
    %3625 = vmatpush1.msra.mxu0 0.0
    %3626 = vmatprep.subr.mxu0 0.0
    %3627 = vmatpush1.msra.mxu0 0.0
    %3628 = vmatprep.subr.mxu0 0.0
    %3629 = vmatpush1.msra.mxu0 0.0
    %3630 = vmatprep.subr.mxu0 0.0
    %3631 = vmatpush1.msra.mxu0 0.0
    %3632 = vmatprep.subr.mxu0 0.0
    %3633 = vmatpush1.msra.mxu0 0.0
    %3634 = vmatprep.subr.mxu0 0.0
    %3635 = vmatpush1.msra.mxu0 0.0
    %3636 = vmatprep.subr.mxu0 0.0
    %3637 = vmatpush1.msra.mxu0 0.0
    %3638 = vmatprep.subr.mxu0 0.0
    %3639 = vmatpush1.msra.mxu0 0.0
    %3640 = vmatprep.subr.mxu0 0.0
    %3641 = vmatpush1.msra.mxu0 0.0
    %3642 = vmatprep.subr.mxu0 0.0
    %3643 = vmatpush1.msra.mxu0 0.0
    %3644 = vmatprep.subr.mxu0 0.0
    %3645 = vmatpush1.msra.mxu0 %v3315
    %3646 = vmatprep.subr.mxu0 0.0
    %3647 = vmatpush2.msra.mxu0 0.0
    %3648 = vmatprep.subr.mxu0 0.0
    %3649 = vmatpush2.msra.mxu0 0.0
    %3650 = vmatprep.subr.mxu0 0.0
    %3651 = vmatpush2.msra.mxu0 0.0
    %3652 = vmatprep.subr.mxu0 0.0
    %3653 = vmatpush2.msra.mxu0 0.0
    %3654 = vmatprep.subr.mxu0 0.0
    %3655 = vmatpush2.msra.mxu0 0.0
    %3656 = vmatprep.subr.mxu0 0.0
    %3657 = vmatpush2.msra.mxu0 0.0
    %3658 = vmatprep.subr.mxu0 0.0
    %3659 = vmatpush2.msra.mxu0 0.0
    %3660 = vmatprep.subr.mxu0 0.0
    %3661 = vmatpush2.msra.mxu0 0.0
    %3662 = vmatprep.subr.mxu0 0.0
    %3663 = vmatpush2.msra.mxu0 0.0
    %3664 = vmatprep.subr.mxu0 0.0
    %3665 = vmatpush2.msra.mxu0 0.0
    %3666 = vmatprep.subr.mxu0 0.0
    %3667 = vmatpush2.msra.mxu0 0.0
    %3668 = vmatprep.subr.mxu0 0.0
    %3669 = vmatpush2.msra.mxu0 0.0
    %3670 = vmatprep.subr.mxu0 0.0
    %3671 = vmatpush2.msra.mxu0 0.0
    %3672 = vmatprep.subr.mxu0 0.0
    %3673 = vmatpush2.msra.mxu0 0.0
    %3674 = vmatprep.subr.mxu0 0.0
    %3675 = vmatpush2.msra.mxu0 0.0
    %3676 = vmatprep.subr.mxu0 0.0
    %3677 = vmatpush2.msra.mxu0 0.0
    %3678 = vmatprep.mubr.f32.mxu0 0.0
    %3679 = vmatmul.mubr.f32.gmra.mxu0 %v3612
    %v3680 = vpop.f32.mrf.mxu0
    %v3681 = vadd.f32 0.0, %v3680
    %v3682 = vpop.f32.mrf.mxu0
    %3683 = vdwg.mxu0
    %v3685 = vsel %vm2022, %v3162, 0
    %3687 = vmatprep.subr.mxu0 0.0
    %3688 = vmatpush1.msra.mxu0 0.0
    %3689 = vmatprep.subr.mxu0 0.0
    %3690 = vmatpush1.msra.mxu0 0.0
    %3691 = vmatprep.subr.mxu0 0.0
    %3692 = vmatpush1.msra.mxu0 0.0
    %3693 = vmatprep.subr.mxu0 0.0
    %3694 = vmatpush1.msra.mxu0 0.0
    %3695 = vmatprep.subr.mxu0 0.0
    %3696 = vmatpush1.msra.mxu0 0.0
    %3697 = vmatprep.subr.mxu0 0.0
    %3698 = vmatpush1.msra.mxu0 0.0
    %3699 = vmatprep.subr.mxu0 0.0
    %3700 = vmatpush1.msra.mxu0 0.0
    %3701 = vmatprep.subr.mxu0 0.0
    %3702 = vmatpush1.msra.mxu0 0.0
    %3703 = vmatprep.subr.mxu0 0.0
    %3704 = vmatpush1.msra.mxu0 0.0
    %3705 = vmatprep.subr.mxu0 0.0
    %3706 = vmatpush1.msra.mxu0 0.0
    %3707 = vmatprep.subr.mxu0 0.0
    %3708 = vmatpush1.msra.mxu0 0.0
    %3709 = vmatprep.subr.mxu0 0.0
    %3710 = vmatpush1.msra.mxu0 0.0
    %3711 = vmatprep.subr.mxu0 0.0
    %3712 = vmatpush1.msra.mxu0 0.0
    %3713 = vmatprep.subr.mxu0 0.0
    %3714 = vmatpush1.msra.mxu0 0.0
    %3715 = vmatprep.subr.mxu0 0.0
    %3716 = vmatpush1.msra.mxu0 0.0
    %3717 = vmatprep.subr.mxu0 0.0
    %3718 = vmatpush1.msra.mxu0 %v3316
    %3719 = vmatprep.subr.mxu0 0.0
    %3720 = vmatpush2.msra.mxu0 0.0
    %3721 = vmatprep.subr.mxu0 0.0
    %3722 = vmatpush2.msra.mxu0 0.0
    %3723 = vmatprep.subr.mxu0 0.0
    %3724 = vmatpush2.msra.mxu0 0.0
    %3725 = vmatprep.subr.mxu0 0.0
    %3726 = vmatpush2.msra.mxu0 0.0
    %3727 = vmatprep.subr.mxu0 0.0
    %3728 = vmatpush2.msra.mxu0 0.0
    %3729 = vmatprep.subr.mxu0 0.0
    %3730 = vmatpush2.msra.mxu0 0.0
    %3731 = vmatprep.subr.mxu0 0.0
    %3732 = vmatpush2.msra.mxu0 0.0
    %3733 = vmatprep.subr.mxu0 0.0
    %3734 = vmatpush2.msra.mxu0 0.0
    %3735 = vmatprep.subr.mxu0 0.0
    %3736 = vmatpush2.msra.mxu0 0.0
    %3737 = vmatprep.subr.mxu0 0.0
    %3738 = vmatpush2.msra.mxu0 0.0
    %3739 = vmatprep.subr.mxu0 0.0
    %3740 = vmatpush2.msra.mxu0 0.0
    %3741 = vmatprep.subr.mxu0 0.0
    %3742 = vmatpush2.msra.mxu0 0.0
    %3743 = vmatprep.subr.mxu0 0.0
    %3744 = vmatpush2.msra.mxu0 0.0
    %3745 = vmatprep.subr.mxu0 0.0
    %3746 = vmatpush2.msra.mxu0 0.0
    %3747 = vmatprep.subr.mxu0 0.0
    %3748 = vmatpush2.msra.mxu0 0.0
    %3749 = vmatprep.subr.mxu0 0.0
    %3750 = vmatpush2.msra.mxu0 0.0
    %3751 = vmatprep.mubr.f32.mxu0 0.0
    %3752 = vmatmul.mubr.f32.gmra.mxu0 %v3685
    %v3753 = vpop.f32.mrf.mxu0
    %v3754 = vadd.f32 0.0, %v3753
    %v3755 = vpop.f32.mrf.mxu0
    %3756 = vdwg.mxu0
    %v3758 = vsel %vm2022, %v3235, 0
    %3760 = vmatprep.subr.mxu0 0.0
    %3761 = vmatpush1.msra.mxu0 0.0
    %3762 = vmatprep.subr.mxu0 0.0
    %3763 = vmatpush1.msra.mxu0 0.0
    %3764 = vmatprep.subr.mxu0 0.0
    %3765 = vmatpush1.msra.mxu0 0.0
    %3766 = vmatprep.subr.mxu0 0.0
    %3767 = vmatpush1.msra.mxu0 0.0
    %3768 = vmatprep.subr.mxu0 0.0
    %3769 = vmatpush1.msra.mxu0 0.0
    %3770 = vmatprep.subr.mxu0 0.0
    %3771 = vmatpush1.msra.mxu0 0.0
    %3772 = vmatprep.subr.mxu0 0.0
    %3773 = vmatpush1.msra.mxu0 0.0
    %3774 = vmatprep.subr.mxu0 0.0
    %3775 = vmatpush1.msra.mxu0 0.0
    %3776 = vmatprep.subr.mxu0 0.0
    %3777 = vmatpush1.msra.mxu0 0.0
    %3778 = vmatprep.subr.mxu0 0.0
    %3779 = vmatpush1.msra.mxu0 0.0
    %3780 = vmatprep.subr.mxu0 0.0
    %3781 = vmatpush1.msra.mxu0 0.0
    %3782 = vmatprep.subr.mxu0 0.0
    %3783 = vmatpush1.msra.mxu0 0.0
    %3784 = vmatprep.subr.mxu0 0.0
    %3785 = vmatpush1.msra.mxu0 0.0
    %3786 = vmatprep.subr.mxu0 0.0
    %3787 = vmatpush1.msra.mxu0 0.0
    %3788 = vmatprep.subr.mxu0 0.0
    %3789 = vmatpush1.msra.mxu0 0.0
    %3790 = vmatprep.subr.mxu0 0.0
    %3791 = vmatpush1.msra.mxu0 %v3317
    %3792 = vmatprep.subr.mxu0 0.0
    %3793 = vmatpush2.msra.mxu0 0.0
    %3794 = vmatprep.subr.mxu0 0.0
    %3795 = vmatpush2.msra.mxu0 0.0
    %3796 = vmatprep.subr.mxu0 0.0
    %3797 = vmatpush2.msra.mxu0 0.0
    %3798 = vmatprep.subr.mxu0 0.0
    %3799 = vmatpush2.msra.mxu0 0.0
    %3800 = vmatprep.subr.mxu0 0.0
    %3801 = vmatpush2.msra.mxu0 0.0
    %3802 = vmatprep.subr.mxu0 0.0
    %3803 = vmatpush2.msra.mxu0 0.0
    %3804 = vmatprep.subr.mxu0 0.0
    %3805 = vmatpush2.msra.mxu0 0.0
    %3806 = vmatprep.subr.mxu0 0.0
    %3807 = vmatpush2.msra.mxu0 0.0
    %3808 = vmatprep.subr.mxu0 0.0
    %3809 = vmatpush2.msra.mxu0 0.0
    %3810 = vmatprep.subr.mxu0 0.0
    %3811 = vmatpush2.msra.mxu0 0.0
    %3812 = vmatprep.subr.mxu0 0.0
    %3813 = vmatpush2.msra.mxu0 0.0
    %3814 = vmatprep.subr.mxu0 0.0
    %3815 = vmatpush2.msra.mxu0 0.0
    %3816 = vmatprep.subr.mxu0 0.0
    %3817 = vmatpush2.msra.mxu0 0.0
    %3818 = vmatprep.subr.mxu0 0.0
    %3819 = vmatpush2.msra.mxu0 0.0
    %3820 = vmatprep.subr.mxu0 0.0
    %3821 = vmatpush2.msra.mxu0 0.0
    %3822 = vmatprep.subr.mxu0 0.0
    %3823 = vmatpush2.msra.mxu0 0.0
    %3824 = vmatprep.mubr.f32.mxu0 0.0
    %3825 = vmatmul.mubr.f32.gmra.mxu0 %v3758
    %v3826 = vpop.f32.mrf.mxu0
    %v3827 = vadd.f32 0.0, %v3826
    %v3828 = vpop.f32.mrf.mxu0
    %3829 = vdwg.mxu0
    %v3831 = vsel %vm2022, %v3308, 0
    %3833 = vmatprep.subr.mxu0 0.0
    %3834 = vmatpush1.msra.mxu0 0.0
    %3835 = vmatprep.subr.mxu0 0.0
    %3836 = vmatpush1.msra.mxu0 0.0
    %3837 = vmatprep.subr.mxu0 0.0
    %3838 = vmatpush1.msra.mxu0 0.0
    %3839 = vmatprep.subr.mxu0 0.0
    %3840 = vmatpush1.msra.mxu0 0.0
    %3841 = vmatprep.subr.mxu0 0.0
    %3842 = vmatpush1.msra.mxu0 0.0
    %3843 = vmatprep.subr.mxu0 0.0
    %3844 = vmatpush1.msra.mxu0 0.0
    %3845 = vmatprep.subr.mxu0 0.0
    %3846 = vmatpush1.msra.mxu0 0.0
    %3847 = vmatprep.subr.mxu0 0.0
    %3848 = vmatpush1.msra.mxu0 0.0
    %3849 = vmatprep.subr.mxu0 0.0
    %3850 = vmatpush1.msra.mxu0 0.0
    %3851 = vmatprep.subr.mxu0 0.0
    %3852 = vmatpush1.msra.mxu0 0.0
    %3853 = vmatprep.subr.mxu0 0.0
    %3854 = vmatpush1.msra.mxu0 0.0
    %3855 = vmatprep.subr.mxu0 0.0
    %3856 = vmatpush1.msra.mxu0 0.0
    %3857 = vmatprep.subr.mxu0 0.0
    %3858 = vmatpush1.msra.mxu0 0.0
    %3859 = vmatprep.subr.mxu0 0.0
    %3860 = vmatpush1.msra.mxu0 0.0
    %3861 = vmatprep.subr.mxu0 0.0
    %3862 = vmatpush1.msra.mxu0 0.0
    %3863 = vmatprep.subr.mxu0 0.0
    %3864 = vmatpush1.msra.mxu0 %v3318
    %3865 = vmatprep.subr.mxu0 0.0
    %3866 = vmatpush2.msra.mxu0 0.0
    %3867 = vmatprep.subr.mxu0 0.0
    %3868 = vmatpush2.msra.mxu0 0.0
    %3869 = vmatprep.subr.mxu0 0.0
    %3870 = vmatpush2.msra.mxu0 0.0
    %3871 = vmatprep.subr.mxu0 0.0
    %3872 = vmatpush2.msra.mxu0 0.0
    %3873 = vmatprep.subr.mxu0 0.0
    %3874 = vmatpush2.msra.mxu0 0.0
    %3875 = vmatprep.subr.mxu0 0.0
    %3876 = vmatpush2.msra.mxu0 0.0
    %3877 = vmatprep.subr.mxu0 0.0
    %3878 = vmatpush2.msra.mxu0 0.0
    %3879 = vmatprep.subr.mxu0 0.0
    %3880 = vmatpush2.msra.mxu0 0.0
    %3881 = vmatprep.subr.mxu0 0.0
    %3882 = vmatpush2.msra.mxu0 0.0
    %3883 = vmatprep.subr.mxu0 0.0
    %3884 = vmatpush2.msra.mxu0 0.0
    %3885 = vmatprep.subr.mxu0 0.0
    %3886 = vmatpush2.msra.mxu0 0.0
    %3887 = vmatprep.subr.mxu0 0.0
    %3888 = vmatpush2.msra.mxu0 0.0
    %3889 = vmatprep.subr.mxu0 0.0
    %3890 = vmatpush2.msra.mxu0 0.0
    %3891 = vmatprep.subr.mxu0 0.0
    %3892 = vmatpush2.msra.mxu0 0.0
    %3893 = vmatprep.subr.mxu0 0.0
    %3894 = vmatpush2.msra.mxu0 0.0
    %3895 = vmatprep.subr.mxu0 0.0
    %3896 = vmatpush2.msra.mxu0 0.0
    %3897 = vmatprep.mubr.f32.mxu0 0.0
    %3898 = vmatmul.mubr.f32.gmra.mxu0 %v3831
    %v3899 = vpop.f32.mrf.mxu0
    %v3900 = vadd.f32 0.0, %v3899
    %v3901 = vpop.f32.mrf.mxu0
    %3902 = vdwg.mxu0
    %v3903 = vadd.f32 %v3389, %v3535
    %v3904 = vadd.f32 %v3462, %v3608
    %v3905 = vadd.f32 %v3903, %v3681
    %v3906 = vadd.f32 %v3904, %v3754
    %v3907 = vadd.f32 %v3905, %v3827
    %v3908 = vadd.f32 %v3906, %v3900
    %v3909 = vld [vmem:[%s8] sm:$0x1]
    %v3911 = vlaneseq
    %v3912 = vshrl.u32 %v3911, 7
    %v3913 = vsub.s32 0, %v3912
    %v3914 = vrot.slane %v3909, %v3913
    %v3916 = vadd.f32 %v3907, %v3914
    %v3917 = vadd.f32 %v3908, %v3914
    %v3918 = vmax.f32 %v3916, 0.0
    %v3919 = vmax.f32 %v3917, 0.0
    %v3920 = vld [vmem:[%s9] sm:$0xff]
    %v3921 = vld [vmem:[%s9 + $0x8] sm:$0xff]
    %v3922 = vld [vmem:[%s9 + $0x10] sm:$0xff]
    %v3923 = vld [vmem:[%s9 + $0x18] sm:$0xff]
    %v3924 = vld [vmem:[%s10] sm:$0x1]
    %v3926 = vlaneseq
    %v3927 = vshrl.u32 %v3926, 7
    %v3928 = vsub.s32 0, %v3927
    %v3929 = vrot.slane %v3924, %v3928
    %vm3931 = vcmask 130048
    %v3933 = vsel %vm3931, %v3918, 0
    %3935 = vmatprep.subr.mxu0 0.0
    %3936 = vmatpush1.msra.mxu0 0.0
    %3937 = vmatprep.subr.mxu0 0.0
    %3938 = vmatpush1.msra.mxu0 0.0
    %3939 = vmatprep.subr.mxu0 0.0
    %3940 = vmatpush1.msra.mxu0 0.0
    %3941 = vmatprep.subr.mxu0 0.0
    %3942 = vmatpush1.msra.mxu0 0.0
    %3943 = vmatprep.subr.mxu0 0.0
    %3944 = vmatpush1.msra.mxu0 0.0
    %3945 = vmatprep.subr.mxu0 0.0
    %3946 = vmatpush1.msra.mxu0 0.0
    %3947 = vmatprep.subr.mxu0 0.0
    %3948 = vmatpush1.msra.mxu0 0.0
    %3949 = vmatprep.subr.mxu0 0.0
    %3950 = vmatpush1.msra.mxu0 0.0
    %3951 = vmatprep.subr.mxu0 0.0
    %3952 = vmatpush1.msra.mxu0 0.0
    %3953 = vmatprep.subr.mxu0 0.0
    %3954 = vmatpush1.msra.mxu0 0.0
    %3955 = vmatprep.subr.mxu0 0.0
    %3956 = vmatpush1.msra.mxu0 0.0
    %3957 = vmatprep.subr.mxu0 0.0
    %3958 = vmatpush1.msra.mxu0 0.0
    %3959 = vmatprep.subr.mxu0 0.0
    %3960 = vmatpush1.msra.mxu0 0.0
    %3961 = vmatprep.subr.mxu0 0.0
    %3962 = vmatpush1.msra.mxu0 0.0
    %3963 = vmatprep.subr.mxu0 0.0
    %3964 = vmatpush1.msra.mxu0 %v3921
    %3965 = vmatprep.subr.mxu0 0.0
    %3966 = vmatpush1.msra.mxu0 %v3920
    %3967 = vmatprep.subr.mxu0 0.0
    %3968 = vmatpush2.msra.mxu0 0.0
    %3969 = vmatprep.subr.mxu0 0.0
    %3970 = vmatpush2.msra.mxu0 0.0
    %3971 = vmatprep.subr.mxu0 0.0
    %3972 = vmatpush2.msra.mxu0 0.0
    %3973 = vmatprep.subr.mxu0 0.0
    %3974 = vmatpush2.msra.mxu0 0.0
    %3975 = vmatprep.subr.mxu0 0.0
    %3976 = vmatpush2.msra.mxu0 0.0
    %3977 = vmatprep.subr.mxu0 0.0
    %3978 = vmatpush2.msra.mxu0 0.0
    %3979 = vmatprep.subr.mxu0 0.0
    %3980 = vmatpush2.msra.mxu0 0.0
    %3981 = vmatprep.subr.mxu0 0.0
    %3982 = vmatpush2.msra.mxu0 0.0
    %3983 = vmatprep.subr.mxu0 0.0
    %3984 = vmatpush2.msra.mxu0 0.0
    %3985 = vmatprep.subr.mxu0 0.0
    %3986 = vmatpush2.msra.mxu0 0.0
    %3987 = vmatprep.subr.mxu0 0.0
    %3988 = vmatpush2.msra.mxu0 0.0
    %3989 = vmatprep.subr.mxu0 0.0
    %3990 = vmatpush2.msra.mxu0 0.0
    %3991 = vmatprep.subr.mxu0 0.0
    %3992 = vmatpush2.msra.mxu0 0.0
    %3993 = vmatprep.subr.mxu0 0.0
    %3994 = vmatpush2.msra.mxu0 0.0
    %3995 = vmatprep.subr.mxu0 0.0
    %3996 = vmatpush2.msra.mxu0 0.0
    %3997 = vmatprep.subr.mxu0 0.0
    %3998 = vmatpush2.msra.mxu0 0.0
    %3999 = vmatprep.mubr.f32.mxu0 0.0
    %4000 = vmatmul.mubr.f32.gmra.mxu0 %v3933
    %v4001 = vpop.f32.mrf.mxu0
    %v4002 = vadd.f32 %v3929, %v4001
    %v4003 = vpop.f32.mrf.mxu0
    %4004 = vdwg.mxu0
    %v4006 = vsel %vm3931, %v3919, 0
    %4008 = vmatprep.subr.mxu0 0.0
    %4009 = vmatpush1.msra.mxu0 0.0
    %4010 = vmatprep.subr.mxu0 0.0
    %4011 = vmatpush1.msra.mxu0 0.0
    %4012 = vmatprep.subr.mxu0 0.0
    %4013 = vmatpush1.msra.mxu0 0.0
    %4014 = vmatprep.subr.mxu0 0.0
    %4015 = vmatpush1.msra.mxu0 0.0
    %4016 = vmatprep.subr.mxu0 0.0
    %4017 = vmatpush1.msra.mxu0 0.0
    %4018 = vmatprep.subr.mxu0 0.0
    %4019 = vmatpush1.msra.mxu0 0.0
    %4020 = vmatprep.subr.mxu0 0.0
    %4021 = vmatpush1.msra.mxu0 0.0
    %4022 = vmatprep.subr.mxu0 0.0
    %4023 = vmatpush1.msra.mxu0 0.0
    %4024 = vmatprep.subr.mxu0 0.0
    %4025 = vmatpush1.msra.mxu0 0.0
    %4026 = vmatprep.subr.mxu0 0.0
    %4027 = vmatpush1.msra.mxu0 0.0
    %4028 = vmatprep.subr.mxu0 0.0
    %4029 = vmatpush1.msra.mxu0 0.0
    %4030 = vmatprep.subr.mxu0 0.0
    %4031 = vmatpush1.msra.mxu0 0.0
    %4032 = vmatprep.subr.mxu0 0.0
    %4033 = vmatpush1.msra.mxu0 0.0
    %4034 = vmatprep.subr.mxu0 0.0
    %4035 = vmatpush1.msra.mxu0 0.0
    %4036 = vmatprep.subr.mxu0 0.0
    %4037 = vmatpush1.msra.mxu0 %v3923
    %4038 = vmatprep.subr.mxu0 0.0
    %4039 = vmatpush1.msra.mxu0 %v3922
    %4040 = vmatprep.subr.mxu0 0.0
    %4041 = vmatpush2.msra.mxu0 0.0
    %4042 = vmatprep.subr.mxu0 0.0
    %4043 = vmatpush2.msra.mxu0 0.0
    %4044 = vmatprep.subr.mxu0 0.0
    %4045 = vmatpush2.msra.mxu0 0.0
    %4046 = vmatprep.subr.mxu0 0.0
    %4047 = vmatpush2.msra.mxu0 0.0
    %4048 = vmatprep.subr.mxu0 0.0
    %4049 = vmatpush2.msra.mxu0 0.0
    %4050 = vmatprep.subr.mxu0 0.0
    %4051 = vmatpush2.msra.mxu0 0.0
    %4052 = vmatprep.subr.mxu0 0.0
    %4053 = vmatpush2.msra.mxu0 0.0
    %4054 = vmatprep.subr.mxu0 0.0
    %4055 = vmatpush2.msra.mxu0 0.0
    %4056 = vmatprep.subr.mxu0 0.0
    %4057 = vmatpush2.msra.mxu0 0.0
    %4058 = vmatprep.subr.mxu0 0.0
    %4059 = vmatpush2.msra.mxu0 0.0
    %4060 = vmatprep.subr.mxu0 0.0
    %4061 = vmatpush2.msra.mxu0 0.0
    %4062 = vmatprep.subr.mxu0 0.0
    %4063 = vmatpush2.msra.mxu0 0.0
    %4064 = vmatprep.subr.mxu0 0.0
    %4065 = vmatpush2.msra.mxu0 0.0
    %4066 = vmatprep.subr.mxu0 0.0
    %4067 = vmatpush2.msra.mxu0 0.0
    %4068 = vmatprep.subr.mxu0 0.0
    %4069 = vmatpush2.msra.mxu0 0.0
    %4070 = vmatprep.subr.mxu0 0.0
    %4071 = vmatpush2.msra.mxu0 0.0
    %4072 = vmatprep.mubr.f32.mxu0 0.0
    %4073 = vmatmul.mubr.f32.gmra.mxu0 %v4006
    %v4074 = vpop.f32.mrf.mxu0
    %v4075 = vadd.f32 %v3929, %v4074
    %v4076 = vpop.f32.mrf.mxu0
    %4077 = vdwg.mxu0
    %v4078 = vmax.f32 %v4002, 0.0
    %v4079 = vmax.f32 %v4075, 0.0
    %v4080 = vld [vmem:[%s11] sm:$0xff]
    %v4081 = vld [vmem:[%s11 + $0x8] sm:$0xff]
    %v4082 = vld [vmem:[%s11 + $0x10] sm:$0xff]
    %v4083 = vld [vmem:[%s11 + $0x18] sm:$0xff]
    %v4084 = vld [vmem:[%s12] sm:$0x1]
    %v4086 = vlaneseq
    %v4087 = vshrl.u32 %v4086, 7
    %v4088 = vsub.s32 0, %v4087
    %v4089 = vrot.slane %v4084, %v4088
    %v4092 = vsel %vm3931, %v4078, 0
    %4094 = vmatprep.subr.mxu0 0.0
    %4095 = vmatpush1.msra.mxu0 0.0
    %4096 = vmatprep.subr.mxu0 0.0
    %4097 = vmatpush1.msra.mxu0 0.0
    %4098 = vmatprep.subr.mxu0 0.0
    %4099 = vmatpush1.msra.mxu0 0.0
    %4100 = vmatprep.subr.mxu0 0.0
    %4101 = vmatpush1.msra.mxu0 0.0
    %4102 = vmatprep.subr.mxu0 0.0
    %4103 = vmatpush1.msra.mxu0 0.0
    %4104 = vmatprep.subr.mxu0 0.0
    %4105 = vmatpush1.msra.mxu0 0.0
    %4106 = vmatprep.subr.mxu0 0.0
    %4107 = vmatpush1.msra.mxu0 0.0
    %4108 = vmatprep.subr.mxu0 0.0
    %4109 = vmatpush1.msra.mxu0 0.0
    %4110 = vmatprep.subr.mxu0 0.0
    %4111 = vmatpush1.msra.mxu0 0.0
    %4112 = vmatprep.subr.mxu0 0.0
    %4113 = vmatpush1.msra.mxu0 0.0
    %4114 = vmatprep.subr.mxu0 0.0
    %4115 = vmatpush1.msra.mxu0 0.0
    %4116 = vmatprep.subr.mxu0 0.0
    %4117 = vmatpush1.msra.mxu0 0.0
    %4118 = vmatprep.subr.mxu0 0.0
    %4119 = vmatpush1.msra.mxu0 0.0
    %4120 = vmatprep.subr.mxu0 0.0
    %4121 = vmatpush1.msra.mxu0 0.0
    %4122 = vmatprep.subr.mxu0 0.0
    %4123 = vmatpush1.msra.mxu0 %v4081
    %4124 = vmatprep.subr.mxu0 0.0
    %4125 = vmatpush1.msra.mxu0 %v4080
    %4126 = vmatprep.subr.mxu0 0.0
    %4127 = vmatpush2.msra.mxu0 0.0
    %4128 = vmatprep.subr.mxu0 0.0
    %4129 = vmatpush2.msra.mxu0 0.0
    %4130 = vmatprep.subr.mxu0 0.0
    %4131 = vmatpush2.msra.mxu0 0.0
    %4132 = vmatprep.subr.mxu0 0.0
    %4133 = vmatpush2.msra.mxu0 0.0
    %4134 = vmatprep.subr.mxu0 0.0
    %4135 = vmatpush2.msra.mxu0 0.0
    %4136 = vmatprep.subr.mxu0 0.0
    %4137 = vmatpush2.msra.mxu0 0.0
    %4138 = vmatprep.subr.mxu0 0.0
    %4139 = vmatpush2.msra.mxu0 0.0
    %4140 = vmatprep.subr.mxu0 0.0
    %4141 = vmatpush2.msra.mxu0 0.0
    %4142 = vmatprep.subr.mxu0 0.0
    %4143 = vmatpush2.msra.mxu0 0.0
    %4144 = vmatprep.subr.mxu0 0.0
    %4145 = vmatpush2.msra.mxu0 0.0
    %4146 = vmatprep.subr.mxu0 0.0
    %4147 = vmatpush2.msra.mxu0 0.0
    %4148 = vmatprep.subr.mxu0 0.0
    %4149 = vmatpush2.msra.mxu0 0.0
    %4150 = vmatprep.subr.mxu0 0.0
    %4151 = vmatpush2.msra.mxu0 0.0
    %4152 = vmatprep.subr.mxu0 0.0
    %4153 = vmatpush2.msra.mxu0 0.0
    %4154 = vmatprep.subr.mxu0 0.0
    %4155 = vmatpush2.msra.mxu0 0.0
    %4156 = vmatprep.subr.mxu0 0.0
    %4157 = vmatpush2.msra.mxu0 0.0
    %4158 = vmatprep.mubr.f32.mxu0 0.0
    %4159 = vmatmul.mubr.f32.gmra.mxu0 %v4092
    %v4160 = vpop.f32.mrf.mxu0
    %v4161 = vadd.f32 %v4089, %v4160
    %v4162 = vpop.f32.mrf.mxu0
    %4163 = vdwg.mxu0
    %v4165 = vsel %vm3931, %v4079, 0
    %4167 = vmatprep.subr.mxu0 0.0
    %4168 = vmatpush1.msra.mxu0 0.0
    %4169 = vmatprep.subr.mxu0 0.0
    %4170 = vmatpush1.msra.mxu0 0.0
    %4171 = vmatprep.subr.mxu0 0.0
    %4172 = vmatpush1.msra.mxu0 0.0
    %4173 = vmatprep.subr.mxu0 0.0
    %4174 = vmatpush1.msra.mxu0 0.0
    %4175 = vmatprep.subr.mxu0 0.0
    %4176 = vmatpush1.msra.mxu0 0.0
    %4177 = vmatprep.subr.mxu0 0.0
    %4178 = vmatpush1.msra.mxu0 0.0
    %4179 = vmatprep.subr.mxu0 0.0
    %4180 = vmatpush1.msra.mxu0 0.0
    %4181 = vmatprep.subr.mxu0 0.0
    %4182 = vmatpush1.msra.mxu0 0.0
    %4183 = vmatprep.subr.mxu0 0.0
    %4184 = vmatpush1.msra.mxu0 0.0
    %4185 = vmatprep.subr.mxu0 0.0
    %4186 = vmatpush1.msra.mxu0 0.0
    %4187 = vmatprep.subr.mxu0 0.0
    %4188 = vmatpush1.msra.mxu0 0.0
    %4189 = vmatprep.subr.mxu0 0.0
    %4190 = vmatpush1.msra.mxu0 0.0
    %4191 = vmatprep.subr.mxu0 0.0
    %4192 = vmatpush1.msra.mxu0 0.0
    %4193 = vmatprep.subr.mxu0 0.0
    %4194 = vmatpush1.msra.mxu0 0.0
    %4195 = vmatprep.subr.mxu0 0.0
    %4196 = vmatpush1.msra.mxu0 %v4083
    %4197 = vmatprep.subr.mxu0 0.0
    %4198 = vmatpush1.msra.mxu0 %v4082
    %4199 = vmatprep.subr.mxu0 0.0
    %4200 = vmatpush2.msra.mxu0 0.0
    %4201 = vmatprep.subr.mxu0 0.0
    %4202 = vmatpush2.msra.mxu0 0.0
    %4203 = vmatprep.subr.mxu0 0.0
    %4204 = vmatpush2.msra.mxu0 0.0
    %4205 = vmatprep.subr.mxu0 0.0
    %4206 = vmatpush2.msra.mxu0 0.0
    %4207 = vmatprep.subr.mxu0 0.0
    %4208 = vmatpush2.msra.mxu0 0.0
    %4209 = vmatprep.subr.mxu0 0.0
    %4210 = vmatpush2.msra.mxu0 0.0
    %4211 = vmatprep.subr.mxu0 0.0
    %4212 = vmatpush2.msra.mxu0 0.0
    %4213 = vmatprep.subr.mxu0 0.0
    %4214 = vmatpush2.msra.mxu0 0.0
    %4215 = vmatprep.subr.mxu0 0.0
    %4216 = vmatpush2.msra.mxu0 0.0
    %4217 = vmatprep.subr.mxu0 0.0
    %4218 = vmatpush2.msra.mxu0 0.0
    %4219 = vmatprep.subr.mxu0 0.0
    %4220 = vmatpush2.msra.mxu0 0.0
    %4221 = vmatprep.subr.mxu0 0.0
    %4222 = vmatpush2.msra.mxu0 0.0
    %4223 = vmatprep.subr.mxu0 0.0
    %4224 = vmatpush2.msra.mxu0 0.0
    %4225 = vmatprep.subr.mxu0 0.0
    %4226 = vmatpush2.msra.mxu0 0.0
    %4227 = vmatprep.subr.mxu0 0.0
    %4228 = vmatpush2.msra.mxu0 0.0
    %4229 = vmatprep.subr.mxu0 0.0
    %4230 = vmatpush2.msra.mxu0 0.0
    %4231 = vmatprep.mubr.f32.mxu0 0.0
    %4232 = vmatmul.mubr.f32.gmra.mxu0 %v4165
    %v4233 = vpop.f32.mrf.mxu0
    %v4234 = vadd.f32 %v4089, %v4233
    %v4235 = vpop.f32.mrf.mxu0
    %4236 = vdwg.mxu0
    %v4237 = vmax.f32 %v4161, 0.0
    %v4238 = vmax.f32 %v4234, 0.0
    %v4239 = vsel %vm3931, %v4237, 0.0
    %v4240 = vsel %vm3931, %v4238, 0.0
    %4241 = vst [vmem:[#allocation2] sm:$0xff] %v4239
    %4242 = vst [vmem:[#allocation2 + $0x8] sm:$0xff] %v4240
    // Predicated region
    $region54: #{dkt_forward.1} parent=1 // pred_check
      _
    $region55: #{dkt_forward.1} parent=1 // pred_check_branch
      %4244 = sbr.rel (0) target = $region57
    $region56: #{dkt_forward.1} parent=1 // pred_region
      %s4246 = ssub.s32 256, 256
      %4247 = vsyncadd [#allocation3], %s4246
      %s4248 = sshll.u32 [#allocation2], 4
      %s4249 = int_to_ptr.vmem [resolvable:$true] %s4248
      %4254 = dma.vmem_to_hbm [thread:$0]  %s4249, 256, %s13, [#allocation3], 128, 128, 8
    $region57: #{dkt_forward.1} parent=1 // pred_fallthru
      _
    // Predicated region
    $region58: #{dkt_forward.1} parent=1 // pred_check
      _
    $region59: #{dkt_forward.1} parent=1 // pred_check_branch
      %4256 = sbr.rel (0) target = $region61
    $region60: #{dkt_forward.1} parent=1 // pred_region
      %4257 = dma.done [#allocation3], 256
    $region61: #{dkt_forward.1} parent=1 // pred_fallthru
      _
    %4258 = vsyncpa [#allocation3], 1

</llo_original>
